<compile_context>
chip_gen: v7x
topology: tpu7x:2x2x1
jax: 0.10.0
libtpu: 0.0.40
codegen_flags: <defaults>
</compile_context>

<pallas_src>
import jax
import jax.numpy as jnp
from jax.experimental import pallas as pl
from jax.experimental.pallas import tpu as pltpu


# ------------------------------- helpers ------------------------------------

def _round_up(n, m):
    return ((n + m - 1) // m) * m


def _pad_axis(a, axis, target):
    pad = target - a.shape[axis]
    if pad == 0:
        return a
    widths = [(0, 0)] * a.ndim
    widths[axis] = (0, pad)
    return jnp.pad(a, widths)


# ----------------------------- Pallas kernels -------------------------------

def conv_pool_kernel(p_ref, w_ref, b_ref, o_ref, acc_ref):
    """Fused conv (as matmul) + bias + ReLU + 2x2 max-pool.

    Grid = (M_blocks, 4).  Axis 1 enumerates the 2x2 pool-window corner; the
    running max lives in the f32 VMEM scratch `acc_ref` (output block index is
    constant across axis 1).  bias + ReLU are applied once at the last corner
    (valid because max and ReLU commute and bias is per-channel constant).
    """
    c = pl.program_id(1)
    part = jnp.dot(p_ref[0], w_ref[...], preferred_element_type=jnp.float32)

    @pl.when(c == 0)
    def _():
        acc_ref[...] = part

    @pl.when(c > 0)
    def _():
        acc_ref[...] = jnp.maximum(acc_ref[...], part)

    @pl.when(c == pl.num_programs(1) - 1)
    def _():
        o_ref[...] = jnp.maximum(acc_ref[...] + b_ref[...], 0.0).astype(o_ref.dtype)


def fc_stack_kernel(x_ref, w1_ref, b1_ref, w2_ref, b2_ref, w3_ref, b3_ref, o_ref):
    """Fused fc1+ReLU -> fc2+ReLU -> fc3 on a batch tile (all dims 128-padded)."""
    h1 = jnp.dot(x_ref[...], w1_ref[...], preferred_element_type=jnp.float32) + b1_ref[...]
    h1 = jnp.maximum(h1, 0.0).astype(jnp.bfloat16)
    h2 = jnp.dot(h1, w2_ref[...], preferred_element_type=jnp.float32) + b2_ref[...]
    h2 = jnp.maximum(h2, 0.0).astype(jnp.bfloat16)
    o_ref[...] = (jnp.dot(h2, w3_ref[...], preferred_element_type=jnp.float32)
                  + b3_ref[...]).astype(o_ref.dtype)


# ------------------------------ call wrappers --------------------------------

_VMEM_LIMIT = 32 * 1024 * 1024  # explicit & safe on v7x's 64 MiB VMEM


def conv_pool(patches, w, b, *, tm):
    # patches: (4, M, Kpad) bf16 ; w: (Kpad, 128) bf16 ; b: (1, 128) f32
    _, M, K = patches.shape
    grid = (M // tm, 4)
    return pl.pallas_call(
        conv_pool_kernel,
        out_shape=jax.ShapeDtypeStruct((M, 128), jnp.bfloat16),
        grid_spec=pltpu.PrefetchScalarGridSpec(
            num_scalar_prefetch=0,
            grid=grid,
            in_specs=[
                pl.BlockSpec((1, tm, K), lambda m, c: (c, m, 0)),
                pl.BlockSpec((K, 128), lambda m, c: (0, 0)),   # VMEM-resident weight
                pl.BlockSpec((1, 128), lambda m, c: (0, 0)),   # VMEM-resident bias
            ],
            out_specs=pl.BlockSpec((tm, 128), lambda m, c: (m, 0)),
            scratch_shapes=[pltpu.VMEM((tm, 128), jnp.float32)],
        ),
        compiler_params=pltpu.CompilerParams(
            dimension_semantics=("parallel", "arbitrary"),
            vmem_limit_bytes=_VMEM_LIMIT,
        ),
    )(patches, w, b)


def fc_stack(x, w1, b1, w2, b2, w3, b3, *, tb):
    B, K = x.shape
    grid = (B // tb,)
    return pl.pallas_call(
        fc_stack_kernel,
        out_shape=jax.ShapeDtypeStruct((B, 128), jnp.float32),
        grid_spec=pltpu.PrefetchScalarGridSpec(
            num_scalar_prefetch=0,
            grid=grid,
            in_specs=[
                pl.BlockSpec((tb, K), lambda i: (i, 0)),
                pl.BlockSpec(w1.shape, lambda i: (0, 0)),
                pl.BlockSpec((1, 128), lambda i: (0, 0)),
                pl.BlockSpec(w2.shape, lambda i: (0, 0)),
                pl.BlockSpec((1, 128), lambda i: (0, 0)),
                pl.BlockSpec(w3.shape, lambda i: (0, 0)),
                pl.BlockSpec((1, 128), lambda i: (0, 0)),
            ],
            out_specs=pl.BlockSpec((tb, 128), lambda i: (i, 0)),
        ),
        compiler_params=pltpu.CompilerParams(
            dimension_semantics=("parallel",),
            vmem_limit_bytes=_VMEM_LIMIT,
        ),
    )(x, w1, b1, w2, b2, w3, b3)


# --------------------------------- glue --------------------------------------

def im2col_pool_corners_nhwc(x, k=5):
    """x: (B,H,W,C) -> (4, B*Hp*Wp, C*k*k).

    Patch columns ordered (c, kh, kw) to match a PyTorch conv weight reshaped to
    (C_out, C_in*k*k); the leading axis enumerates the 2x2 max-pool corner
    (dy, dx), so the conv kernel can fuse the pool as a running max.
    """
    B, H, W, C = x.shape
    Ho, Wo = H - k + 1, W - k + 1
    Hp, Wp = Ho // 2, Wo // 2
    cols = [x[:, i:i + Ho, j:j + Wo, :] for i in range(k) for j in range(k)]
    p = jnp.stack(cols, axis=3)                    # (B, Ho, Wo, k*k, C)
    p = jnp.transpose(p, (0, 1, 2, 4, 3))          # (B, Ho, Wo, C, k*k)
    p = p.reshape(B, Ho, Wo, C * k * k)            # col = c*k*k + (i*k + j)
    corners = [p[:, dy::2, dx::2, :].reshape(B * Hp * Wp, C * k * k)
               for dy in (0, 1) for dx in (0, 1)]
    return jnp.stack(corners, axis=0)              # (4, B*Hp*Wp, C*k*k)


def net_forward(x_nchw, prep):
    B = x_nchw.shape[0]
    x_nhwc = jnp.transpose(x_nchw.astype(jnp.bfloat16), (0, 2, 3, 1))

    # ---- conv1 + ReLU + 2x2 max-pool (one fused Pallas kernel) ----
    p1 = im2col_pool_corners_nhwc(x_nhwc, 5)                 # (4, B*196, 75) bf16
    M1 = B * 14 * 14
    tm1 = min(512, _round_up(M1, 8))
    M1p = _round_up(M1, tm1)
    p1 = _pad_axis(_pad_axis(p1, 2, 128), 1, M1p)            # K 75->128, M -> tile multiple
    pooled1 = conv_pool(p1, prep["cw1"], prep["cb1"], tm=tm1)  # (M1p, 128) bf16
    pooled1 = pooled1[:M1, :6].reshape(B, 14, 14, 6)

    # ---- conv2 + ReLU + 2x2 max-pool ----
    p2 = im2col_pool_corners_nhwc(pooled1, 5)                # (4, B*25, 150) bf16
    M2 = B * 5 * 5
    tm2 = min(512, _round_up(M2, 8))
    M2p = _round_up(M2, tm2)
    p2 = _pad_axis(_pad_axis(p2, 2, 256), 1, M2p)            # K 150->256
    pooled2 = conv_pool(p2, prep["cw2"], prep["cb2"], tm=tm2)  # (M2p, 128) bf16

    # ---- flatten (PyTorch NCHW order is folded into fw1) + fused FC stack ----
    flat = pooled2[:M2].reshape(B, 25 * 128)                 # contiguous, no transpose
    tb = min(256, _round_up(B, 8))
    Bp = _round_up(B, tb)
    flat = _pad_axis(flat, 0, Bp)
    logits = fc_stack(flat, prep["fw1"], prep["fb1"], prep["fw2"], prep["fb2"],
                      prep["fw3"], prep["fb3"], tb=tb)       # (Bp, 128) f32
    return logits[:B, :10]


# --------------------------- parameter handling -------------------------------

def _uniform(key, shape, fan_in):
    bound = 1.0 / jnp.sqrt(jnp.float32(fan_in))
    return jax.random.uniform(key, shape, jnp.float32, -bound, bound)


def init_params(key):
    ks = jax.random.split(key, 10)
    cw1 = _uniform(ks[0], (6, 3, 5, 5), 3 * 5 * 5)
    cb1 = _uniform(ks[1], (6,), 3 * 5 * 5)
    cw2 = _uniform(ks[2], (16, 6, 5, 5), 6 * 5 * 5)
    cb2 = _uniform(ks[3], (16,), 6 * 5 * 5)
    fw1 = _uniform(ks[4], (120, 400), 400)
    fb1 = _uniform(ks[5], (120,), 400)
    fw2 = _uniform(ks[6], (84, 120), 120)
    fb2 = _uniform(ks[7], (84,), 120)
    fw3 = _uniform(ks[8], (10, 84), 84)
    fb3 = _uniform(ks[9], (10,), 84)
    return (cw1, cb1, cw2, cb2, fw1, fb1, fw2, fb2, fw3, fb3)


def prepare_params(params):
    """One-time (outside the hot path): transpose, 128-pad and bf16-cast weights."""
    (cw1, cb1, cw2, cb2, fw1, fb1, fw2, fb2, fw3, fb3) = params

    def conv_w(w):                               # (Cout, Cin, k, k) -> (Kpad, 128) bf16
        cout = w.shape[0]
        k2 = w.shape[1] * w.shape[2] * w.shape[3]
        wt = w.reshape(cout, k2).T               # K ordered (cin, kh, kw)
        wt = _pad_axis(_pad_axis(wt, 0, _round_up(k2, 128)), 1, 128)
        return wt.astype(jnp.bfloat16)

    def bias_row(b):
        return _pad_axis(b.reshape(1, -1), 1, 128).astype(jnp.float32)

    # fc1: fold PyTorch's NCHW flatten (index = c*25 + hw) into the weight so it
    # consumes the kernel's pooled layout (row index = hw*128 + padded-c).
    w1 = jnp.transpose(fw1.reshape(120, 16, 25), (2, 1, 0))   # (hw, c, o)
    w1 = _pad_axis(_pad_axis(w1, 1, 128), 2, 128)             # (25, 128, 128)
    w1 = w1.reshape(25 * 128, 128).astype(jnp.bfloat16)
    w2 = _pad_axis(_pad_axis(fw2.T, 0, 128), 1, 128).astype(jnp.bfloat16)
    w3 = _pad_axis(_pad_axis(fw3.T, 0, 128), 1, 128).astype(jnp.bfloat16)

    return dict(
        cw1=conv_w(cw1), cb1=bias_row(cb1),
        cw2=conv_w(cw2), cb2=bias_row(cb2),
        fw1=w1, fb1=bias_row(fb1),
        fw2=w2, fb2=bias_row(fb2),
        fw3=w3, fb3=bias_row(fb3),
    )


if __name__ == "__main__":
    key = jax.random.PRNGKey(0)
    k_x, k_p = jax.random.split(key)
    # CIFAR-10 sized input: the forward's view(-1, 16*5*5) requires 32x32 spatial.
    x = jax.random.normal(k_x, (4, 3, 32, 32), jnp.float32)
    params = init_params(k_p)
    prep = prepare_params(params)            # one-time weight prep, outside hot path

    fwd = jax.jit(net_forward)
    out = jax.block_until_ready(fwd(x, prep))

    assert out.shape == (4, 10) and out.dtype == jnp.float32
    assert bool(jnp.all(jnp.isfinite(out)))
    print("KERNEL_OK")
</pallas_src>

<mosaic_0001>
module attributes {stable_mosaic.version = 11 : i64} {
  func.func @conv_pool_kernel(%arg0: i32, %arg1: i32, %arg2: memref<1x512x128xbf16, #tpu.memory_space<vmem>>, %arg3: memref<128x128xbf16, #tpu.memory_space<vmem>>, %arg4: memref<1x128xf32, #tpu.memory_space<vmem>>, %arg5: memref<512x128xbf16, #tpu.memory_space<vmem>>, %arg6: memref<512x128xf32, #tpu.memory_space<vmem>>) attributes {dimension_semantics = [#tpu.dimension_semantics<parallel>, #tpu.dimension_semantics<arbitrary>], iteration_bounds = array<i64: 2, 4>, scalar_prefetch = 0 : i64, scratch_operands = 1 : i64, tpu.core_type = #tpu.core_type<tc>, window_params = [{transform_indices = @transform_0, window_bounds = array<i64: 1, 512, 128>}, {pipeline_mode = #tpu.pipeline_mode<synchronous>, transform_indices = @transform_1, window_bounds = array<i64: 128, 128>}, {pipeline_mode = #tpu.pipeline_mode<synchronous>, transform_indices = @transform_2, window_bounds = array<i64: 1, 128>}, {transform_indices = @transform_3, window_bounds = array<i64: 512, 128>}]} {
    %c0 = arith.constant 0 : index
    %c0_0 = arith.constant 0 : index
    %c0_1 = arith.constant 0 : index
    %0 = vector.load %arg2[%c0, %c0_0, %c0_1] : memref<1x512x128xbf16, #tpu.memory_space<vmem>>, vector<1x512x128xbf16>
    %1 = vector.shape_cast %0 : vector<1x512x128xbf16> to vector<512x128xbf16>
    %c0_2 = arith.constant 0 : index
    %c0_3 = arith.constant 0 : index
    %2 = vector.load %arg3[%c0_2, %c0_3] : memref<128x128xbf16, #tpu.memory_space<vmem>>, vector<128x128xbf16>
    %cst = arith.constant dense<0.000000e+00> : vector<512x128xf32>
    %3 = tpu.matmul %1, %2, %cst {dimension_numbers = #tpu.dot_dimension_numbers<[1], [0], [0], [1], [0, 0, 1, 1], [], []>} : vector<512x128xbf16>, vector<128x128xbf16>, vector<512x128xf32> -> vector<512x128xf32>
    %c0_i32 = arith.constant 0 : i32
    %4 = arith.cmpi eq, %arg1, %c0_i32 : i32
    %5 = arith.extui %4 : i1 to i32
    %c0_i32_4 = arith.constant 0 : i32
    %6 = arith.cmpi ne, %5, %c0_i32_4 : i32
    scf.if %6 {
      %c0_8 = arith.constant 0 : index
      %c0_9 = arith.constant 0 : index
      %13 = vector.load %arg6[%c0_8, %c0_9] : memref<512x128xf32, #tpu.memory_space<vmem>>, vector<512x128xf32>
      tpu.vector_store %arg6[%c0_8, %c0_9], %3 {strides = array<i32>} : memref<512x128xf32, #tpu.memory_space<vmem>>, vector<512x128xf32>,
    } else {
    }
    %c0_i32_5 = arith.constant 0 : i32
    %7 = arith.cmpi sgt, %arg1, %c0_i32_5 : i32
    %8 = arith.extui %7 : i1 to i32
    %c0_i32_6 = arith.constant 0 : i32
    %9 = arith.cmpi ne, %8, %c0_i32_6 : i32
    scf.if %9 {
      %c0_8 = arith.constant 0 : index
      %c0_9 = arith.constant 0 : index
      %13 = vector.load %arg6[%c0_8, %c0_9] : memref<512x128xf32, #tpu.memory_space<vmem>>, vector<512x128xf32>
      %14 = arith.maximumf %13, %3 : vector<512x128xf32>
      %c0_10 = arith.constant 0 : index
      %c0_11 = arith.constant 0 : index
      %15 = vector.load %arg6[%c0_10, %c0_11] : memref<512x128xf32, #tpu.memory_space<vmem>>, vector<512x128xf32>
      tpu.vector_store %arg6[%c0_10, %c0_11], %14 {strides = array<i32>} : memref<512x128xf32, #tpu.memory_space<vmem>>, vector<512x128xf32>,
    } else {
    }
    %c3_i32 = arith.constant 3 : i32
    %10 = arith.cmpi eq, %arg1, %c3_i32 : i32
    %11 = arith.extui %10 : i1 to i32
    %c0_i32_7 = arith.constant 0 : i32
    %12 = arith.cmpi ne, %11, %c0_i32_7 : i32
    scf.if %12 {
      %c0_8 = arith.constant 0 : index
      %c0_9 = arith.constant 0 : index
      %13 = vector.load %arg6[%c0_8, %c0_9] : memref<512x128xf32, #tpu.memory_space<vmem>>, vector<512x128xf32>
      %c0_10 = arith.constant 0 : index
      %c0_11 = arith.constant 0 : index
      %14 = vector.load %arg4[%c0_10, %c0_11] : memref<1x128xf32, #tpu.memory_space<vmem>>, vector<1x128xf32>
      %15 = vector.broadcast %14 : vector<1x128xf32> to vector<512x128xf32>
      %16 = arith.addf %13, %15 : vector<512x128xf32>
      %cst_12 = arith.constant 0.000000e+00 : f32
      %17 = vector.broadcast %cst_12 : f32 to vector<512x128xf32>
      %18 = arith.maximumf %16, %17 : vector<512x128xf32>
      %19 = arith.truncf %18 : vector<512x128xf32> to vector<512x128xbf16>
      %c0_13 = arith.constant 0 : index
      %c0_14 = arith.constant 0 : index
      %20 = vector.load %arg5[%c0_13, %c0_14] : memref<512x128xbf16, #tpu.memory_space<vmem>>, vector<512x128xbf16>
      tpu.vector_store %arg5[%c0_13, %c0_14], %19 {strides = array<i32>} : memref<512x128xbf16, #tpu.memory_space<vmem>>, vector<512x128xbf16>,
    } else {
    }
    return
  }
  func.func @transform_0(%arg0: i32, %arg1: i32) -> (i32, i32, i32) {
    %c0_i32 = arith.constant 0 : i32
    %c0_i32_0 = arith.constant 0 : i32
    return %arg1, %arg0, %c0_i32 : i32, i32, i32
  }
  func.func @transform_1(%arg0: i32, %arg1: i32) -> (i32, i32) {
    %c0_i32 = arith.constant 0 : i32
    %c0_i32_0 = arith.constant 0 : i32
    %c0_i32_1 = arith.constant 0 : i32
    return %c0_i32, %c0_i32_0 : i32, i32
  }
  func.func @transform_2(%arg0: i32, %arg1: i32) -> (i32, i32) {
    %c0_i32 = arith.constant 0 : i32
    %c0_i32_0 = arith.constant 0 : i32
    %c0_i32_1 = arith.constant 0 : i32
    return %c0_i32, %c0_i32_0 : i32, i32
  }
  func.func @transform_3(%arg0: i32, %arg1: i32) -> (i32, i32) {
    %c0_i32 = arith.constant 0 : i32
    %c0_i32_0 = arith.constant 0 : i32
    return %arg0, %c0_i32 : i32, i32
  }
}

module attributes {stable_mosaic.version = 11 : i64} {
  func.func @conv_pool_kernel(%arg0: i32, %arg1: i32, %arg2: memref<1x104x256xbf16, #tpu.memory_space<vmem>>, %arg3: memref<256x128xbf16, #tpu.memory_space<vmem>>, %arg4: memref<1x128xf32, #tpu.memory_space<vmem>>, %arg5: memref<104x128xbf16, #tpu.memory_space<vmem>>, %arg6: memref<104x128xf32, #tpu.memory_space<vmem>>) attributes {dimension_semantics = [#tpu.dimension_semantics<parallel>, #tpu.dimension_semantics<arbitrary>], iteration_bounds = array<i64: 1, 4>, scalar_prefetch = 0 : i64, scratch_operands = 1 : i64, tpu.core_type = #tpu.core_type<tc>, window_params = [{transform_indices = @transform_0, window_bounds = array<i64: 1, 104, 256>}, {pipeline_mode = #tpu.pipeline_mode<synchronous>, transform_indices = @transform_1, window_bounds = array<i64: 256, 128>}, {pipeline_mode = #tpu.pipeline_mode<synchronous>, transform_indices = @transform_2, window_bounds = array<i64: 1, 128>}, {transform_indices = @transform_3, window_bounds = array<i64: 104, 128>}]} {
    %c0 = arith.constant 0 : index
    %c0_0 = arith.constant 0 : index
    %c0_1 = arith.constant 0 : index
    %0 = vector.load %arg2[%c0, %c0_0, %c0_1] : memref<1x104x256xbf16, #tpu.memory_space<vmem>>, vector<1x104x256xbf16>
    %1 = vector.shape_cast %0 : vector<1x104x256xbf16> to vector<104x256xbf16>
    %c0_2 = arith.constant 0 : index
    %c0_3 = arith.constant 0 : index
    %2 = vector.load %arg3[%c0_2, %c0_3] : memref<256x128xbf16, #tpu.memory_space<vmem>>, vector<256x128xbf16>
    %cst = arith.constant dense<0.000000e+00> : vector<104x128xf32>
    %3 = tpu.matmul %1, %2, %cst {dimension_numbers = #tpu.dot_dimension_numbers<[1], [0], [0], [1], [0, 0, 1, 1], [], []>} : vector<104x256xbf16>, vector<256x128xbf16>, vector<104x128xf32> -> vector<104x128xf32>
    %c0_i32 = arith.constant 0 : i32
    %4 = arith.cmpi eq, %arg1, %c0_i32 : i32
    %5 = arith.extui %4 : i1 to i32
    %c0_i32_4 = arith.constant 0 : i32
    %6 = arith.cmpi ne, %5, %c0_i32_4 : i32
    scf.if %6 {
      %c0_8 = arith.constant 0 : index
      %c0_9 = arith.constant 0 : index
      %13 = vector.load %arg6[%c0_8, %c0_9] : memref<104x128xf32, #tpu.memory_space<vmem>>, vector<104x128xf32>
      tpu.vector_store %arg6[%c0_8, %c0_9], %3 {strides = array<i32>} : memref<104x128xf32, #tpu.memory_space<vmem>>, vector<104x128xf32>,
    } else {
    }
    %c0_i32_5 = arith.constant 0 : i32
    %7 = arith.cmpi sgt, %arg1, %c0_i32_5 : i32
    %8 = arith.extui %7 : i1 to i32
    %c0_i32_6 = arith.constant 0 : i32
    %9 = arith.cmpi ne, %8, %c0_i32_6 : i32
    scf.if %9 {
      %c0_8 = arith.constant 0 : index
      %c0_9 = arith.constant 0 : index
      %13 = vector.load %arg6[%c0_8, %c0_9] : memref<104x128xf32, #tpu.memory_space<vmem>>, vector<104x128xf32>
      %14 = arith.maximumf %13, %3 : vector<104x128xf32>
      %c0_10 = arith.constant 0 : index
      %c0_11 = arith.constant 0 : index
      %15 = vector.load %arg6[%c0_10, %c0_11] : memref<104x128xf32, #tpu.memory_space<vmem>>, vector<104x128xf32>
      tpu.vector_store %arg6[%c0_10, %c0_11], %14 {strides = array<i32>} : memref<104x128xf32, #tpu.memory_space<vmem>>, vector<104x128xf32>,
    } else {
    }
    %c3_i32 = arith.constant 3 : i32
    %10 = arith.cmpi eq, %arg1, %c3_i32 : i32
    %11 = arith.extui %10 : i1 to i32
    %c0_i32_7 = arith.constant 0 : i32
    %12 = arith.cmpi ne, %11, %c0_i32_7 : i32
    scf.if %12 {
      %c0_8 = arith.constant 0 : index
      %c0_9 = arith.constant 0 : index
      %13 = vector.load %arg6[%c0_8, %c0_9] : memref<104x128xf32, #tpu.memory_space<vmem>>, vector<104x128xf32>
      %c0_10 = arith.constant 0 : index
      %c0_11 = arith.constant 0 : index
      %14 = vector.load %arg4[%c0_10, %c0_11] : memref<1x128xf32, #tpu.memory_space<vmem>>, vector<1x128xf32>
      %15 = vector.broadcast %14 : vector<1x128xf32> to vector<104x128xf32>
      %16 = arith.addf %13, %15 : vector<104x128xf32>
      %cst_12 = arith.constant 0.000000e+00 : f32
      %17 = vector.broadcast %cst_12 : f32 to vector<104x128xf32>
      %18 = arith.maximumf %16, %17 : vector<104x128xf32>
      %19 = arith.truncf %18 : vector<104x128xf32> to vector<104x128xbf16>
      %c0_13 = arith.constant 0 : index
      %c0_14 = arith.constant 0 : index
      %20 = vector.load %arg5[%c0_13, %c0_14] : memref<104x128xbf16, #tpu.memory_space<vmem>>, vector<104x128xbf16>
      tpu.vector_store %arg5[%c0_13, %c0_14], %19 {strides = array<i32>} : memref<104x128xbf16, #tpu.memory_space<vmem>>, vector<104x128xbf16>,
    } else {
    }
    return
  }
  func.func @transform_0(%arg0: i32, %arg1: i32) -> (i32, i32, i32) {
    %c0_i32 = arith.constant 0 : i32
    %c0_i32_0 = arith.constant 0 : i32
    return %arg1, %arg0, %c0_i32 : i32, i32, i32
  }
  func.func @transform_1(%arg0: i32, %arg1: i32) -> (i32, i32) {
    %c0_i32 = arith.constant 0 : i32
    %c0_i32_0 = arith.constant 0 : i32
    %c0_i32_1 = arith.constant 0 : i32
    return %c0_i32, %c0_i32_0 : i32, i32
  }
  func.func @transform_2(%arg0: i32, %arg1: i32) -> (i32, i32) {
    %c0_i32 = arith.constant 0 : i32
    %c0_i32_0 = arith.constant 0 : i32
    %c0_i32_1 = arith.constant 0 : i32
    return %c0_i32, %c0_i32_0 : i32, i32
  }
  func.func @transform_3(%arg0: i32, %arg1: i32) -> (i32, i32) {
    %c0_i32 = arith.constant 0 : i32
    %c0_i32_0 = arith.constant 0 : i32
    return %arg0, %c0_i32 : i32, i32
  }
}

module attributes {stable_mosaic.version = 11 : i64} {
  func.func @fc_stack_kernel(%arg0: i32, %arg1: memref<8x3200xbf16, #tpu.memory_space<vmem>>, %arg2: memref<3200x128xbf16, #tpu.memory_space<vmem>>, %arg3: memref<1x128xf32, #tpu.memory_space<vmem>>, %arg4: memref<128x128xbf16, #tpu.memory_space<vmem>>, %arg5: memref<1x128xf32, #tpu.memory_space<vmem>>, %arg6: memref<128x128xbf16, #tpu.memory_space<vmem>>, %arg7: memref<1x128xf32, #tpu.memory_space<vmem>>, %arg8: memref<8x128xf32, #tpu.memory_space<vmem>>) attributes {dimension_semantics = [#tpu.dimension_semantics<parallel>], iteration_bounds = array<i64: 1>, scalar_prefetch = 0 : i64, scratch_operands = 0 : i64, tpu.core_type = #tpu.core_type<tc>, window_params = [{transform_indices = @transform_0, window_bounds = array<i64: 8, 3200>}, {pipeline_mode = #tpu.pipeline_mode<synchronous>, transform_indices = @transform_1, window_bounds = array<i64: 3200, 128>}, {pipeline_mode = #tpu.pipeline_mode<synchronous>, transform_indices = @transform_2, window_bounds = array<i64: 1, 128>}, {pipeline_mode = #tpu.pipeline_mode<synchronous>, transform_indices = @transform_3, window_bounds = array<i64: 128, 128>}, {pipeline_mode = #tpu.pipeline_mode<synchronous>, transform_indices = @transform_4, window_bounds = array<i64: 1, 128>}, {pipeline_mode = #tpu.pipeline_mode<synchronous>, transform_indices = @transform_5, window_bounds = array<i64: 128, 128>}, {pipeline_mode = #tpu.pipeline_mode<synchronous>, transform_indices = @transform_6, window_bounds = array<i64: 1, 128>}, {transform_indices = @transform_7, window_bounds = array<i64: 8, 128>}]} {
    %c0 = arith.constant 0 : index
    %c0_0 = arith.constant 0 : index
    %0 = vector.load %arg1[%c0, %c0_0] : memref<8x3200xbf16, #tpu.memory_space<vmem>>, vector<8x3200xbf16>
    %c0_1 = arith.constant 0 : index
    %c0_2 = arith.constant 0 : index
    %1 = vector.load %arg2[%c0_1, %c0_2] : memref<3200x128xbf16, #tpu.memory_space<vmem>>, vector<3200x128xbf16>
    %cst = arith.constant dense<0.000000e+00> : vector<8x128xf32>
    %2 = tpu.matmul %0, %1, %cst {dimension_numbers = #tpu.dot_dimension_numbers<[1], [0], [0], [1], [0, 0, 1, 1], [], []>} : vector<8x3200xbf16>, vector<3200x128xbf16>, vector<8x128xf32> -> vector<8x128xf32>
    %c0_3 = arith.constant 0 : index
    %c0_4 = arith.constant 0 : index
    %3 = vector.load %arg3[%c0_3, %c0_4] : memref<1x128xf32, #tpu.memory_space<vmem>>, vector<1x128xf32>
    %4 = vector.broadcast %3 : vector<1x128xf32> to vector<8x128xf32>
    %5 = arith.addf %2, %4 : vector<8x128xf32>
    %cst_5 = arith.constant 0.000000e+00 : f32
    %6 = vector.broadcast %cst_5 : f32 to vector<8x128xf32>
    %7 = arith.maximumf %5, %6 : vector<8x128xf32>
    %8 = arith.truncf %7 : vector<8x128xf32> to vector<8x128xbf16>
    %c0_6 = arith.constant 0 : index
    %c0_7 = arith.constant 0 : index
    %9 = vector.load %arg4[%c0_6, %c0_7] : memref<128x128xbf16, #tpu.memory_space<vmem>>, vector<128x128xbf16>
    %cst_8 = arith.constant dense<0.000000e+00> : vector<8x128xf32>
    %10 = tpu.matmul %8, %9, %cst_8 {dimension_numbers = #tpu.dot_dimension_numbers<[1], [0], [0], [1], [0, 0, 1, 1], [], []>} : vector<8x128xbf16>, vector<128x128xbf16>, vector<8x128xf32> -> vector<8x128xf32>
    %c0_9 = arith.constant 0 : index
    %c0_10 = arith.constant 0 : index
    %11 = vector.load %arg5[%c0_9, %c0_10] : memref<1x128xf32, #tpu.memory_space<vmem>>, vector<1x128xf32>
    %12 = vector.broadcast %11 : vector<1x128xf32> to vector<8x128xf32>
    %13 = arith.addf %10, %12 : vector<8x128xf32>
    %cst_11 = arith.constant 0.000000e+00 : f32
    %14 = vector.broadcast %cst_11 : f32 to vector<8x128xf32>
    %15 = arith.maximumf %13, %14 : vector<8x128xf32>
    %16 = arith.truncf %15 : vector<8x128xf32> to vector<8x128xbf16>
    %c0_12 = arith.constant 0 : index
    %c0_13 = arith.constant 0 : index
    %17 = vector.load %arg6[%c0_12, %c0_13] : memref<128x128xbf16, #tpu.memory_space<vmem>>, vector<128x128xbf16>
    %cst_14 = arith.constant dense<0.000000e+00> : vector<8x128xf32>
    %18 = tpu.matmul %16, %17, %cst_14 {dimension_numbers = #tpu.dot_dimension_numbers<[1], [0], [0], [1], [0, 0, 1, 1], [], []>} : vector<8x128xbf16>, vector<128x128xbf16>, vector<8x128xf32> -> vector<8x128xf32>
    %c0_15 = arith.constant 0 : index
    %c0_16 = arith.constant 0 : index
    %19 = vector.load %arg7[%c0_15, %c0_16] : memref<1x128xf32, #tpu.memory_space<vmem>>, vector<1x128xf32>
    %20 = vector.broadcast %19 : vector<1x128xf32> to vector<8x128xf32>
    %21 = arith.addf %18, %20 : vector<8x128xf32>
    %c0_17 = arith.constant 0 : index
    %c0_18 = arith.constant 0 : index
    %22 = vector.load %arg8[%c0_17, %c0_18] : memref<8x128xf32, #tpu.memory_space<vmem>>, vector<8x128xf32>
    tpu.vector_store %arg8[%c0_17, %c0_18], %21 {strides = array<i32>} : memref<8x128xf32, #tpu.memory_space<vmem>>, vector<8x128xf32>,
    return
  }
  func.func @transform_0(%arg0: i32) -> (i32, i32) {
    %c0_i32 = arith.constant 0 : i32
    %c0_i32_0 = arith.constant 0 : i32
    return %arg0, %c0_i32 : i32, i32
  }
  func.func @transform_1(%arg0: i32) -> (i32, i32) {
    %c0_i32 = arith.constant 0 : i32
    %c0_i32_0 = arith.constant 0 : i32
    %c0_i32_1 = arith.constant 0 : i32
    return %c0_i32, %c0_i32_0 : i32, i32
  }
  func.func @transform_2(%arg0: i32) -> (i32, i32) {
    %c0_i32 = arith.constant 0 : i32
    %c0_i32_0 = arith.constant 0 : i32
    %c0_i32_1 = arith.constant 0 : i32
    return %c0_i32, %c0_i32_0 : i32, i32
  }
  func.func @transform_3(%arg0: i32) -> (i32, i32) {
    %c0_i32 = arith.constant 0 : i32
    %c0_i32_0 = arith.constant 0 : i32
    %c0_i32_1 = arith.constant 0 : i32
    return %c0_i32, %c0_i32_0 : i32, i32
  }
  func.func @transform_4(%arg0: i32) -> (i32, i32) {
    %c0_i32 = arith.constant 0 : i32
    %c0_i32_0 = arith.constant 0 : i32
    %c0_i32_1 = arith.constant 0 : i32
    return %c0_i32, %c0_i32_0 : i32, i32
  }
  func.func @transform_5(%arg0: i32) -> (i32, i32) {
    %c0_i32 = arith.constant 0 : i32
    %c0_i32_0 = arith.constant 0 : i32
    %c0_i32_1 = arith.constant 0 : i32
    return %c0_i32, %c0_i32_0 : i32, i32
  }
  func.func @transform_6(%arg0: i32) -> (i32, i32) {
    %c0_i32 = arith.constant 0 : i32
    %c0_i32_0 = arith.constant 0 : i32
    %c0_i32_1 = arith.constant 0 : i32
    return %c0_i32, %c0_i32_0 : i32, i32
  }
  func.func @transform_7(%arg0: i32) -> (i32, i32) {
    %c0_i32 = arith.constant 0 : i32
    %c0_i32_0 = arith.constant 0 : i32
    return %arg0, %c0_i32 : i32, i32
  }
}

</mosaic_0001>

<llo_original>
// kernel: net_forward.3
$region0: #{net_forward.3}
  #allocation0 [shape = 'u32[]', space=smem, size = 0x4, offset = 0x4, fixed_abs, tag = 'smem constant byte address 0x4 - core index']
  #allocation1 [shape = 'u32[144,128]{1,0:T(1,128)}', space=vmem, size = 0x12000, scoped, tag = 'internal scratch']
  #allocation2 [shape = 'f32[512,128]{1,0:T(8,128)}', space=vmem, size = 0x40000, scoped, tag = 'scratch operand']
  %s0 = inlined_call_operand.vmem [shape: bf16[4,1024,128], index: 0, kind: input, shape index: {}]
  %s1 = inlined_call_operand.vmem [shape: bf16[128,128], index: 1, kind: input, shape index: {}]
  %s2 = inlined_call_operand.vmem [shape: f32[1,128], index: 2, kind: input, shape index: {}]
  %s3 = inlined_call_operand.vmem [shape: bf16[1024,128], index: 3, kind: output, shape index: {}]
  %s4 = sld [smem:[#allocation0]]
  $region57: #{net_forward.3} parent=0
    _
  %s6 = ssub.s32 1, %s4
  %s7 = scalar_select 0, %s6, %s4
  loop: start=0, step=1, limit=10
  $region2: #{net_forward.3} parent=0 // loop_pre_header
    _
  $region3: #{net_forward.3} parent=0 // loop_header
    %s9 = sphi 0, %s13
    %p10 = scmp.ge.s32.totalorder %s9, 10
    %s16 = sphi 0, %s28
    %s17 = sphi 0, %s24
    %s18 = sphi 0, %s16
    %s19 = sphi 0, %s17
    %s20 = sphi 0, %s18
    %s21 = sphi 0, %s19
    %s33 = sphi 0, %s35
    %s36 = sphi 0, %s33
    %s37 = sphi 0, %s36
    %s53 = sphi 0, %s37
    %s57 = sphi 0, %s57
    %s59 = sphi 0, %s57
    %s60 = sphi 0, %s59
    %s74 = sphi 0, %s60
    %s78 = sphi 0, %s78
    %s80 = sphi 0, %s78
    %s81 = sphi 0, %s80
    %s95 = sphi 0, %s81
    %s101 = sphi 0, %s103
    %s104 = sphi 0, %s101
    %s105 = sphi 0, %s104
    %s121 = sphi 0, %s105
  $region4: #{net_forward.3} parent=0 // loop_header_branch
    %12 = sbr.rel (%p10) target = $region8
  $region5: #{net_forward.3} parent=0 // loop_body
    %s14 = ssub.s32 %s9, 1
    %s15 = ssub.s32 %s9, 2
    %s22 = sadd.s32 1, %s17
    %p23 = scmp.ge.s32.totalorder %s22, 4
    %s24 = scalar_select %p23, 0, %s22
    %s25 = sadd.s32 1, %s16
    %s26 = scalar_select %p23, %s25, %s16
    %p27 = scmp.ge.s32.totalorder %s26, 2
    %s28 = scalar_select %p27, 0, %s26
    %s29 = ssub.s32 %s17, %s24
    %s30 = ssub.s32 %s16, %s28
    %s31 = sor.u32 %s29, %s30
    %p32 = scmp.eq.s32.totalorder %s31, 0
    %s34 = sadd.s32 %s33, 1
    %s35 = scalar_select %p32, %s33, %s34
    %p38 = pneg %p32
    %p39 = scmp.eq.s32.totalorder %s9, 7
    %p40 = por %p38, %p39
    %p41 = scmp.ne.s32.totalorder %s33, %s36
    %p42 = scmp.eq.s32.totalorder %s9, 0
    %p43 = por %p41, %p42
    %p44 = scmp.ne.s32.totalorder %s33, %s36
    %p45 = scmp.eq.s32.totalorder %s14, 7
    %p46 = por %p44, %p45
    %p47 = scmp.ne.s32.totalorder %s36, %s37
    %p48 = scmp.eq.s32.totalorder %s14, 0
    %p49 = por %p47, %p48
    %p50 = scmp.ne.s32.totalorder %s36, %s37
    %p51 = scmp.eq.s32.totalorder %s15, 7
    %p52 = por %p50, %p51
    %p54 = scmp.ne.s32.totalorder %s37, %s53
    %p55 = scmp.eq.s32.totalorder %s15, 0
    %p56 = por %p54, %p55
    %s58 = sadd.s32 %s57, 1
    %p61 = scmp.eq.s32.totalorder %s9, 7
    %p62 = scmp.ne.s32.totalorder %s57, %s59
    %p63 = scmp.eq.s32.totalorder %s9, 0
    %p64 = por %p62, %p63
    %p65 = scmp.ne.s32.totalorder %s57, %s59
    %p66 = scmp.eq.s32.totalorder %s14, 7
    %p67 = por %p65, %p66
    %p68 = scmp.ne.s32.totalorder %s59, %s60
    %p69 = scmp.eq.s32.totalorder %s14, 0
    %p70 = por %p68, %p69
    %p71 = scmp.ne.s32.totalorder %s59, %s60
    %p72 = scmp.eq.s32.totalorder %s15, 7
    %p73 = por %p71, %p72
    %p75 = scmp.ne.s32.totalorder %s60, %s74
    %p76 = scmp.eq.s32.totalorder %s15, 0
    %p77 = por %p75, %p76
    %s79 = sadd.s32 %s78, 1
    %p82 = scmp.eq.s32.totalorder %s9, 7
    %p83 = scmp.ne.s32.totalorder %s78, %s80
    %p84 = scmp.eq.s32.totalorder %s9, 0
    %p85 = por %p83, %p84
    %p86 = scmp.ne.s32.totalorder %s78, %s80
    %p87 = scmp.eq.s32.totalorder %s14, 7
    %p88 = por %p86, %p87
    %p89 = scmp.ne.s32.totalorder %s80, %s81
    %p90 = scmp.eq.s32.totalorder %s14, 0
    %p91 = por %p89, %p90
    %p92 = scmp.ne.s32.totalorder %s80, %s81
    %p93 = scmp.eq.s32.totalorder %s15, 7
    %p94 = por %p92, %p93
    %p96 = scmp.ne.s32.totalorder %s81, %s95
    %p97 = scmp.eq.s32.totalorder %s15, 0
    %p98 = por %p96, %p97
    %s99 = ssub.s32 %s16, %s28
    %p100 = scmp.eq.s32.totalorder %s99, 0
    %s102 = sadd.s32 %s101, 1
    %s103 = scalar_select %p100, %s101, %s102
    %p106 = pneg %p100
    %p107 = scmp.eq.s32.totalorder %s9, 7
    %p108 = por %p106, %p107
    %p109 = scmp.ne.s32.totalorder %s101, %s104
    %p110 = scmp.eq.s32.totalorder %s9, 0
    %p111 = por %p109, %p110
    %p112 = scmp.ne.s32.totalorder %s101, %s104
    %p113 = scmp.eq.s32.totalorder %s14, 7
    %p114 = por %p112, %p113
    %p115 = scmp.ne.s32.totalorder %s104, %s105
    %p116 = scmp.eq.s32.totalorder %s14, 0
    %p117 = por %p115, %p116
    %p118 = scmp.ne.s32.totalorder %s104, %s105
    %p119 = scmp.eq.s32.totalorder %s15, 7
    %p120 = por %p118, %p119
    %p122 = scmp.ne.s32.totalorder %s105, %s121
    %p123 = scmp.eq.s32.totalorder %s15, 0
    %p124 = por %p122, %p123
    %p125 = scmp.le.s32.totalorder 1, %s9
    %p126 = scmp.lt.s32.totalorder %s9, 9
    %p127 = pnand %p125, %p126
    %p128 = pneg %p127
    // Predicated region
    $region9: #{net_forward.3} parent=5 // pred_check
      _
    $region10: #{net_forward.3} parent=5 // pred_check_branch
      %130 = sbr.rel (%p127) target = $region12
    $region11: #{net_forward.3} parent=5 // pred_region
      %s131 = ssub.s32 %s9, 1
      // Predicated region
      $region13: #{net_forward.3} parent=11 // pred_check
        %p132 = pneg %p70
      $region14: #{net_forward.3} parent=11 // pred_check_branch
        %134 = sbr.rel (%p132) target = $region16
      $region15: #{net_forward.3} parent=11 // pred_region
        _
      $region16: #{net_forward.3} parent=11 // pred_fallthru
        _
      // Predicated region
      $region17: #{net_forward.3} parent=11 // pred_check
        %p135 = pneg %p91
      $region18: #{net_forward.3} parent=11 // pred_check_branch
        %137 = sbr.rel (%p135) target = $region20
      $region19: #{net_forward.3} parent=11 // pred_region
        _
      $region20: #{net_forward.3} parent=11 // pred_fallthru
        _
    $region12: #{net_forward.3} parent=5 // pred_fallthru
      _
    %p138 = scmp.lt.s32.totalorder %s9, 8
    // Predicated region
    $region21: #{net_forward.3} parent=5 // pred_check
      %p139 = pneg %p138
    $region22: #{net_forward.3} parent=5 // pred_check_branch
      %141 = sbr.rel (%p139) target = $region24
    $region23: #{net_forward.3} parent=5 // pred_region
      // Predicated region
      $region25: #{net_forward.3} parent=23 // pred_check
        %p142 = pneg %p43
      $region26: #{net_forward.3} parent=23 // pred_check_branch
        %144 = sbr.rel (%p142) target = $region28
      $region27: #{net_forward.3} parent=23 // pred_region
        %s145 = smul.u32 64, %s16
        %p146 = scmp.lt.s32.totalorder %s17, 3
        %s147 = scalar_select %p146, %s17, 3
        %p148 = scmp.lt.s32.totalorder %s145, 127
        %s149 = scalar_select %p148, %s145, 127
        %s150 = smul.addr %s147, 128
        %s151 = sadd.s32 %s149, %s150
        %s152 = smul.addr %s151, 4
        %s153 = scalar_lea.vmem %s0, %s152
        %s154 = smul.u32 64, %s16
      $region28: #{net_forward.3} parent=23 // pred_fallthru
        _
    $region24: #{net_forward.3} parent=5 // pred_fallthru
      _
    %p155 = scmp.le.s32.totalorder 1, %s9
    %p156 = scmp.lt.s32.totalorder %s9, 9
    %p157 = pnand %p155, %p156
    %p158 = pneg %p157
    // Predicated region
    $region29: #{net_forward.3} parent=5 // pred_check
      _
    $region30: #{net_forward.3} parent=5 // pred_check_branch
      %160 = sbr.rel (%p157) target = $region32
    $region31: #{net_forward.3} parent=5 // pred_region
      %s161 = ssub.s32 %s9, 1
      %s162 = smul.u32 64, %s18
      %p163 = scmp.lt.s32.totalorder %s19, 3
      %s164 = scalar_select %p163, %s19, 3
      %p165 = scmp.lt.s32.totalorder %s162, 127
      %s166 = scalar_select %p165, %s162, 127
      %s167 = smul.addr %s164, 128
      %s168 = sadd.s32 %s166, %s167
      %s169 = smul.addr %s168, 4
      %s170 = scalar_lea.vmem %s0, %s169
      %p171 = pneg %p49
      %p172 = pneg %p46
      %p173 = pneg %p70
      %p174 = pneg %p67
      %p175 = pneg %p91
      %p176 = pneg %p88
      %p177 = pneg %p117
      %p178 = pneg %p114
      %s179 = smul.u32 64, %s18
      %p180 = scmp.lt.s32.totalorder %s179, 127
      %s181 = scalar_select %p180, %s179, 127
      %s182 = smul.addr %s181, 4
      %s183 = scalar_lea.vmem %s3, %s182
      %s184 = smul.u32 64, %s18
      %p185 = scmp.lt.s32.totalorder %s19, 3
      %s186 = scalar_select %p185, %s19, 3
      %p187 = scmp.lt.s32.totalorder %s184, 127
      %s188 = scalar_select %p187, %s184, 127
      %s189 = smul.addr %s186, 128
      %s190 = sadd.s32 %s188, %s189
      %s191 = smul.addr %s190, 4
      %s192 = scalar_lea.vmem %s0, %s191
      %s193 = smul.u32 64, %s18
      %s194 = smul.u32 64, %s18
      %p195 = scmp.lt.s32.totalorder %s194, 127
      %s196 = scalar_select %p195, %s194, 127
      %s197 = smul.addr %s196, 4
      %s198 = scalar_lea.vmem %s3, %s197
      %s199 = smul.u32 64, %s18
      %v201 = vld [vmem:[%s192] sm:$0xf]
      %v202 = vld [vmem:[%s192 + $0x4] sm:$0xf]
      %v203 = vld [vmem:[%s192 + $0x8] sm:$0xf]
      %v204 = vld [vmem:[%s192 + $0xc] sm:$0xf]
      %v205 = vld [vmem:[%s192 + $0x10] sm:$0xf]
      %v206 = vld [vmem:[%s192 + $0x14] sm:$0xf]
      %v207 = vld [vmem:[%s192 + $0x18] sm:$0xf]
      %v208 = vld [vmem:[%s192 + $0x1c] sm:$0xf]
      %v209 = vld [vmem:[%s192 + $0x20] sm:$0xf]
      %v210 = vld [vmem:[%s192 + $0x24] sm:$0xf]
      %v211 = vld [vmem:[%s192 + $0x28] sm:$0xf]
      %v212 = vld [vmem:[%s192 + $0x2c] sm:$0xf]
      %v213 = vld [vmem:[%s192 + $0x30] sm:$0xf]
      %v214 = vld [vmem:[%s192 + $0x34] sm:$0xf]
      %v215 = vld [vmem:[%s192 + $0x38] sm:$0xf]
      %v216 = vld [vmem:[%s192 + $0x3c] sm:$0xf]
      %v217 = vld [vmem:[%s192 + $0x40] sm:$0xf]
      %v218 = vld [vmem:[%s192 + $0x44] sm:$0xf]
      %v219 = vld [vmem:[%s192 + $0x48] sm:$0xf]
      %v220 = vld [vmem:[%s192 + $0x4c] sm:$0xf]
      %v221 = vld [vmem:[%s192 + $0x50] sm:$0xf]
      %v222 = vld [vmem:[%s192 + $0x54] sm:$0xf]
      %v223 = vld [vmem:[%s192 + $0x58] sm:$0xf]
      %v224 = vld [vmem:[%s192 + $0x5c] sm:$0xf]
      %v225 = vld [vmem:[%s192 + $0x60] sm:$0xf]
      %v226 = vld [vmem:[%s192 + $0x64] sm:$0xf]
      %v227 = vld [vmem:[%s192 + $0x68] sm:$0xf]
      %v228 = vld [vmem:[%s192 + $0x6c] sm:$0xf]
      %v229 = vld [vmem:[%s192 + $0x70] sm:$0xf]
      %v230 = vld [vmem:[%s192 + $0x74] sm:$0xf]
      %v231 = vld [vmem:[%s192 + $0x78] sm:$0xf]
      %v232 = vld [vmem:[%s192 + $0x7c] sm:$0xf]
      %v233 = vld [vmem:[%s192 + $0x80] sm:$0xf]
      %v234 = vld [vmem:[%s192 + $0x84] sm:$0xf]
      %v235 = vld [vmem:[%s192 + $0x88] sm:$0xf]
      %v236 = vld [vmem:[%s192 + $0x8c] sm:$0xf]
      %v237 = vld [vmem:[%s192 + $0x90] sm:$0xf]
      %v238 = vld [vmem:[%s192 + $0x94] sm:$0xf]
      %v239 = vld [vmem:[%s192 + $0x98] sm:$0xf]
      %v240 = vld [vmem:[%s192 + $0x9c] sm:$0xf]
      %v241 = vld [vmem:[%s192 + $0xa0] sm:$0xf]
      %v242 = vld [vmem:[%s192 + $0xa4] sm:$0xf]
      %v243 = vld [vmem:[%s192 + $0xa8] sm:$0xf]
      %v244 = vld [vmem:[%s192 + $0xac] sm:$0xf]
      %v245 = vld [vmem:[%s192 + $0xb0] sm:$0xf]
      %v246 = vld [vmem:[%s192 + $0xb4] sm:$0xf]
      %v247 = vld [vmem:[%s192 + $0xb8] sm:$0xf]
      %v248 = vld [vmem:[%s192 + $0xbc] sm:$0xf]
      %v249 = vld [vmem:[%s192 + $0xc0] sm:$0xf]
      %v250 = vld [vmem:[%s192 + $0xc4] sm:$0xf]
      %v251 = vld [vmem:[%s192 + $0xc8] sm:$0xf]
      %v252 = vld [vmem:[%s192 + $0xcc] sm:$0xf]
      %v253 = vld [vmem:[%s192 + $0xd0] sm:$0xf]
      %v254 = vld [vmem:[%s192 + $0xd4] sm:$0xf]
      %v255 = vld [vmem:[%s192 + $0xd8] sm:$0xf]
      %v256 = vld [vmem:[%s192 + $0xdc] sm:$0xf]
      %v257 = vld [vmem:[%s192 + $0xe0] sm:$0xf]
      %v258 = vld [vmem:[%s192 + $0xe4] sm:$0xf]
      %v259 = vld [vmem:[%s192 + $0xe8] sm:$0xf]
      %v260 = vld [vmem:[%s192 + $0xec] sm:$0xf]
      %v261 = vld [vmem:[%s192 + $0xf0] sm:$0xf]
      %v262 = vld [vmem:[%s192 + $0xf4] sm:$0xf]
      %v263 = vld [vmem:[%s192 + $0xf8] sm:$0xf]
      %v264 = vld [vmem:[%s192 + $0xfc] sm:$0xf]
      %v265 = vld [vmem:[%s1] sm:$0xf]
      %v266 = vld [vmem:[%s1 + $0x4] sm:$0xf]
      %v267 = vld [vmem:[%s1 + $0x8] sm:$0xf]
      %v268 = vld [vmem:[%s1 + $0xc] sm:$0xf]
      %v269 = vld [vmem:[%s1 + $0x10] sm:$0xf]
      %v270 = vld [vmem:[%s1 + $0x14] sm:$0xf]
      %v271 = vld [vmem:[%s1 + $0x18] sm:$0xf]
      %v272 = vld [vmem:[%s1 + $0x1c] sm:$0xf]
      %v273 = vld [vmem:[%s1 + $0x20] sm:$0xf]
      %v274 = vld [vmem:[%s1 + $0x24] sm:$0xf]
      %v275 = vld [vmem:[%s1 + $0x28] sm:$0xf]
      %v276 = vld [vmem:[%s1 + $0x2c] sm:$0xf]
      %v277 = vld [vmem:[%s1 + $0x30] sm:$0xf]
      %v278 = vld [vmem:[%s1 + $0x34] sm:$0xf]
      %v279 = vld [vmem:[%s1 + $0x38] sm:$0xf]
      %v280 = vld [vmem:[%s1 + $0x3c] sm:$0xf]
      %v345 = vunpack.c.l.b16 %v201
      %v346 = vunpack.c.l.b16 %v202
      %v347 = vunpack.c.l.b16 %v203
      %v348 = vunpack.c.l.b16 %v204
      %v349 = vunpack.c.l.b16 %v205
      %v350 = vunpack.c.l.b16 %v206
      %v351 = vunpack.c.l.b16 %v207
      %v352 = vunpack.c.l.b16 %v208
      %v353 = vunpack.c.l.b16 %v209
      %v354 = vunpack.c.l.b16 %v210
      %v355 = vunpack.c.l.b16 %v211
      %v356 = vunpack.c.l.b16 %v212
      %v357 = vunpack.c.l.b16 %v213
      %v358 = vunpack.c.l.b16 %v214
      %v359 = vunpack.c.l.b16 %v215
      %v360 = vunpack.c.l.b16 %v216
      %v361 = vunpack.c.l.b16 %v217
      %v362 = vunpack.c.l.b16 %v218
      %v363 = vunpack.c.l.b16 %v219
      %v364 = vunpack.c.l.b16 %v220
      %v365 = vunpack.c.l.b16 %v221
      %v366 = vunpack.c.l.b16 %v222
      %v367 = vunpack.c.l.b16 %v223
      %v368 = vunpack.c.l.b16 %v224
      %v369 = vunpack.c.l.b16 %v225
      %v370 = vunpack.c.l.b16 %v226
      %v371 = vunpack.c.l.b16 %v227
      %v372 = vunpack.c.l.b16 %v228
      %v373 = vunpack.c.l.b16 %v229
      %v374 = vunpack.c.l.b16 %v230
      %v375 = vunpack.c.l.b16 %v231
      %v376 = vunpack.c.l.b16 %v232
      %v377 = vunpack.c.l.b16 %v233
      %v378 = vunpack.c.l.b16 %v234
      %v379 = vunpack.c.l.b16 %v235
      %v380 = vunpack.c.l.b16 %v236
      %v381 = vunpack.c.l.b16 %v237
      %v382 = vunpack.c.l.b16 %v238
      %v383 = vunpack.c.l.b16 %v239
      %v384 = vunpack.c.l.b16 %v240
      %v385 = vunpack.c.l.b16 %v241
      %v386 = vunpack.c.l.b16 %v242
      %v387 = vunpack.c.l.b16 %v243
      %v388 = vunpack.c.l.b16 %v244
      %v389 = vunpack.c.l.b16 %v245
      %v390 = vunpack.c.l.b16 %v246
      %v391 = vunpack.c.l.b16 %v247
      %v392 = vunpack.c.l.b16 %v248
      %v393 = vunpack.c.l.b16 %v249
      %v394 = vunpack.c.l.b16 %v250
      %v395 = vunpack.c.l.b16 %v251
      %v396 = vunpack.c.l.b16 %v252
      %v397 = vunpack.c.l.b16 %v253
      %v398 = vunpack.c.l.b16 %v254
      %v399 = vunpack.c.l.b16 %v255
      %v400 = vunpack.c.l.b16 %v256
      %v401 = vunpack.c.l.b16 %v257
      %v402 = vunpack.c.l.b16 %v258
      %v403 = vunpack.c.l.b16 %v259
      %v404 = vunpack.c.l.b16 %v260
      %v405 = vunpack.c.l.b16 %v261
      %v406 = vunpack.c.l.b16 %v262
      %v407 = vunpack.c.l.b16 %v263
      %v408 = vunpack.c.l.b16 %v264
      %v409 = vpack.c.b16 %v346, %v345
      %v410 = vpack.c.b16 %v348, %v347
      %v411 = vpack.c.b16 %v350, %v349
      %v412 = vpack.c.b16 %v352, %v351
      %v413 = vpack.c.b16 %v354, %v353
      %v414 = vpack.c.b16 %v356, %v355
      %v415 = vpack.c.b16 %v358, %v357
      %v416 = vpack.c.b16 %v360, %v359
      %v417 = vpack.c.b16 %v362, %v361
      %v418 = vpack.c.b16 %v364, %v363
      %v419 = vpack.c.b16 %v366, %v365
      %v420 = vpack.c.b16 %v368, %v367
      %v421 = vpack.c.b16 %v370, %v369
      %v422 = vpack.c.b16 %v372, %v371
      %v423 = vpack.c.b16 %v374, %v373
      %v424 = vpack.c.b16 %v376, %v375
      %v425 = vpack.c.b16 %v378, %v377
      %v426 = vpack.c.b16 %v380, %v379
      %v427 = vpack.c.b16 %v382, %v381
      %v428 = vpack.c.b16 %v384, %v383
      %v429 = vpack.c.b16 %v386, %v385
      %v430 = vpack.c.b16 %v388, %v387
      %v431 = vpack.c.b16 %v390, %v389
      %v432 = vpack.c.b16 %v392, %v391
      %v433 = vpack.c.b16 %v394, %v393
      %v434 = vpack.c.b16 %v396, %v395
      %v435 = vpack.c.b16 %v398, %v397
      %v436 = vpack.c.b16 %v400, %v399
      %v437 = vpack.c.b16 %v402, %v401
      %v438 = vpack.c.b16 %v404, %v403
      %v439 = vpack.c.b16 %v406, %v405
      %v440 = vpack.c.b16 %v408, %v407
      %v489 = vunpack.c.l.b16 %v265
      %v490 = vunpack.c.l.b16 %v266
      %v491 = vunpack.c.l.b16 %v267
      %v492 = vunpack.c.l.b16 %v268
      %v493 = vunpack.c.l.b16 %v269
      %v494 = vunpack.c.l.b16 %v270
      %v495 = vunpack.c.l.b16 %v271
      %v496 = vunpack.c.l.b16 %v272
      %v497 = vunpack.c.l.b16 %v273
      %v498 = vunpack.c.l.b16 %v274
      %v499 = vunpack.c.l.b16 %v275
      %v500 = vunpack.c.l.b16 %v276
      %v501 = vunpack.c.l.b16 %v277
      %v502 = vunpack.c.l.b16 %v278
      %v503 = vunpack.c.l.b16 %v279
      %v504 = vunpack.c.l.b16 %v280
      %v505 = vpack.c.b16 %v490, %v489
      %v506 = vpack.c.b16 %v492, %v491
      %v507 = vpack.c.b16 %v494, %v493
      %v508 = vpack.c.b16 %v496, %v495
      %v509 = vpack.c.b16 %v498, %v497
      %v510 = vpack.c.b16 %v500, %v499
      %v511 = vpack.c.b16 %v502, %v501
      %v512 = vpack.c.b16 %v504, %v503
      %521 = vmatprep.subr.bf16.mxu0 0
      %522 = vmatpush1.bf16.msra.mxu0 %v505
      %523 = vmatprep.subr.bf16.mxu0 0
      %524 = vmatpush1.bf16.msra.mxu0 %v506
      %525 = vmatprep.subr.bf16.mxu0 0
      %526 = vmatpush1.bf16.msra.mxu0 %v507
      %527 = vmatprep.subr.bf16.mxu0 0
      %528 = vmatpush1.bf16.msra.mxu0 %v508
      %529 = vmatprep.subr.bf16.mxu0 0
      %530 = vmatpush1.bf16.msra.mxu0 %v509
      %531 = vmatprep.subr.bf16.mxu0 0
      %532 = vmatpush1.bf16.msra.mxu0 %v510
      %533 = vmatprep.subr.bf16.mxu0 0
      %534 = vmatpush1.bf16.msra.mxu0 %v511
      %535 = vmatprep.subr.bf16.mxu0 0
      %536 = vmatpush1.bf16.msra.mxu0 %v512
      %537 = vmatprep.subr.bf16.mxu0 0
      %538 = vmatpush1.bf16.msra.mxu0 0
      %539 = vmatprep.subr.bf16.mxu0 0
      %540 = vmatpush1.bf16.msra.mxu0 0
      %541 = vmatprep.subr.bf16.mxu0 0
      %542 = vmatpush1.bf16.msra.mxu0 0
      %543 = vmatprep.subr.bf16.mxu0 0
      %544 = vmatpush1.bf16.msra.mxu0 0
      %545 = vmatprep.subr.bf16.mxu0 0
      %546 = vmatpush1.bf16.msra.mxu0 0
      %547 = vmatprep.subr.bf16.mxu0 0
      %548 = vmatpush1.bf16.msra.mxu0 0
      %549 = vmatprep.subr.bf16.mxu0 0
      %550 = vmatpush1.bf16.msra.mxu0 0
      %551 = vmatprep.subr.bf16.mxu0 0
      %552 = vmatpush1.bf16.msra.mxu0 0
      %553 = vmatprep.mubr.bf16.mxu0 0
      %554 = vmatmul.mubr.bf16.gmra.mrb[0].mxu0 %v409
      %v555 = vpop.f32.mrb[0].mxu0
      %v556 = vadd.f32 0.0, %v555
      %v557 = vpop.f32.mrb[0].mxu0
      %v558 = vpop.f32.mrb[0].mxu0
      %v559 = vadd.f32 0.0, %v558
      %v560 = vpop.f32.mrb[0].mxu0
      %561 = vmatprep.mubr.bf16.mxu0 0
      %562 = vmatmul.mubr.bf16.gmra.mrb[0].mxu0 %v410
      %v563 = vpop.f32.mrb[0].mxu0
      %v564 = vadd.f32 0.0, %v563
      %v565 = vpop.f32.mrb[0].mxu0
      %v566 = vpop.f32.mrb[0].mxu0
      %v567 = vadd.f32 0.0, %v566
      %v568 = vpop.f32.mrb[0].mxu0
      %569 = vmatprep.mubr.bf16.mxu0 0
      %570 = vmatmul.mubr.bf16.gmra.mrb[0].mxu0 %v411
      %v571 = vpop.f32.mrb[0].mxu0
      %v572 = vadd.f32 0.0, %v571
      %v573 = vpop.f32.mrb[0].mxu0
      %v574 = vpop.f32.mrb[0].mxu0
      %v575 = vadd.f32 0.0, %v574
      %v576 = vpop.f32.mrb[0].mxu0
      %577 = vmatprep.mubr.bf16.mxu0 0
      %578 = vmatmul.mubr.bf16.gmra.mrb[0].mxu0 %v412
      %v579 = vpop.f32.mrb[0].mxu0
      %v580 = vadd.f32 0.0, %v579
      %v581 = vpop.f32.mrb[0].mxu0
      %v582 = vpop.f32.mrb[0].mxu0
      %v583 = vadd.f32 0.0, %v582
      %v584 = vpop.f32.mrb[0].mxu0
      %585 = vmatprep.mubr.bf16.mxu0 0
      %586 = vmatmul.mubr.bf16.gmra.mrb[0].mxu0 %v413
      %v587 = vpop.f32.mrb[0].mxu0
      %v588 = vadd.f32 0.0, %v587
      %v589 = vpop.f32.mrb[0].mxu0
      %v590 = vpop.f32.mrb[0].mxu0
      %v591 = vadd.f32 0.0, %v590
      %v592 = vpop.f32.mrb[0].mxu0
      %593 = vmatprep.mubr.bf16.mxu0 0
      %594 = vmatmul.mubr.bf16.gmra.mrb[0].mxu0 %v414
      %v595 = vpop.f32.mrb[0].mxu0
      %v596 = vadd.f32 0.0, %v595
      %v597 = vpop.f32.mrb[0].mxu0
      %v598 = vpop.f32.mrb[0].mxu0
      %v599 = vadd.f32 0.0, %v598
      %v600 = vpop.f32.mrb[0].mxu0
      %601 = vmatprep.mubr.bf16.mxu0 0
      %602 = vmatmul.mubr.bf16.gmra.mrb[0].mxu0 %v415
      %v603 = vpop.f32.mrb[0].mxu0
      %v604 = vadd.f32 0.0, %v603
      %v605 = vpop.f32.mrb[0].mxu0
      %v606 = vpop.f32.mrb[0].mxu0
      %v607 = vadd.f32 0.0, %v606
      %v608 = vpop.f32.mrb[0].mxu0
      %609 = vmatprep.mubr.bf16.mxu0 0
      %610 = vmatmul.mubr.bf16.gmra.mrb[0].mxu0 %v416
      %v611 = vpop.f32.mrb[0].mxu0
      %v612 = vadd.f32 0.0, %v611
      %v613 = vpop.f32.mrb[0].mxu0
      %v614 = vpop.f32.mrb[0].mxu0
      %v615 = vadd.f32 0.0, %v614
      %v616 = vpop.f32.mrb[0].mxu0
      %617 = vmatprep.mubr.bf16.mxu0 0
      %618 = vmatmul.mubr.bf16.gmra.mrb[0].mxu0 %v417
      %v619 = vpop.f32.mrb[0].mxu0
      %v620 = vadd.f32 0.0, %v619
      %v621 = vpop.f32.mrb[0].mxu0
      %v622 = vpop.f32.mrb[0].mxu0
      %v623 = vadd.f32 0.0, %v622
      %v624 = vpop.f32.mrb[0].mxu0
      %625 = vmatprep.mubr.bf16.mxu0 0
      %626 = vmatmul.mubr.bf16.gmra.mrb[0].mxu0 %v418
      %v627 = vpop.f32.mrb[0].mxu0
      %v628 = vadd.f32 0.0, %v627
      %v629 = vpop.f32.mrb[0].mxu0
      %v630 = vpop.f32.mrb[0].mxu0
      %v631 = vadd.f32 0.0, %v630
      %v632 = vpop.f32.mrb[0].mxu0
      %633 = vmatprep.mubr.bf16.mxu0 0
      %634 = vmatmul.mubr.bf16.gmra.mrb[0].mxu0 %v419
      %v635 = vpop.f32.mrb[0].mxu0
      %v636 = vadd.f32 0.0, %v635
      %v637 = vpop.f32.mrb[0].mxu0
      %v638 = vpop.f32.mrb[0].mxu0
      %v639 = vadd.f32 0.0, %v638
      %v640 = vpop.f32.mrb[0].mxu0
      %641 = vmatprep.mubr.bf16.mxu0 0
      %642 = vmatmul.mubr.bf16.gmra.mrb[0].mxu0 %v420
      %v643 = vpop.f32.mrb[0].mxu0
      %v644 = vadd.f32 0.0, %v643
      %v645 = vpop.f32.mrb[0].mxu0
      %v646 = vpop.f32.mrb[0].mxu0
      %v647 = vadd.f32 0.0, %v646
      %v648 = vpop.f32.mrb[0].mxu0
      %649 = vmatprep.mubr.bf16.mxu0 0
      %650 = vmatmul.mubr.bf16.gmra.mrb[0].mxu0 %v421
      %v651 = vpop.f32.mrb[0].mxu0
      %v652 = vadd.f32 0.0, %v651
      %v653 = vpop.f32.mrb[0].mxu0
      %v654 = vpop.f32.mrb[0].mxu0
      %v655 = vadd.f32 0.0, %v654
      %v656 = vpop.f32.mrb[0].mxu0
      %657 = vmatprep.mubr.bf16.mxu0 0
      %658 = vmatmul.mubr.bf16.gmra.mrb[0].mxu0 %v422
      %v659 = vpop.f32.mrb[0].mxu0
      %v660 = vadd.f32 0.0, %v659
      %v661 = vpop.f32.mrb[0].mxu0
      %v662 = vpop.f32.mrb[0].mxu0
      %v663 = vadd.f32 0.0, %v662
      %v664 = vpop.f32.mrb[0].mxu0
      %665 = vmatprep.mubr.bf16.mxu0 0
      %666 = vmatmul.mubr.bf16.gmra.mrb[0].mxu0 %v423
      %v667 = vpop.f32.mrb[0].mxu0
      %v668 = vadd.f32 0.0, %v667
      %v669 = vpop.f32.mrb[0].mxu0
      %v670 = vpop.f32.mrb[0].mxu0
      %v671 = vadd.f32 0.0, %v670
      %v672 = vpop.f32.mrb[0].mxu0
      %673 = vmatprep.mubr.bf16.mxu0 0
      %674 = vmatmul.mubr.bf16.gmra.mrb[0].mxu0 %v424
      %v675 = vpop.f32.mrb[0].mxu0
      %v676 = vadd.f32 0.0, %v675
      %v677 = vpop.f32.mrb[0].mxu0
      %v678 = vpop.f32.mrb[0].mxu0
      %v679 = vadd.f32 0.0, %v678
      %v680 = vpop.f32.mrb[0].mxu0
      %681 = vmatprep.mubr.bf16.mxu0 0
      %682 = vmatmul.mubr.bf16.gmra.mrb[0].mxu0 %v425
      %v683 = vpop.f32.mrb[0].mxu0
      %v684 = vadd.f32 0.0, %v683
      %v685 = vpop.f32.mrb[0].mxu0
      %v686 = vpop.f32.mrb[0].mxu0
      %v687 = vadd.f32 0.0, %v686
      %v688 = vpop.f32.mrb[0].mxu0
      %689 = vmatprep.mubr.bf16.mxu0 0
      %690 = vmatmul.mubr.bf16.gmra.mrb[0].mxu0 %v426
      %v691 = vpop.f32.mrb[0].mxu0
      %v692 = vadd.f32 0.0, %v691
      %v693 = vpop.f32.mrb[0].mxu0
      %v694 = vpop.f32.mrb[0].mxu0
      %v695 = vadd.f32 0.0, %v694
      %v696 = vpop.f32.mrb[0].mxu0
      %697 = vmatprep.mubr.bf16.mxu0 0
      %698 = vmatmul.mubr.bf16.gmra.mrb[0].mxu0 %v427
      %v699 = vpop.f32.mrb[0].mxu0
      %v700 = vadd.f32 0.0, %v699
      %v701 = vpop.f32.mrb[0].mxu0
      %v702 = vpop.f32.mrb[0].mxu0
      %v703 = vadd.f32 0.0, %v702
      %v704 = vpop.f32.mrb[0].mxu0
      %705 = vmatprep.mubr.bf16.mxu0 0
      %706 = vmatmul.mubr.bf16.gmra.mrb[0].mxu0 %v428
      %v707 = vpop.f32.mrb[0].mxu0
      %v708 = vadd.f32 0.0, %v707
      %v709 = vpop.f32.mrb[0].mxu0
      %v710 = vpop.f32.mrb[0].mxu0
      %v711 = vadd.f32 0.0, %v710
      %v712 = vpop.f32.mrb[0].mxu0
      %713 = vmatprep.mubr.bf16.mxu0 0
      %714 = vmatmul.mubr.bf16.gmra.mrb[0].mxu0 %v429
      %v715 = vpop.f32.mrb[0].mxu0
      %v716 = vadd.f32 0.0, %v715
      %v717 = vpop.f32.mrb[0].mxu0
      %v718 = vpop.f32.mrb[0].mxu0
      %v719 = vadd.f32 0.0, %v718
      %v720 = vpop.f32.mrb[0].mxu0
      %721 = vmatprep.mubr.bf16.mxu0 0
      %722 = vmatmul.mubr.bf16.gmra.mrb[0].mxu0 %v430
      %v723 = vpop.f32.mrb[0].mxu0
      %v724 = vadd.f32 0.0, %v723
      %v725 = vpop.f32.mrb[0].mxu0
      %v726 = vpop.f32.mrb[0].mxu0
      %v727 = vadd.f32 0.0, %v726
      %v728 = vpop.f32.mrb[0].mxu0
      %729 = vmatprep.mubr.bf16.mxu0 0
      %730 = vmatmul.mubr.bf16.gmra.mrb[0].mxu0 %v431
      %v731 = vpop.f32.mrb[0].mxu0
      %v732 = vadd.f32 0.0, %v731
      %v733 = vpop.f32.mrb[0].mxu0
      %v734 = vpop.f32.mrb[0].mxu0
      %v735 = vadd.f32 0.0, %v734
      %v736 = vpop.f32.mrb[0].mxu0
      %737 = vmatprep.mubr.bf16.mxu0 0
      %738 = vmatmul.mubr.bf16.gmra.mrb[0].mxu0 %v432
      %v739 = vpop.f32.mrb[0].mxu0
      %v740 = vadd.f32 0.0, %v739
      %v741 = vpop.f32.mrb[0].mxu0
      %v742 = vpop.f32.mrb[0].mxu0
      %v743 = vadd.f32 0.0, %v742
      %v744 = vpop.f32.mrb[0].mxu0
      %745 = vmatprep.mubr.bf16.mxu0 0
      %746 = vmatmul.mubr.bf16.gmra.mrb[0].mxu0 %v433
      %v747 = vpop.f32.mrb[0].mxu0
      %v748 = vadd.f32 0.0, %v747
      %v749 = vpop.f32.mrb[0].mxu0
      %v750 = vpop.f32.mrb[0].mxu0
      %v751 = vadd.f32 0.0, %v750
      %v752 = vpop.f32.mrb[0].mxu0
      %753 = vmatprep.mubr.bf16.mxu0 0
      %754 = vmatmul.mubr.bf16.gmra.mrb[0].mxu0 %v434
      %v755 = vpop.f32.mrb[0].mxu0
      %v756 = vadd.f32 0.0, %v755
      %v757 = vpop.f32.mrb[0].mxu0
      %v758 = vpop.f32.mrb[0].mxu0
      %v759 = vadd.f32 0.0, %v758
      %v760 = vpop.f32.mrb[0].mxu0
      %761 = vmatprep.mubr.bf16.mxu0 0
      %762 = vmatmul.mubr.bf16.gmra.mrb[0].mxu0 %v435
      %v763 = vpop.f32.mrb[0].mxu0
      %v764 = vadd.f32 0.0, %v763
      %v765 = vpop.f32.mrb[0].mxu0
      %v766 = vpop.f32.mrb[0].mxu0
      %v767 = vadd.f32 0.0, %v766
      %v768 = vpop.f32.mrb[0].mxu0
      %769 = vmatprep.mubr.bf16.mxu0 0
      %770 = vmatmul.mubr.bf16.gmra.mrb[0].mxu0 %v436
      %v771 = vpop.f32.mrb[0].mxu0
      %v772 = vadd.f32 0.0, %v771
      %v773 = vpop.f32.mrb[0].mxu0
      %v774 = vpop.f32.mrb[0].mxu0
      %v775 = vadd.f32 0.0, %v774
      %v776 = vpop.f32.mrb[0].mxu0
      %777 = vmatprep.mubr.bf16.mxu0 0
      %778 = vmatmul.mubr.bf16.gmra.mrb[0].mxu0 %v437
      %v779 = vpop.f32.mrb[0].mxu0
      %v780 = vadd.f32 0.0, %v779
      %v781 = vpop.f32.mrb[0].mxu0
      %v782 = vpop.f32.mrb[0].mxu0
      %v783 = vadd.f32 0.0, %v782
      %v784 = vpop.f32.mrb[0].mxu0
      %785 = vmatprep.mubr.bf16.mxu0 0
      %786 = vmatmul.mubr.bf16.gmra.mrb[0].mxu0 %v438
      %v787 = vpop.f32.mrb[0].mxu0
      %v788 = vadd.f32 0.0, %v787
      %v789 = vpop.f32.mrb[0].mxu0
      %v790 = vpop.f32.mrb[0].mxu0
      %v791 = vadd.f32 0.0, %v790
      %v792 = vpop.f32.mrb[0].mxu0
      %793 = vmatprep.mubr.bf16.mxu0 0
      %794 = vmatmul.mubr.bf16.gmra.mrb[0].mxu0 %v439
      %v795 = vpop.f32.mrb[0].mxu0
      %v796 = vadd.f32 0.0, %v795
      %v797 = vpop.f32.mrb[0].mxu0
      %v798 = vpop.f32.mrb[0].mxu0
      %v799 = vadd.f32 0.0, %v798
      %v800 = vpop.f32.mrb[0].mxu0
      %801 = vmatprep.mubr.bf16.mxu0 0
      %802 = vmatmul.mubr.bf16.gmra.mrb[0].mxu0 %v440
      %v803 = vpop.f32.mrb[0].mxu0
      %v804 = vadd.f32 0.0, %v803
      %v805 = vpop.f32.mrb[0].mxu0
      %v806 = vpop.f32.mrb[0].mxu0
      %v807 = vadd.f32 0.0, %v806
      %v808 = vpop.f32.mrb[0].mxu0
      %809 = vdwg.mxu0
      %p810 = scmp.eq.s32.totalorder %s19, 0
      // Predicated region
      $region33: #{net_forward.3} parent=31 // pred_check
        %p811 = pneg %p810
      $region34: #{net_forward.3} parent=31 // pred_check_branch
        %813 = sbr.rel (%p811) target = $region36
      $region35: #{net_forward.3} parent=31 // pred_region
        %814 = vst [vmem:[#allocation2] sm:$0xff] %v556
        %815 = vst [vmem:[#allocation2 + $0x8] sm:$0xff] %v559
        %816 = vst [vmem:[#allocation2 + $0x10] sm:$0xff] %v564
        %817 = vst [vmem:[#allocation2 + $0x18] sm:$0xff] %v567
        %818 = vst [vmem:[#allocation2 + $0x20] sm:$0xff] %v572
        %819 = vst [vmem:[#allocation2 + $0x28] sm:$0xff] %v575
        %820 = vst [vmem:[#allocation2 + $0x30] sm:$0xff] %v580
        %821 = vst [vmem:[#allocation2 + $0x38] sm:$0xff] %v583
        %822 = vst [vmem:[#allocation2 + $0x40] sm:$0xff] %v588
        %823 = vst [vmem:[#allocation2 + $0x48] sm:$0xff] %v591
        %824 = vst [vmem:[#allocation2 + $0x50] sm:$0xff] %v596
        %825 = vst [vmem:[#allocation2 + $0x58] sm:$0xff] %v599
        %826 = vst [vmem:[#allocation2 + $0x60] sm:$0xff] %v604
        %827 = vst [vmem:[#allocation2 + $0x68] sm:$0xff] %v607
        %828 = vst [vmem:[#allocation2 + $0x70] sm:$0xff] %v612
        %829 = vst [vmem:[#allocation2 + $0x78] sm:$0xff] %v615
        %830 = vst [vmem:[#allocation2 + $0x80] sm:$0xff] %v620
        %831 = vst [vmem:[#allocation2 + $0x88] sm:$0xff] %v623
        %832 = vst [vmem:[#allocation2 + $0x90] sm:$0xff] %v628
        %833 = vst [vmem:[#allocation2 + $0x98] sm:$0xff] %v631
        %834 = vst [vmem:[#allocation2 + $0xa0] sm:$0xff] %v636
        %835 = vst [vmem:[#allocation2 + $0xa8] sm:$0xff] %v639
        %836 = vst [vmem:[#allocation2 + $0xb0] sm:$0xff] %v644
        %837 = vst [vmem:[#allocation2 + $0xb8] sm:$0xff] %v647
        %838 = vst [vmem:[#allocation2 + $0xc0] sm:$0xff] %v652
        %839 = vst [vmem:[#allocation2 + $0xc8] sm:$0xff] %v655
        %840 = vst [vmem:[#allocation2 + $0xd0] sm:$0xff] %v660
        %841 = vst [vmem:[#allocation2 + $0xd8] sm:$0xff] %v663
        %842 = vst [vmem:[#allocation2 + $0xe0] sm:$0xff] %v668
        %843 = vst [vmem:[#allocation2 + $0xe8] sm:$0xff] %v671
        %844 = vst [vmem:[#allocation2 + $0xf0] sm:$0xff] %v676
        %845 = vst [vmem:[#allocation2 + $0xf8] sm:$0xff] %v679
        %846 = vst [vmem:[#allocation2 + $0x100] sm:$0xff] %v684
        %847 = vst [vmem:[#allocation2 + $0x108] sm:$0xff] %v687
        %848 = vst [vmem:[#allocation2 + $0x110] sm:$0xff] %v692
        %849 = vst [vmem:[#allocation2 + $0x118] sm:$0xff] %v695
        %850 = vst [vmem:[#allocation2 + $0x120] sm:$0xff] %v700
        %851 = vst [vmem:[#allocation2 + $0x128] sm:$0xff] %v703
        %852 = vst [vmem:[#allocation2 + $0x130] sm:$0xff] %v708
        %853 = vst [vmem:[#allocation2 + $0x138] sm:$0xff] %v711
        %854 = vst [vmem:[#allocation2 + $0x140] sm:$0xff] %v716
        %855 = vst [vmem:[#allocation2 + $0x148] sm:$0xff] %v719
        %856 = vst [vmem:[#allocation2 + $0x150] sm:$0xff] %v724
        %857 = vst [vmem:[#allocation2 + $0x158] sm:$0xff] %v727
        %858 = vst [vmem:[#allocation2 + $0x160] sm:$0xff] %v732
        %859 = vst [vmem:[#allocation2 + $0x168] sm:$0xff] %v735
        %860 = vst [vmem:[#allocation2 + $0x170] sm:$0xff] %v740
        %861 = vst [vmem:[#allocation2 + $0x178] sm:$0xff] %v743
        %862 = vst [vmem:[#allocation2 + $0x180] sm:$0xff] %v748
        %863 = vst [vmem:[#allocation2 + $0x188] sm:$0xff] %v751
        %864 = vst [vmem:[#allocation2 + $0x190] sm:$0xff] %v756
        %865 = vst [vmem:[#allocation2 + $0x198] sm:$0xff] %v759
        %866 = vst [vmem:[#allocation2 + $0x1a0] sm:$0xff] %v764
        %867 = vst [vmem:[#allocation2 + $0x1a8] sm:$0xff] %v767
        %868 = vst [vmem:[#allocation2 + $0x1b0] sm:$0xff] %v772
        %869 = vst [vmem:[#allocation2 + $0x1b8] sm:$0xff] %v775
        %870 = vst [vmem:[#allocation2 + $0x1c0] sm:$0xff] %v780
        %871 = vst [vmem:[#allocation2 + $0x1c8] sm:$0xff] %v783
        %872 = vst [vmem:[#allocation2 + $0x1d0] sm:$0xff] %v788
        %873 = vst [vmem:[#allocation2 + $0x1d8] sm:$0xff] %v791
        %874 = vst [vmem:[#allocation2 + $0x1e0] sm:$0xff] %v796
        %875 = vst [vmem:[#allocation2 + $0x1e8] sm:$0xff] %v799
        %876 = vst [vmem:[#allocation2 + $0x1f0] sm:$0xff] %v804
        %877 = vst [vmem:[#allocation2 + $0x1f8] sm:$0xff] %v807
      $region36: #{net_forward.3} parent=31 // pred_fallthru
        _
      %p878 = scmp.gt.s32.totalorder %s19, 0
      // Predicated region
      $region37: #{net_forward.3} parent=31 // pred_check
        %p879 = pneg %p878
      $region38: #{net_forward.3} parent=31 // pred_check_branch
        %881 = sbr.rel (%p879) target = $region40
      $region39: #{net_forward.3} parent=31 // pred_region
        %v882 = vld [vmem:[#allocation2] sm:$0xff]
        %v883 = vld [vmem:[#allocation2 + $0x8] sm:$0xff]
        %v884 = vld [vmem:[#allocation2 + $0x10] sm:$0xff]
        %v885 = vld [vmem:[#allocation2 + $0x18] sm:$0xff]
        %v886 = vld [vmem:[#allocation2 + $0x20] sm:$0xff]
        %v887 = vld [vmem:[#allocation2 + $0x28] sm:$0xff]
        %v888 = vld [vmem:[#allocation2 + $0x30] sm:$0xff]
        %v889 = vld [vmem:[#allocation2 + $0x38] sm:$0xff]
        %v890 = vld [vmem:[#allocation2 + $0x40] sm:$0xff]
        %v891 = vld [vmem:[#allocation2 + $0x48] sm:$0xff]
        %v892 = vld [vmem:[#allocation2 + $0x50] sm:$0xff]
        %v893 = vld [vmem:[#allocation2 + $0x58] sm:$0xff]
        %v894 = vld [vmem:[#allocation2 + $0x60] sm:$0xff]
        %v895 = vld [vmem:[#allocation2 + $0x68] sm:$0xff]
        %v896 = vld [vmem:[#allocation2 + $0x70] sm:$0xff]
        %v897 = vld [vmem:[#allocation2 + $0x78] sm:$0xff]
        %v898 = vld [vmem:[#allocation2 + $0x80] sm:$0xff]
        %v899 = vld [vmem:[#allocation2 + $0x88] sm:$0xff]
        %v900 = vld [vmem:[#allocation2 + $0x90] sm:$0xff]
        %v901 = vld [vmem:[#allocation2 + $0x98] sm:$0xff]
        %v902 = vld [vmem:[#allocation2 + $0xa0] sm:$0xff]
        %v903 = vld [vmem:[#allocation2 + $0xa8] sm:$0xff]
        %v904 = vld [vmem:[#allocation2 + $0xb0] sm:$0xff]
        %v905 = vld [vmem:[#allocation2 + $0xb8] sm:$0xff]
        %v906 = vld [vmem:[#allocation2 + $0xc0] sm:$0xff]
        %v907 = vld [vmem:[#allocation2 + $0xc8] sm:$0xff]
        %v908 = vld [vmem:[#allocation2 + $0xd0] sm:$0xff]
        %v909 = vld [vmem:[#allocation2 + $0xd8] sm:$0xff]
        %v910 = vld [vmem:[#allocation2 + $0xe0] sm:$0xff]
        %v911 = vld [vmem:[#allocation2 + $0xe8] sm:$0xff]
        %v912 = vld [vmem:[#allocation2 + $0xf0] sm:$0xff]
        %v913 = vld [vmem:[#allocation2 + $0xf8] sm:$0xff]
        %v914 = vld [vmem:[#allocation2 + $0x100] sm:$0xff]
        %v915 = vld [vmem:[#allocation2 + $0x108] sm:$0xff]
        %v916 = vld [vmem:[#allocation2 + $0x110] sm:$0xff]
        %v917 = vld [vmem:[#allocation2 + $0x118] sm:$0xff]
        %v918 = vld [vmem:[#allocation2 + $0x120] sm:$0xff]
        %v919 = vld [vmem:[#allocation2 + $0x128] sm:$0xff]
        %v920 = vld [vmem:[#allocation2 + $0x130] sm:$0xff]
        %v921 = vld [vmem:[#allocation2 + $0x138] sm:$0xff]
        %v922 = vld [vmem:[#allocation2 + $0x140] sm:$0xff]
        %v923 = vld [vmem:[#allocation2 + $0x148] sm:$0xff]
        %v924 = vld [vmem:[#allocation2 + $0x150] sm:$0xff]
        %v925 = vld [vmem:[#allocation2 + $0x158] sm:$0xff]
        %v926 = vld [vmem:[#allocation2 + $0x160] sm:$0xff]
        %v927 = vld [vmem:[#allocation2 + $0x168] sm:$0xff]
        %v928 = vld [vmem:[#allocation2 + $0x170] sm:$0xff]
        %v929 = vld [vmem:[#allocation2 + $0x178] sm:$0xff]
        %v930 = vld [vmem:[#allocation2 + $0x180] sm:$0xff]
        %v931 = vld [vmem:[#allocation2 + $0x188] sm:$0xff]
        %v932 = vld [vmem:[#allocation2 + $0x190] sm:$0xff]
        %v933 = vld [vmem:[#allocation2 + $0x198] sm:$0xff]
        %v934 = vld [vmem:[#allocation2 + $0x1a0] sm:$0xff]
        %v935 = vld [vmem:[#allocation2 + $0x1a8] sm:$0xff]
        %v936 = vld [vmem:[#allocation2 + $0x1b0] sm:$0xff]
        %v937 = vld [vmem:[#allocation2 + $0x1b8] sm:$0xff]
        %v938 = vld [vmem:[#allocation2 + $0x1c0] sm:$0xff]
        %v939 = vld [vmem:[#allocation2 + $0x1c8] sm:$0xff]
        %v940 = vld [vmem:[#allocation2 + $0x1d0] sm:$0xff]
        %v941 = vld [vmem:[#allocation2 + $0x1d8] sm:$0xff]
        %v942 = vld [vmem:[#allocation2 + $0x1e0] sm:$0xff]
        %v943 = vld [vmem:[#allocation2 + $0x1e8] sm:$0xff]
        %v944 = vld [vmem:[#allocation2 + $0x1f0] sm:$0xff]
        %v945 = vld [vmem:[#allocation2 + $0x1f8] sm:$0xff]
        %v946 = vmax.f32 %v882, %v556
        %v947 = vmax.f32 %v883, %v559
        %v948 = vmax.f32 %v884, %v564
        %v949 = vmax.f32 %v885, %v567
        %v950 = vmax.f32 %v886, %v572
        %v951 = vmax.f32 %v887, %v575
        %v952 = vmax.f32 %v888, %v580
        %v953 = vmax.f32 %v889, %v583
        %v954 = vmax.f32 %v890, %v588
        %v955 = vmax.f32 %v891, %v591
        %v956 = vmax.f32 %v892, %v596
        %v957 = vmax.f32 %v893, %v599
        %v958 = vmax.f32 %v894, %v604
        %v959 = vmax.f32 %v895, %v607
        %v960 = vmax.f32 %v896, %v612
        %v961 = vmax.f32 %v897, %v615
        %v962 = vmax.f32 %v898, %v620
        %v963 = vmax.f32 %v899, %v623
        %v964 = vmax.f32 %v900, %v628
        %v965 = vmax.f32 %v901, %v631
        %v966 = vmax.f32 %v902, %v636
        %v967 = vmax.f32 %v903, %v639
        %v968 = vmax.f32 %v904, %v644
        %v969 = vmax.f32 %v905, %v647
        %v970 = vmax.f32 %v906, %v652
        %v971 = vmax.f32 %v907, %v655
        %v972 = vmax.f32 %v908, %v660
        %v973 = vmax.f32 %v909, %v663
        %v974 = vmax.f32 %v910, %v668
        %v975 = vmax.f32 %v911, %v671
        %v976 = vmax.f32 %v912, %v676
        %v977 = vmax.f32 %v913, %v679
        %v978 = vmax.f32 %v914, %v684
        %v979 = vmax.f32 %v915, %v687
        %v980 = vmax.f32 %v916, %v692
        %v981 = vmax.f32 %v917, %v695
        %v982 = vmax.f32 %v918, %v700
        %v983 = vmax.f32 %v919, %v703
        %v984 = vmax.f32 %v920, %v708
        %v985 = vmax.f32 %v921, %v711
        %v986 = vmax.f32 %v922, %v716
        %v987 = vmax.f32 %v923, %v719
        %v988 = vmax.f32 %v924, %v724
        %v989 = vmax.f32 %v925, %v727
        %v990 = vmax.f32 %v926, %v732
        %v991 = vmax.f32 %v927, %v735
        %v992 = vmax.f32 %v928, %v740
        %v993 = vmax.f32 %v929, %v743
        %v994 = vmax.f32 %v930, %v748
        %v995 = vmax.f32 %v931, %v751
        %v996 = vmax.f32 %v932, %v756
        %v997 = vmax.f32 %v933, %v759
        %v998 = vmax.f32 %v934, %v764
        %v999 = vmax.f32 %v935, %v767
        %v1000 = vmax.f32 %v936, %v772
        %v1001 = vmax.f32 %v937, %v775
        %v1002 = vmax.f32 %v938, %v780
        %v1003 = vmax.f32 %v939, %v783
        %v1004 = vmax.f32 %v940, %v788
        %v1005 = vmax.f32 %v941, %v791
        %v1006 = vmax.f32 %v942, %v796
        %v1007 = vmax.f32 %v943, %v799
        %v1008 = vmax.f32 %v944, %v804
        %v1009 = vmax.f32 %v945, %v807
        %1010 = vst [vmem:[#allocation2] sm:$0xff] %v946
        %1011 = vst [vmem:[#allocation2 + $0x8] sm:$0xff] %v947
        %1012 = vst [vmem:[#allocation2 + $0x10] sm:$0xff] %v948
        %1013 = vst [vmem:[#allocation2 + $0x18] sm:$0xff] %v949
        %1014 = vst [vmem:[#allocation2 + $0x20] sm:$0xff] %v950
        %1015 = vst [vmem:[#allocation2 + $0x28] sm:$0xff] %v951
        %1016 = vst [vmem:[#allocation2 + $0x30] sm:$0xff] %v952
        %1017 = vst [vmem:[#allocation2 + $0x38] sm:$0xff] %v953
        %1018 = vst [vmem:[#allocation2 + $0x40] sm:$0xff] %v954
        %1019 = vst [vmem:[#allocation2 + $0x48] sm:$0xff] %v955
        %1020 = vst [vmem:[#allocation2 + $0x50] sm:$0xff] %v956
        %1021 = vst [vmem:[#allocation2 + $0x58] sm:$0xff] %v957
        %1022 = vst [vmem:[#allocation2 + $0x60] sm:$0xff] %v958
        %1023 = vst [vmem:[#allocation2 + $0x68] sm:$0xff] %v959
        %1024 = vst [vmem:[#allocation2 + $0x70] sm:$0xff] %v960
        %1025 = vst [vmem:[#allocation2 + $0x78] sm:$0xff] %v961
        %1026 = vst [vmem:[#allocation2 + $0x80] sm:$0xff] %v962
        %1027 = vst [vmem:[#allocation2 + $0x88] sm:$0xff] %v963
        %1028 = vst [vmem:[#allocation2 + $0x90] sm:$0xff] %v964
        %1029 = vst [vmem:[#allocation2 + $0x98] sm:$0xff] %v965
        %1030 = vst [vmem:[#allocation2 + $0xa0] sm:$0xff] %v966
        %1031 = vst [vmem:[#allocation2 + $0xa8] sm:$0xff] %v967
        %1032 = vst [vmem:[#allocation2 + $0xb0] sm:$0xff] %v968
        %1033 = vst [vmem:[#allocation2 + $0xb8] sm:$0xff] %v969
        %1034 = vst [vmem:[#allocation2 + $0xc0] sm:$0xff] %v970
        %1035 = vst [vmem:[#allocation2 + $0xc8] sm:$0xff] %v971
        %1036 = vst [vmem:[#allocation2 + $0xd0] sm:$0xff] %v972
        %1037 = vst [vmem:[#allocation2 + $0xd8] sm:$0xff] %v973
        %1038 = vst [vmem:[#allocation2 + $0xe0] sm:$0xff] %v974
        %1039 = vst [vmem:[#allocation2 + $0xe8] sm:$0xff] %v975
        %1040 = vst [vmem:[#allocation2 + $0xf0] sm:$0xff] %v976
        %1041 = vst [vmem:[#allocation2 + $0xf8] sm:$0xff] %v977
        %1042 = vst [vmem:[#allocation2 + $0x100] sm:$0xff] %v978
        %1043 = vst [vmem:[#allocation2 + $0x108] sm:$0xff] %v979
        %1044 = vst [vmem:[#allocation2 + $0x110] sm:$0xff] %v980
        %1045 = vst [vmem:[#allocation2 + $0x118] sm:$0xff] %v981
        %1046 = vst [vmem:[#allocation2 + $0x120] sm:$0xff] %v982
        %1047 = vst [vmem:[#allocation2 + $0x128] sm:$0xff] %v983
        %1048 = vst [vmem:[#allocation2 + $0x130] sm:$0xff] %v984
        %1049 = vst [vmem:[#allocation2 + $0x138] sm:$0xff] %v985
        %1050 = vst [vmem:[#allocation2 + $0x140] sm:$0xff] %v986
        %1051 = vst [vmem:[#allocation2 + $0x148] sm:$0xff] %v987
        %1052 = vst [vmem:[#allocation2 + $0x150] sm:$0xff] %v988
        %1053 = vst [vmem:[#allocation2 + $0x158] sm:$0xff] %v989
        %1054 = vst [vmem:[#allocation2 + $0x160] sm:$0xff] %v990
        %1055 = vst [vmem:[#allocation2 + $0x168] sm:$0xff] %v991
        %1056 = vst [vmem:[#allocation2 + $0x170] sm:$0xff] %v992
        %1057 = vst [vmem:[#allocation2 + $0x178] sm:$0xff] %v993
        %1058 = vst [vmem:[#allocation2 + $0x180] sm:$0xff] %v994
        %1059 = vst [vmem:[#allocation2 + $0x188] sm:$0xff] %v995
        %1060 = vst [vmem:[#allocation2 + $0x190] sm:$0xff] %v996
        %1061 = vst [vmem:[#allocation2 + $0x198] sm:$0xff] %v997
        %1062 = vst [vmem:[#allocation2 + $0x1a0] sm:$0xff] %v998
        %1063 = vst [vmem:[#allocation2 + $0x1a8] sm:$0xff] %v999
        %1064 = vst [vmem:[#allocation2 + $0x1b0] sm:$0xff] %v1000
        %1065 = vst [vmem:[#allocation2 + $0x1b8] sm:$0xff] %v1001
        %1066 = vst [vmem:[#allocation2 + $0x1c0] sm:$0xff] %v1002
        %1067 = vst [vmem:[#allocation2 + $0x1c8] sm:$0xff] %v1003
        %1068 = vst [vmem:[#allocation2 + $0x1d0] sm:$0xff] %v1004
        %1069 = vst [vmem:[#allocation2 + $0x1d8] sm:$0xff] %v1005
        %1070 = vst [vmem:[#allocation2 + $0x1e0] sm:$0xff] %v1006
        %1071 = vst [vmem:[#allocation2 + $0x1e8] sm:$0xff] %v1007
        %1072 = vst [vmem:[#allocation2 + $0x1f0] sm:$0xff] %v1008
        %1073 = vst [vmem:[#allocation2 + $0x1f8] sm:$0xff] %v1009
      $region40: #{net_forward.3} parent=31 // pred_fallthru
        _
      %p1074 = scmp.eq.s32.totalorder %s19, 3
      // Predicated region
      $region41: #{net_forward.3} parent=31 // pred_check
        %p1075 = pneg %p1074
      $region42: #{net_forward.3} parent=31 // pred_check_branch
        %1077 = sbr.rel (%p1075) target = $region44
      $region43: #{net_forward.3} parent=31 // pred_region
        %v1078 = vld [vmem:[#allocation2] sm:$0xff]
        %v1079 = vld [vmem:[#allocation2 + $0x8] sm:$0xff]
        %v1080 = vld [vmem:[#allocation2 + $0x10] sm:$0xff]
        %v1081 = vld [vmem:[#allocation2 + $0x18] sm:$0xff]
        %v1082 = vld [vmem:[#allocation2 + $0x20] sm:$0xff]
        %v1083 = vld [vmem:[#allocation2 + $0x28] sm:$0xff]
        %v1084 = vld [vmem:[#allocation2 + $0x30] sm:$0xff]
        %v1085 = vld [vmem:[#allocation2 + $0x38] sm:$0xff]
        %v1086 = vld [vmem:[#allocation2 + $0x40] sm:$0xff]
        %v1087 = vld [vmem:[#allocation2 + $0x48] sm:$0xff]
        %v1088 = vld [vmem:[#allocation2 + $0x50] sm:$0xff]
        %v1089 = vld [vmem:[#allocation2 + $0x58] sm:$0xff]
        %v1090 = vld [vmem:[#allocation2 + $0x60] sm:$0xff]
        %v1091 = vld [vmem:[#allocation2 + $0x68] sm:$0xff]
        %v1092 = vld [vmem:[#allocation2 + $0x70] sm:$0xff]
        %v1093 = vld [vmem:[#allocation2 + $0x78] sm:$0xff]
        %v1094 = vld [vmem:[#allocation2 + $0x80] sm:$0xff]
        %v1095 = vld [vmem:[#allocation2 + $0x88] sm:$0xff]
        %v1096 = vld [vmem:[#allocation2 + $0x90] sm:$0xff]
        %v1097 = vld [vmem:[#allocation2 + $0x98] sm:$0xff]
        %v1098 = vld [vmem:[#allocation2 + $0xa0] sm:$0xff]
        %v1099 = vld [vmem:[#allocation2 + $0xa8] sm:$0xff]
        %v1100 = vld [vmem:[#allocation2 + $0xb0] sm:$0xff]
        %v1101 = vld [vmem:[#allocation2 + $0xb8] sm:$0xff]
        %v1102 = vld [vmem:[#allocation2 + $0xc0] sm:$0xff]
        %v1103 = vld [vmem:[#allocation2 + $0xc8] sm:$0xff]
        %v1104 = vld [vmem:[#allocation2 + $0xd0] sm:$0xff]
        %v1105 = vld [vmem:[#allocation2 + $0xd8] sm:$0xff]
        %v1106 = vld [vmem:[#allocation2 + $0xe0] sm:$0xff]
        %v1107 = vld [vmem:[#allocation2 + $0xe8] sm:$0xff]
        %v1108 = vld [vmem:[#allocation2 + $0xf0] sm:$0xff]
        %v1109 = vld [vmem:[#allocation2 + $0xf8] sm:$0xff]
        %v1110 = vld [vmem:[#allocation2 + $0x100] sm:$0xff]
        %v1111 = vld [vmem:[#allocation2 + $0x108] sm:$0xff]
        %v1112 = vld [vmem:[#allocation2 + $0x110] sm:$0xff]
        %v1113 = vld [vmem:[#allocation2 + $0x118] sm:$0xff]
        %v1114 = vld [vmem:[#allocation2 + $0x120] sm:$0xff]
        %v1115 = vld [vmem:[#allocation2 + $0x128] sm:$0xff]
        %v1116 = vld [vmem:[#allocation2 + $0x130] sm:$0xff]
        %v1117 = vld [vmem:[#allocation2 + $0x138] sm:$0xff]
        %v1118 = vld [vmem:[#allocation2 + $0x140] sm:$0xff]
        %v1119 = vld [vmem:[#allocation2 + $0x148] sm:$0xff]
        %v1120 = vld [vmem:[#allocation2 + $0x150] sm:$0xff]
        %v1121 = vld [vmem:[#allocation2 + $0x158] sm:$0xff]
        %v1122 = vld [vmem:[#allocation2 + $0x160] sm:$0xff]
        %v1123 = vld [vmem:[#allocation2 + $0x168] sm:$0xff]
        %v1124 = vld [vmem:[#allocation2 + $0x170] sm:$0xff]
        %v1125 = vld [vmem:[#allocation2 + $0x178] sm:$0xff]
        %v1126 = vld [vmem:[#allocation2 + $0x180] sm:$0xff]
        %v1127 = vld [vmem:[#allocation2 + $0x188] sm:$0xff]
        %v1128 = vld [vmem:[#allocation2 + $0x190] sm:$0xff]
        %v1129 = vld [vmem:[#allocation2 + $0x198] sm:$0xff]
        %v1130 = vld [vmem:[#allocation2 + $0x1a0] sm:$0xff]
        %v1131 = vld [vmem:[#allocation2 + $0x1a8] sm:$0xff]
        %v1132 = vld [vmem:[#allocation2 + $0x1b0] sm:$0xff]
        %v1133 = vld [vmem:[#allocation2 + $0x1b8] sm:$0xff]
        %v1134 = vld [vmem:[#allocation2 + $0x1c0] sm:$0xff]
        %v1135 = vld [vmem:[#allocation2 + $0x1c8] sm:$0xff]
        %v1136 = vld [vmem:[#allocation2 + $0x1d0] sm:$0xff]
        %v1137 = vld [vmem:[#allocation2 + $0x1d8] sm:$0xff]
        %v1138 = vld [vmem:[#allocation2 + $0x1e0] sm:$0xff]
        %v1139 = vld [vmem:[#allocation2 + $0x1e8] sm:$0xff]
        %v1140 = vld [vmem:[#allocation2 + $0x1f0] sm:$0xff]
        %v1141 = vld [vmem:[#allocation2 + $0x1f8] sm:$0xff]
        %v1142 = vld [vmem:[%s2] sm:$0x1]
        %v1144 = vlaneseq
        %v1145 = vshrl.u32 %v1144, 7
        %v1146 = vsub.s32 0, %v1145
        %v1147 = vrot.slane %v1142, %v1146
        %v1149 = vadd.f32 %v1078, %v1147
        %v1150 = vadd.f32 %v1079, %v1147
        %v1151 = vadd.f32 %v1080, %v1147
        %v1152 = vadd.f32 %v1081, %v1147
        %v1153 = vadd.f32 %v1082, %v1147
        %v1154 = vadd.f32 %v1083, %v1147
        %v1155 = vadd.f32 %v1084, %v1147
        %v1156 = vadd.f32 %v1085, %v1147
        %v1157 = vadd.f32 %v1086, %v1147
        %v1158 = vadd.f32 %v1087, %v1147
        %v1159 = vadd.f32 %v1088, %v1147
        %v1160 = vadd.f32 %v1089, %v1147
        %v1161 = vadd.f32 %v1090, %v1147
        %v1162 = vadd.f32 %v1091, %v1147
        %v1163 = vadd.f32 %v1092, %v1147
        %v1164 = vadd.f32 %v1093, %v1147
        %v1165 = vadd.f32 %v1094, %v1147
        %v1166 = vadd.f32 %v1095, %v1147
        %v1167 = vadd.f32 %v1096, %v1147
        %v1168 = vadd.f32 %v1097, %v1147
        %v1169 = vadd.f32 %v1098, %v1147
        %v1170 = vadd.f32 %v1099, %v1147
        %v1171 = vadd.f32 %v1100, %v1147
        %v1172 = vadd.f32 %v1101, %v1147
        %v1173 = vadd.f32 %v1102, %v1147
        %v1174 = vadd.f32 %v1103, %v1147
        %v1175 = vadd.f32 %v1104, %v1147
        %v1176 = vadd.f32 %v1105, %v1147
        %v1177 = vadd.f32 %v1106, %v1147
        %v1178 = vadd.f32 %v1107, %v1147
        %v1179 = vadd.f32 %v1108, %v1147
        %v1180 = vadd.f32 %v1109, %v1147
        %v1181 = vadd.f32 %v1110, %v1147
        %v1182 = vadd.f32 %v1111, %v1147
        %v1183 = vadd.f32 %v1112, %v1147
        %v1184 = vadd.f32 %v1113, %v1147
        %v1185 = vadd.f32 %v1114, %v1147
        %v1186 = vadd.f32 %v1115, %v1147
        %v1187 = vadd.f32 %v1116, %v1147
        %v1188 = vadd.f32 %v1117, %v1147
        %v1189 = vadd.f32 %v1118, %v1147
        %v1190 = vadd.f32 %v1119, %v1147
        %v1191 = vadd.f32 %v1120, %v1147
        %v1192 = vadd.f32 %v1121, %v1147
        %v1193 = vadd.f32 %v1122, %v1147
        %v1194 = vadd.f32 %v1123, %v1147
        %v1195 = vadd.f32 %v1124, %v1147
        %v1196 = vadd.f32 %v1125, %v1147
        %v1197 = vadd.f32 %v1126, %v1147
        %v1198 = vadd.f32 %v1127, %v1147
        %v1199 = vadd.f32 %v1128, %v1147
        %v1200 = vadd.f32 %v1129, %v1147
        %v1201 = vadd.f32 %v1130, %v1147
        %v1202 = vadd.f32 %v1131, %v1147
        %v1203 = vadd.f32 %v1132, %v1147
        %v1204 = vadd.f32 %v1133, %v1147
        %v1205 = vadd.f32 %v1134, %v1147
        %v1206 = vadd.f32 %v1135, %v1147
        %v1207 = vadd.f32 %v1136, %v1147
        %v1208 = vadd.f32 %v1137, %v1147
        %v1209 = vadd.f32 %v1138, %v1147
        %v1210 = vadd.f32 %v1139, %v1147
        %v1211 = vadd.f32 %v1140, %v1147
        %v1212 = vadd.f32 %v1141, %v1147
        %v1213 = vmax.f32 %v1149, 0.0
        %v1214 = vmax.f32 %v1150, 0.0
        %v1215 = vmax.f32 %v1151, 0.0
        %v1216 = vmax.f32 %v1152, 0.0
        %v1217 = vmax.f32 %v1153, 0.0
        %v1218 = vmax.f32 %v1154, 0.0
        %v1219 = vmax.f32 %v1155, 0.0
        %v1220 = vmax.f32 %v1156, 0.0
        %v1221 = vmax.f32 %v1157, 0.0
        %v1222 = vmax.f32 %v1158, 0.0
        %v1223 = vmax.f32 %v1159, 0.0
        %v1224 = vmax.f32 %v1160, 0.0
        %v1225 = vmax.f32 %v1161, 0.0
        %v1226 = vmax.f32 %v1162, 0.0
        %v1227 = vmax.f32 %v1163, 0.0
        %v1228 = vmax.f32 %v1164, 0.0
        %v1229 = vmax.f32 %v1165, 0.0
        %v1230 = vmax.f32 %v1166, 0.0
        %v1231 = vmax.f32 %v1167, 0.0
        %v1232 = vmax.f32 %v1168, 0.0
        %v1233 = vmax.f32 %v1169, 0.0
        %v1234 = vmax.f32 %v1170, 0.0
        %v1235 = vmax.f32 %v1171, 0.0
        %v1236 = vmax.f32 %v1172, 0.0
        %v1237 = vmax.f32 %v1173, 0.0
        %v1238 = vmax.f32 %v1174, 0.0
        %v1239 = vmax.f32 %v1175, 0.0
        %v1240 = vmax.f32 %v1176, 0.0
        %v1241 = vmax.f32 %v1177, 0.0
        %v1242 = vmax.f32 %v1178, 0.0
        %v1243 = vmax.f32 %v1179, 0.0
        %v1244 = vmax.f32 %v1180, 0.0
        %v1245 = vmax.f32 %v1181, 0.0
        %v1246 = vmax.f32 %v1182, 0.0
        %v1247 = vmax.f32 %v1183, 0.0
        %v1248 = vmax.f32 %v1184, 0.0
        %v1249 = vmax.f32 %v1185, 0.0
        %v1250 = vmax.f32 %v1186, 0.0
        %v1251 = vmax.f32 %v1187, 0.0
        %v1252 = vmax.f32 %v1188, 0.0
        %v1253 = vmax.f32 %v1189, 0.0
        %v1254 = vmax.f32 %v1190, 0.0
        %v1255 = vmax.f32 %v1191, 0.0
        %v1256 = vmax.f32 %v1192, 0.0
        %v1257 = vmax.f32 %v1193, 0.0
        %v1258 = vmax.f32 %v1194, 0.0
        %v1259 = vmax.f32 %v1195, 0.0
        %v1260 = vmax.f32 %v1196, 0.0
        %v1261 = vmax.f32 %v1197, 0.0
        %v1262 = vmax.f32 %v1198, 0.0
        %v1263 = vmax.f32 %v1199, 0.0
        %v1264 = vmax.f32 %v1200, 0.0
        %v1265 = vmax.f32 %v1201, 0.0
        %v1266 = vmax.f32 %v1202, 0.0
        %v1267 = vmax.f32 %v1203, 0.0
        %v1268 = vmax.f32 %v1204, 0.0
        %v1269 = vmax.f32 %v1205, 0.0
        %v1270 = vmax.f32 %v1206, 0.0
        %v1271 = vmax.f32 %v1207, 0.0
        %v1272 = vmax.f32 %v1208, 0.0
        %v1273 = vmax.f32 %v1209, 0.0
        %v1274 = vmax.f32 %v1210, 0.0
        %v1275 = vmax.f32 %v1211, 0.0
        %v1276 = vmax.f32 %v1212, 0.0
        %v1277 = vpack.c.bf16 %v1214, %v1213
        %v1278 = vpack.c.bf16 %v1216, %v1215
        %v1279 = vpack.c.bf16 %v1218, %v1217
        %v1280 = vpack.c.bf16 %v1220, %v1219
        %v1281 = vpack.c.bf16 %v1222, %v1221
        %v1282 = vpack.c.bf16 %v1224, %v1223
        %v1283 = vpack.c.bf16 %v1226, %v1225
        %v1284 = vpack.c.bf16 %v1228, %v1227
        %v1285 = vpack.c.bf16 %v1230, %v1229
        %v1286 = vpack.c.bf16 %v1232, %v1231
        %v1287 = vpack.c.bf16 %v1234, %v1233
        %v1288 = vpack.c.bf16 %v1236, %v1235
        %v1289 = vpack.c.bf16 %v1238, %v1237
        %v1290 = vpack.c.bf16 %v1240, %v1239
        %v1291 = vpack.c.bf16 %v1242, %v1241
        %v1292 = vpack.c.bf16 %v1244, %v1243
        %v1293 = vpack.c.bf16 %v1246, %v1245
        %v1294 = vpack.c.bf16 %v1248, %v1247
        %v1295 = vpack.c.bf16 %v1250, %v1249
        %v1296 = vpack.c.bf16 %v1252, %v1251
        %v1297 = vpack.c.bf16 %v1254, %v1253
        %v1298 = vpack.c.bf16 %v1256, %v1255
        %v1299 = vpack.c.bf16 %v1258, %v1257
        %v1300 = vpack.c.bf16 %v1260, %v1259
        %v1301 = vpack.c.bf16 %v1262, %v1261
        %v1302 = vpack.c.bf16 %v1264, %v1263
        %v1303 = vpack.c.bf16 %v1266, %v1265
        %v1304 = vpack.c.bf16 %v1268, %v1267
        %v1305 = vpack.c.bf16 %v1270, %v1269
        %v1306 = vpack.c.bf16 %v1272, %v1271
        %v1307 = vpack.c.bf16 %v1274, %v1273
        %v1308 = vpack.c.bf16 %v1276, %v1275
        %v1341 = vunpack.c.l.b16 %v1277
        %v1342 = vunpack.c.h.b16 %v1277
        %v1343 = vunpack.c.l.b16 %v1278
        %v1344 = vunpack.c.h.b16 %v1278
        %v1345 = vunpack.c.l.b16 %v1279
        %v1346 = vunpack.c.h.b16 %v1279
        %v1347 = vunpack.c.l.b16 %v1280
        %v1348 = vunpack.c.h.b16 %v1280
        %v1349 = vunpack.c.l.b16 %v1281
        %v1350 = vunpack.c.h.b16 %v1281
        %v1351 = vunpack.c.l.b16 %v1282
        %v1352 = vunpack.c.h.b16 %v1282
        %v1353 = vunpack.c.l.b16 %v1283
        %v1354 = vunpack.c.h.b16 %v1283
        %v1355 = vunpack.c.l.b16 %v1284
        %v1356 = vunpack.c.h.b16 %v1284
        %v1357 = vunpack.c.l.b16 %v1285
        %v1358 = vunpack.c.h.b16 %v1285
        %v1359 = vunpack.c.l.b16 %v1286
        %v1360 = vunpack.c.h.b16 %v1286
        %v1361 = vunpack.c.l.b16 %v1287
        %v1362 = vunpack.c.h.b16 %v1287
        %v1363 = vunpack.c.l.b16 %v1288
        %v1364 = vunpack.c.h.b16 %v1288
        %v1365 = vunpack.c.l.b16 %v1289
        %v1366 = vunpack.c.h.b16 %v1289
        %v1367 = vunpack.c.l.b16 %v1290
        %v1368 = vunpack.c.h.b16 %v1290
        %v1369 = vunpack.c.l.b16 %v1291
        %v1370 = vunpack.c.h.b16 %v1291
        %v1371 = vunpack.c.l.b16 %v1292
        %v1372 = vunpack.c.h.b16 %v1292
        %v1373 = vunpack.c.l.b16 %v1293
        %v1374 = vunpack.c.h.b16 %v1293
        %v1375 = vunpack.c.l.b16 %v1294
        %v1376 = vunpack.c.h.b16 %v1294
        %v1377 = vunpack.c.l.b16 %v1295
        %v1378 = vunpack.c.h.b16 %v1295
        %v1379 = vunpack.c.l.b16 %v1296
        %v1380 = vunpack.c.h.b16 %v1296
        %v1381 = vunpack.c.l.b16 %v1297
        %v1382 = vunpack.c.h.b16 %v1297
        %v1383 = vunpack.c.l.b16 %v1298
        %v1384 = vunpack.c.h.b16 %v1298
        %v1385 = vunpack.c.l.b16 %v1299
        %v1386 = vunpack.c.h.b16 %v1299
        %v1387 = vunpack.c.l.b16 %v1300
        %v1388 = vunpack.c.h.b16 %v1300
        %v1389 = vunpack.c.l.b16 %v1301
        %v1390 = vunpack.c.h.b16 %v1301
        %v1391 = vunpack.c.l.b16 %v1302
        %v1392 = vunpack.c.h.b16 %v1302
        %v1393 = vunpack.c.l.b16 %v1303
        %v1394 = vunpack.c.h.b16 %v1303
        %v1395 = vunpack.c.l.b16 %v1304
        %v1396 = vunpack.c.h.b16 %v1304
        %v1397 = vunpack.c.l.b16 %v1305
        %v1398 = vunpack.c.h.b16 %v1305
        %v1399 = vunpack.c.l.b16 %v1306
        %v1400 = vunpack.c.h.b16 %v1306
        %v1401 = vunpack.c.l.b16 %v1307
        %v1402 = vunpack.c.h.b16 %v1307
        %v1403 = vunpack.c.l.b16 %v1308
        %v1404 = vunpack.c.h.b16 %v1308
        %v1405 = vpack.c.b16 %v1341, %v1341
        %v1406 = vpack.c.b16 %v1342, %v1342
        %v1407 = vpack.c.b16 %v1343, %v1343
        %v1408 = vpack.c.b16 %v1344, %v1344
        %v1409 = vpack.c.b16 %v1345, %v1345
        %v1410 = vpack.c.b16 %v1346, %v1346
        %v1411 = vpack.c.b16 %v1347, %v1347
        %v1412 = vpack.c.b16 %v1348, %v1348
        %v1413 = vpack.c.b16 %v1349, %v1349
        %v1414 = vpack.c.b16 %v1350, %v1350
        %v1415 = vpack.c.b16 %v1351, %v1351
        %v1416 = vpack.c.b16 %v1352, %v1352
        %v1417 = vpack.c.b16 %v1353, %v1353
        %v1418 = vpack.c.b16 %v1354, %v1354
        %v1419 = vpack.c.b16 %v1355, %v1355
        %v1420 = vpack.c.b16 %v1356, %v1356
        %v1421 = vpack.c.b16 %v1357, %v1357
        %v1422 = vpack.c.b16 %v1358, %v1358
        %v1423 = vpack.c.b16 %v1359, %v1359
        %v1424 = vpack.c.b16 %v1360, %v1360
        %v1425 = vpack.c.b16 %v1361, %v1361
        %v1426 = vpack.c.b16 %v1362, %v1362
        %v1427 = vpack.c.b16 %v1363, %v1363
        %v1428 = vpack.c.b16 %v1364, %v1364
        %v1429 = vpack.c.b16 %v1365, %v1365
        %v1430 = vpack.c.b16 %v1366, %v1366
        %v1431 = vpack.c.b16 %v1367, %v1367
        %v1432 = vpack.c.b16 %v1368, %v1368
        %v1433 = vpack.c.b16 %v1369, %v1369
        %v1434 = vpack.c.b16 %v1370, %v1370
        %v1435 = vpack.c.b16 %v1371, %v1371
        %v1436 = vpack.c.b16 %v1372, %v1372
        %v1437 = vpack.c.b16 %v1373, %v1373
        %v1438 = vpack.c.b16 %v1374, %v1374
        %v1439 = vpack.c.b16 %v1375, %v1375
        %v1440 = vpack.c.b16 %v1376, %v1376
        %v1441 = vpack.c.b16 %v1377, %v1377
        %v1442 = vpack.c.b16 %v1378, %v1378
        %v1443 = vpack.c.b16 %v1379, %v1379
        %v1444 = vpack.c.b16 %v1380, %v1380
        %v1445 = vpack.c.b16 %v1381, %v1381
        %v1446 = vpack.c.b16 %v1382, %v1382
        %v1447 = vpack.c.b16 %v1383, %v1383
        %v1448 = vpack.c.b16 %v1384, %v1384
        %v1449 = vpack.c.b16 %v1385, %v1385
        %v1450 = vpack.c.b16 %v1386, %v1386
        %v1451 = vpack.c.b16 %v1387, %v1387
        %v1452 = vpack.c.b16 %v1388, %v1388
        %v1453 = vpack.c.b16 %v1389, %v1389
        %v1454 = vpack.c.b16 %v1390, %v1390
        %v1455 = vpack.c.b16 %v1391, %v1391
        %v1456 = vpack.c.b16 %v1392, %v1392
        %v1457 = vpack.c.b16 %v1393, %v1393
        %v1458 = vpack.c.b16 %v1394, %v1394
        %v1459 = vpack.c.b16 %v1395, %v1395
        %v1460 = vpack.c.b16 %v1396, %v1396
        %v1461 = vpack.c.b16 %v1397, %v1397
        %v1462 = vpack.c.b16 %v1398, %v1398
        %v1463 = vpack.c.b16 %v1399, %v1399
        %v1464 = vpack.c.b16 %v1400, %v1400
        %v1465 = vpack.c.b16 %v1401, %v1401
        %v1466 = vpack.c.b16 %v1402, %v1402
        %v1467 = vpack.c.b16 %v1403, %v1403
        %v1468 = vpack.c.b16 %v1404, %v1404
        %1533 = vst [vmem:[%s198] sm:$0xf] %v1405
        %1534 = vst [vmem:[%s198 + $0x4] sm:$0xf] %v1406
        %1535 = vst [vmem:[%s198 + $0x8] sm:$0xf] %v1407
        %1536 = vst [vmem:[%s198 + $0xc] sm:$0xf] %v1408
        %1537 = vst [vmem:[%s198 + $0x10] sm:$0xf] %v1409
        %1538 = vst [vmem:[%s198 + $0x14] sm:$0xf] %v1410
        %1539 = vst [vmem:[%s198 + $0x18] sm:$0xf] %v1411
        %1540 = vst [vmem:[%s198 + $0x1c] sm:$0xf] %v1412
        %1541 = vst [vmem:[%s198 + $0x20] sm:$0xf] %v1413
        %1542 = vst [vmem:[%s198 + $0x24] sm:$0xf] %v1414
        %1543 = vst [vmem:[%s198 + $0x28] sm:$0xf] %v1415
        %1544 = vst [vmem:[%s198 + $0x2c] sm:$0xf] %v1416
        %1545 = vst [vmem:[%s198 + $0x30] sm:$0xf] %v1417
        %1546 = vst [vmem:[%s198 + $0x34] sm:$0xf] %v1418
        %1547 = vst [vmem:[%s198 + $0x38] sm:$0xf] %v1419
        %1548 = vst [vmem:[%s198 + $0x3c] sm:$0xf] %v1420
        %1549 = vst [vmem:[%s198 + $0x40] sm:$0xf] %v1421
        %1550 = vst [vmem:[%s198 + $0x44] sm:$0xf] %v1422
        %1551 = vst [vmem:[%s198 + $0x48] sm:$0xf] %v1423
        %1552 = vst [vmem:[%s198 + $0x4c] sm:$0xf] %v1424
        %1553 = vst [vmem:[%s198 + $0x50] sm:$0xf] %v1425
        %1554 = vst [vmem:[%s198 + $0x54] sm:$0xf] %v1426
        %1555 = vst [vmem:[%s198 + $0x58] sm:$0xf] %v1427
        %1556 = vst [vmem:[%s198 + $0x5c] sm:$0xf] %v1428
        %1557 = vst [vmem:[%s198 + $0x60] sm:$0xf] %v1429
        %1558 = vst [vmem:[%s198 + $0x64] sm:$0xf] %v1430
        %1559 = vst [vmem:[%s198 + $0x68] sm:$0xf] %v1431
        %1560 = vst [vmem:[%s198 + $0x6c] sm:$0xf] %v1432
        %1561 = vst [vmem:[%s198 + $0x70] sm:$0xf] %v1433
        %1562 = vst [vmem:[%s198 + $0x74] sm:$0xf] %v1434
        %1563 = vst [vmem:[%s198 + $0x78] sm:$0xf] %v1435
        %1564 = vst [vmem:[%s198 + $0x7c] sm:$0xf] %v1436
        %1565 = vst [vmem:[%s198 + $0x80] sm:$0xf] %v1437
        %1566 = vst [vmem:[%s198 + $0x84] sm:$0xf] %v1438
        %1567 = vst [vmem:[%s198 + $0x88] sm:$0xf] %v1439
        %1568 = vst [vmem:[%s198 + $0x8c] sm:$0xf] %v1440
        %1569 = vst [vmem:[%s198 + $0x90] sm:$0xf] %v1441
        %1570 = vst [vmem:[%s198 + $0x94] sm:$0xf] %v1442
        %1571 = vst [vmem:[%s198 + $0x98] sm:$0xf] %v1443
        %1572 = vst [vmem:[%s198 + $0x9c] sm:$0xf] %v1444
        %1573 = vst [vmem:[%s198 + $0xa0] sm:$0xf] %v1445
        %1574 = vst [vmem:[%s198 + $0xa4] sm:$0xf] %v1446
        %1575 = vst [vmem:[%s198 + $0xa8] sm:$0xf] %v1447
        %1576 = vst [vmem:[%s198 + $0xac] sm:$0xf] %v1448
        %1577 = vst [vmem:[%s198 + $0xb0] sm:$0xf] %v1449
        %1578 = vst [vmem:[%s198 + $0xb4] sm:$0xf] %v1450
        %1579 = vst [vmem:[%s198 + $0xb8] sm:$0xf] %v1451
        %1580 = vst [vmem:[%s198 + $0xbc] sm:$0xf] %v1452
        %1581 = vst [vmem:[%s198 + $0xc0] sm:$0xf] %v1453
        %1582 = vst [vmem:[%s198 + $0xc4] sm:$0xf] %v1454
        %1583 = vst [vmem:[%s198 + $0xc8] sm:$0xf] %v1455
        %1584 = vst [vmem:[%s198 + $0xcc] sm:$0xf] %v1456
        %1585 = vst [vmem:[%s198 + $0xd0] sm:$0xf] %v1457
        %1586 = vst [vmem:[%s198 + $0xd4] sm:$0xf] %v1458
        %1587 = vst [vmem:[%s198 + $0xd8] sm:$0xf] %v1459
        %1588 = vst [vmem:[%s198 + $0xdc] sm:$0xf] %v1460
        %1589 = vst [vmem:[%s198 + $0xe0] sm:$0xf] %v1461
        %1590 = vst [vmem:[%s198 + $0xe4] sm:$0xf] %v1462
        %1591 = vst [vmem:[%s198 + $0xe8] sm:$0xf] %v1463
        %1592 = vst [vmem:[%s198 + $0xec] sm:$0xf] %v1464
        %1593 = vst [vmem:[%s198 + $0xf0] sm:$0xf] %v1465
        %1594 = vst [vmem:[%s198 + $0xf4] sm:$0xf] %v1466
        %1595 = vst [vmem:[%s198 + $0xf8] sm:$0xf] %v1467
        %1596 = vst [vmem:[%s198 + $0xfc] sm:$0xf] %v1468
      $region44: #{net_forward.3} parent=31 // pred_fallthru
        _
      %s1597 = smul.u32 64, %s18
      %p1598 = scmp.lt.s32.totalorder %s1597, 127
      %s1599 = scalar_select %p1598, %s1597, 127
      %s1600 = smul.addr %s1599, 4
      %s1601 = scalar_lea.vmem %s3, %s1600
      // Predicated region
      $region45: #{net_forward.3} parent=31 // pred_check
        %p1602 = pneg %p114
      $region46: #{net_forward.3} parent=31 // pred_check_branch
        %1604 = sbr.rel (%p1602) target = $region48
      $region47: #{net_forward.3} parent=31 // pred_region
        %s1605 = smul.u32 64, %s18
      $region48: #{net_forward.3} parent=31 // pred_fallthru
        _
    $region32: #{net_forward.3} parent=5 // pred_fallthru
      _
    %p1606 = scmp.le.s32.totalorder 2, %s9
    // Predicated region
    $region49: #{net_forward.3} parent=5 // pred_check
      %p1607 = pneg %p1606
    $region50: #{net_forward.3} parent=5 // pred_check_branch
      %1609 = sbr.rel (%p1607) target = $region52
    $region51: #{net_forward.3} parent=5 // pred_region
      %s1610 = ssub.s32 %s9, 2
      // Predicated region
      $region53: #{net_forward.3} parent=51 // pred_check
        %p1611 = pneg %p120
      $region54: #{net_forward.3} parent=51 // pred_check_branch
        %1613 = sbr.rel (%p1611) target = $region56
      $region55: #{net_forward.3} parent=51 // pred_region
        %s1614 = smul.u32 64, %s20
        %p1615 = scmp.lt.s32.totalorder %s1614, 127
        %s1616 = scalar_select %p1615, %s1614, 127
        %s1617 = smul.addr %s1616, 4
        %s1618 = scalar_lea.vmem %s3, %s1617
      $region56: #{net_forward.3} parent=51 // pred_fallthru
        _
    $region52: #{net_forward.3} parent=5 // pred_fallthru
      _
  $region6: #{net_forward.3} parent=0 // loop_footer
    %s13 = sadd.s32 1, %s9
  $region7: #{net_forward.3} parent=0 // loop_footer_branch
    %8 = sbr.rel target = $region3
  $region8: #{net_forward.3} parent=0 // loop_exit
    _

// kernel: net_forward.4
$region0: #{net_forward.4}
  #allocation0 [shape = 'u32[]', space=smem, size = 0x4, offset = 0x4, fixed_abs, tag = 'smem constant byte address 0x4 - core index']
  #allocation1 [shape = 'u32[144,128]{1,0:T(1,128)}', space=vmem, size = 0x12000, scoped, tag = 'internal scratch']
  #allocation2 [shape = 'f32[104,128]{1,0:T(8,128)}', space=vmem, size = 0xd000, scoped, tag = 'scratch operand']
  %s0 = inlined_call_operand.vmem [shape: bf16[4,104,256], index: 0, kind: input, shape index: {}]
  %s1 = inlined_call_operand.vmem [shape: bf16[256,128], index: 1, kind: input, shape index: {}]
  %s2 = inlined_call_operand.vmem [shape: f32[1,128], index: 2, kind: input, shape index: {}]
  %s3 = inlined_call_operand.vmem [shape: bf16[104,128], index: 3, kind: output, shape index: {}]
  %s4 = sld [smem:[#allocation0]]
  $region57: #{net_forward.4} parent=0
    _
  %s6 = ssub.s32 1, %s4
  %s7 = scalar_select 0, %s6, %s4
  loop: start=0, step=1, limit=6
  $region2: #{net_forward.4} parent=0 // loop_pre_header
    _
  $region3: #{net_forward.4} parent=0 // loop_header
    %s9 = sphi 0, %s13
    %p10 = scmp.ge.s32.totalorder %s9, 6
    %s16 = sphi 0, %s28
    %s17 = sphi 0, %s24
    %s18 = sphi 0, %s16
    %s19 = sphi 0, %s17
    %s20 = sphi 0, %s18
    %s21 = sphi 0, %s19
    %s33 = sphi 0, %s35
    %s36 = sphi 0, %s33
    %s37 = sphi 0, %s36
    %s53 = sphi 0, %s37
    %s57 = sphi 0, %s57
    %s59 = sphi 0, %s57
    %s60 = sphi 0, %s59
    %s74 = sphi 0, %s60
    %s78 = sphi 0, %s78
    %s80 = sphi 0, %s78
    %s81 = sphi 0, %s80
    %s95 = sphi 0, %s81
    %s101 = sphi 0, %s103
    %s104 = sphi 0, %s101
    %s105 = sphi 0, %s104
    %s121 = sphi 0, %s105
  $region4: #{net_forward.4} parent=0 // loop_header_branch
    %12 = sbr.rel (%p10) target = $region8
  $region5: #{net_forward.4} parent=0 // loop_body
    %s14 = ssub.s32 %s9, 1
    %s15 = ssub.s32 %s9, 2
    %s22 = sadd.s32 1, %s17
    %p23 = scmp.ge.s32.totalorder %s22, 4
    %s24 = scalar_select %p23, 0, %s22
    %s25 = sadd.s32 1, %s16
    %s26 = scalar_select %p23, %s25, %s16
    %p27 = scmp.ge.s32.totalorder %s26, 1
    %s28 = scalar_select %p27, 0, %s26
    %s29 = ssub.s32 %s17, %s24
    %s30 = ssub.s32 %s16, %s28
    %s31 = sor.u32 %s29, %s30
    %p32 = scmp.eq.s32.totalorder %s31, 0
    %s34 = sadd.s32 %s33, 1
    %s35 = scalar_select %p32, %s33, %s34
    %p38 = pneg %p32
    %p39 = scmp.eq.s32.totalorder %s9, 3
    %p40 = por %p38, %p39
    %p41 = scmp.ne.s32.totalorder %s33, %s36
    %p42 = scmp.eq.s32.totalorder %s9, 0
    %p43 = por %p41, %p42
    %p44 = scmp.ne.s32.totalorder %s33, %s36
    %p45 = scmp.eq.s32.totalorder %s14, 3
    %p46 = por %p44, %p45
    %p47 = scmp.ne.s32.totalorder %s36, %s37
    %p48 = scmp.eq.s32.totalorder %s14, 0
    %p49 = por %p47, %p48
    %p50 = scmp.ne.s32.totalorder %s36, %s37
    %p51 = scmp.eq.s32.totalorder %s15, 3
    %p52 = por %p50, %p51
    %p54 = scmp.ne.s32.totalorder %s37, %s53
    %p55 = scmp.eq.s32.totalorder %s15, 0
    %p56 = por %p54, %p55
    %s58 = sadd.s32 %s57, 1
    %p61 = scmp.eq.s32.totalorder %s9, 3
    %p62 = scmp.ne.s32.totalorder %s57, %s59
    %p63 = scmp.eq.s32.totalorder %s9, 0
    %p64 = por %p62, %p63
    %p65 = scmp.ne.s32.totalorder %s57, %s59
    %p66 = scmp.eq.s32.totalorder %s14, 3
    %p67 = por %p65, %p66
    %p68 = scmp.ne.s32.totalorder %s59, %s60
    %p69 = scmp.eq.s32.totalorder %s14, 0
    %p70 = por %p68, %p69
    %p71 = scmp.ne.s32.totalorder %s59, %s60
    %p72 = scmp.eq.s32.totalorder %s15, 3
    %p73 = por %p71, %p72
    %p75 = scmp.ne.s32.totalorder %s60, %s74
    %p76 = scmp.eq.s32.totalorder %s15, 0
    %p77 = por %p75, %p76
    %s79 = sadd.s32 %s78, 1
    %p82 = scmp.eq.s32.totalorder %s9, 3
    %p83 = scmp.ne.s32.totalorder %s78, %s80
    %p84 = scmp.eq.s32.totalorder %s9, 0
    %p85 = por %p83, %p84
    %p86 = scmp.ne.s32.totalorder %s78, %s80
    %p87 = scmp.eq.s32.totalorder %s14, 3
    %p88 = por %p86, %p87
    %p89 = scmp.ne.s32.totalorder %s80, %s81
    %p90 = scmp.eq.s32.totalorder %s14, 0
    %p91 = por %p89, %p90
    %p92 = scmp.ne.s32.totalorder %s80, %s81
    %p93 = scmp.eq.s32.totalorder %s15, 3
    %p94 = por %p92, %p93
    %p96 = scmp.ne.s32.totalorder %s81, %s95
    %p97 = scmp.eq.s32.totalorder %s15, 0
    %p98 = por %p96, %p97
    %s99 = ssub.s32 %s16, %s28
    %p100 = scmp.eq.s32.totalorder %s99, 0
    %s102 = sadd.s32 %s101, 1
    %s103 = scalar_select %p100, %s101, %s102
    %p106 = pneg %p100
    %p107 = scmp.eq.s32.totalorder %s9, 3
    %p108 = por %p106, %p107
    %p109 = scmp.ne.s32.totalorder %s101, %s104
    %p110 = scmp.eq.s32.totalorder %s9, 0
    %p111 = por %p109, %p110
    %p112 = scmp.ne.s32.totalorder %s101, %s104
    %p113 = scmp.eq.s32.totalorder %s14, 3
    %p114 = por %p112, %p113
    %p115 = scmp.ne.s32.totalorder %s104, %s105
    %p116 = scmp.eq.s32.totalorder %s14, 0
    %p117 = por %p115, %p116
    %p118 = scmp.ne.s32.totalorder %s104, %s105
    %p119 = scmp.eq.s32.totalorder %s15, 3
    %p120 = por %p118, %p119
    %p122 = scmp.ne.s32.totalorder %s105, %s121
    %p123 = scmp.eq.s32.totalorder %s15, 0
    %p124 = por %p122, %p123
    %p125 = scmp.le.s32.totalorder 1, %s9
    %p126 = scmp.lt.s32.totalorder %s9, 5
    %p127 = pnand %p125, %p126
    %p128 = pneg %p127
    // Predicated region
    $region9: #{net_forward.4} parent=5 // pred_check
      _
    $region10: #{net_forward.4} parent=5 // pred_check_branch
      %130 = sbr.rel (%p127) target = $region12
    $region11: #{net_forward.4} parent=5 // pred_region
      %s131 = ssub.s32 %s9, 1
      // Predicated region
      $region13: #{net_forward.4} parent=11 // pred_check
        %p132 = pneg %p70
      $region14: #{net_forward.4} parent=11 // pred_check_branch
        %134 = sbr.rel (%p132) target = $region16
      $region15: #{net_forward.4} parent=11 // pred_region
        _
      $region16: #{net_forward.4} parent=11 // pred_fallthru
        _
      // Predicated region
      $region17: #{net_forward.4} parent=11 // pred_check
        %p135 = pneg %p91
      $region18: #{net_forward.4} parent=11 // pred_check_branch
        %137 = sbr.rel (%p135) target = $region20
      $region19: #{net_forward.4} parent=11 // pred_region
        _
      $region20: #{net_forward.4} parent=11 // pred_fallthru
        _
    $region12: #{net_forward.4} parent=5 // pred_fallthru
      _
    %p138 = scmp.lt.s32.totalorder %s9, 4
    // Predicated region
    $region21: #{net_forward.4} parent=5 // pred_check
      %p139 = pneg %p138
    $region22: #{net_forward.4} parent=5 // pred_check_branch
      %141 = sbr.rel (%p139) target = $region24
    $region23: #{net_forward.4} parent=5 // pred_region
      // Predicated region
      $region25: #{net_forward.4} parent=23 // pred_check
        %p142 = pneg %p43
      $region26: #{net_forward.4} parent=23 // pred_check_branch
        %144 = sbr.rel (%p142) target = $region28
      $region27: #{net_forward.4} parent=23 // pred_region
        %s145 = smul.u32 13, %s16
        %p146 = scmp.lt.s32.totalorder %s17, 3
        %s147 = scalar_select %p146, %s17, 3
        %p148 = scmp.lt.s32.totalorder %s145, 12
        %s149 = scalar_select %p148, %s145, 12
        %s150 = smul.addr %s149, 2
        %s151 = smul.addr %s147, 26
        %s152 = sadd.s32 %s150, %s151
        %s153 = smul.addr %s152, 4
        %s154 = scalar_lea.vmem %s0, %s153
        %s155 = smul.u32 13, %s16
      $region28: #{net_forward.4} parent=23 // pred_fallthru
        _
    $region24: #{net_forward.4} parent=5 // pred_fallthru
      _
    %p156 = scmp.le.s32.totalorder 1, %s9
    %p157 = scmp.lt.s32.totalorder %s9, 5
    %p158 = pnand %p156, %p157
    %p159 = pneg %p158
    // Predicated region
    $region29: #{net_forward.4} parent=5 // pred_check
      _
    $region30: #{net_forward.4} parent=5 // pred_check_branch
      %161 = sbr.rel (%p158) target = $region32
    $region31: #{net_forward.4} parent=5 // pred_region
      %s162 = ssub.s32 %s9, 1
      %s163 = smul.u32 13, %s18
      %p164 = scmp.lt.s32.totalorder %s19, 3
      %s165 = scalar_select %p164, %s19, 3
      %p166 = scmp.lt.s32.totalorder %s163, 12
      %s167 = scalar_select %p166, %s163, 12
      %s168 = smul.addr %s167, 2
      %s169 = smul.addr %s165, 26
      %s170 = sadd.s32 %s168, %s169
      %s171 = smul.addr %s170, 4
      %s172 = scalar_lea.vmem %s0, %s171
      %p173 = pneg %p49
      %p174 = pneg %p46
      %p175 = pneg %p70
      %p176 = pneg %p67
      %p177 = pneg %p91
      %p178 = pneg %p88
      %p179 = pneg %p117
      %p180 = pneg %p114
      %s181 = smul.u32 13, %s18
      %p182 = scmp.lt.s32.totalorder %s181, 12
      %s183 = scalar_select %p182, %s181, 12
      %s184 = smul.addr %s183, 4
      %s185 = scalar_lea.vmem %s3, %s184
      %s186 = smul.u32 13, %s18
      %p187 = scmp.lt.s32.totalorder %s19, 3
      %s188 = scalar_select %p187, %s19, 3
      %p189 = scmp.lt.s32.totalorder %s186, 12
      %s190 = scalar_select %p189, %s186, 12
      %s191 = smul.addr %s190, 2
      %s192 = smul.addr %s188, 26
      %s193 = sadd.s32 %s191, %s192
      %s194 = smul.addr %s193, 4
      %s195 = scalar_lea.vmem %s0, %s194
      %s196 = smul.u32 13, %s18
      %s197 = smul.u32 13, %s18
      %p198 = scmp.lt.s32.totalorder %s197, 12
      %s199 = scalar_select %p198, %s197, 12
      %s200 = smul.addr %s199, 4
      %s201 = scalar_lea.vmem %s3, %s200
      %s202 = smul.u32 13, %s18
      %v204 = vld [vmem:[%s195] sm:$0xff]
      %v205 = vld [vmem:[%s195 + $0x8] sm:$0xff]
      %v206 = vld [vmem:[%s195 + $0x10] sm:$0xff]
      %v207 = vld [vmem:[%s195 + $0x18] sm:$0xff]
      %v208 = vld [vmem:[%s195 + $0x20] sm:$0xff]
      %v209 = vld [vmem:[%s195 + $0x28] sm:$0xff]
      %v210 = vld [vmem:[%s195 + $0x30] sm:$0xff]
      %v211 = vld [vmem:[%s195 + $0x38] sm:$0xff]
      %v212 = vld [vmem:[%s195 + $0x40] sm:$0xff]
      %v213 = vld [vmem:[%s195 + $0x48] sm:$0xff]
      %v214 = vld [vmem:[%s195 + $0x50] sm:$0xff]
      %v215 = vld [vmem:[%s195 + $0x58] sm:$0xff]
      %v216 = vld [vmem:[%s195 + $0x60] sm:$0xff]
      %v217 = vld [vmem:[%s1] sm:$0xf]
      %v218 = vld [vmem:[%s1 + $0x4] sm:$0xf]
      %v219 = vld [vmem:[%s1 + $0x8] sm:$0xf]
      %v220 = vld [vmem:[%s1 + $0xc] sm:$0xf]
      %v221 = vld [vmem:[%s1 + $0x10] sm:$0xf]
      %v222 = vld [vmem:[%s1 + $0x14] sm:$0xf]
      %v223 = vld [vmem:[%s1 + $0x18] sm:$0xf]
      %v224 = vld [vmem:[%s1 + $0x1c] sm:$0xf]
      %v225 = vld [vmem:[%s1 + $0x20] sm:$0xf]
      %v226 = vld [vmem:[%s1 + $0x24] sm:$0xf]
      %v227 = vld [vmem:[%s1 + $0x28] sm:$0xf]
      %v228 = vld [vmem:[%s1 + $0x2c] sm:$0xf]
      %v229 = vld [vmem:[%s1 + $0x30] sm:$0xf]
      %v230 = vld [vmem:[%s1 + $0x34] sm:$0xf]
      %v231 = vld [vmem:[%s1 + $0x38] sm:$0xf]
      %v232 = vld [vmem:[%s1 + $0x3c] sm:$0xf]
      %v233 = vld [vmem:[%s1 + $0x40] sm:$0xf]
      %v234 = vld [vmem:[%s1 + $0x44] sm:$0xf]
      %v235 = vld [vmem:[%s1 + $0x48] sm:$0xf]
      %v236 = vld [vmem:[%s1 + $0x4c] sm:$0xf]
      %v237 = vld [vmem:[%s1 + $0x50] sm:$0xf]
      %v238 = vld [vmem:[%s1 + $0x54] sm:$0xf]
      %v239 = vld [vmem:[%s1 + $0x58] sm:$0xf]
      %v240 = vld [vmem:[%s1 + $0x5c] sm:$0xf]
      %v241 = vld [vmem:[%s1 + $0x60] sm:$0xf]
      %v242 = vld [vmem:[%s1 + $0x64] sm:$0xf]
      %v243 = vld [vmem:[%s1 + $0x68] sm:$0xf]
      %v244 = vld [vmem:[%s1 + $0x6c] sm:$0xf]
      %v245 = vld [vmem:[%s1 + $0x70] sm:$0xf]
      %v246 = vld [vmem:[%s1 + $0x74] sm:$0xf]
      %v247 = vld [vmem:[%s1 + $0x78] sm:$0xf]
      %v248 = vld [vmem:[%s1 + $0x7c] sm:$0xf]
      %v262 = vunpack.c.l.b16 %v204
      %v263 = vunpack.c.h.b16 %v204
      %v264 = vunpack.c.l.b16 %v205
      %v265 = vunpack.c.h.b16 %v205
      %v266 = vunpack.c.l.b16 %v206
      %v267 = vunpack.c.h.b16 %v206
      %v268 = vunpack.c.l.b16 %v207
      %v269 = vunpack.c.h.b16 %v207
      %v270 = vunpack.c.l.b16 %v208
      %v271 = vunpack.c.h.b16 %v208
      %v272 = vunpack.c.l.b16 %v209
      %v273 = vunpack.c.h.b16 %v209
      %v274 = vunpack.c.l.b16 %v210
      %v275 = vunpack.c.h.b16 %v210
      %v276 = vunpack.c.l.b16 %v211
      %v277 = vunpack.c.h.b16 %v211
      %v278 = vunpack.c.l.b16 %v212
      %v279 = vunpack.c.h.b16 %v212
      %v280 = vunpack.c.l.b16 %v213
      %v281 = vunpack.c.h.b16 %v213
      %v282 = vunpack.c.l.b16 %v214
      %v283 = vunpack.c.h.b16 %v214
      %v284 = vunpack.c.l.b16 %v215
      %v285 = vunpack.c.h.b16 %v215
      %v286 = vunpack.c.l.b16 %v216
      %v287 = vunpack.c.h.b16 %v216
      %v288 = vpack.c.b16 %v264, %v262
      %v289 = vpack.c.b16 %v265, %v263
      %v290 = vpack.c.b16 %v268, %v266
      %v291 = vpack.c.b16 %v269, %v267
      %v292 = vpack.c.b16 %v272, %v270
      %v293 = vpack.c.b16 %v273, %v271
      %v294 = vpack.c.b16 %v276, %v274
      %v295 = vpack.c.b16 %v277, %v275
      %v296 = vpack.c.b16 %v280, %v278
      %v297 = vpack.c.b16 %v281, %v279
      %v298 = vpack.c.b16 %v284, %v282
      %v299 = vpack.c.b16 %v285, %v283
      %v300 = vpack.c.b16 %v286, %v286
      %v301 = vpack.c.b16 %v287, %v287
      %v348 = vunpack.c.l.b16 %v217
      %v349 = vunpack.c.l.b16 %v218
      %v350 = vunpack.c.l.b16 %v219
      %v351 = vunpack.c.l.b16 %v220
      %v352 = vunpack.c.l.b16 %v221
      %v353 = vunpack.c.l.b16 %v222
      %v354 = vunpack.c.l.b16 %v223
      %v355 = vunpack.c.l.b16 %v224
      %v356 = vunpack.c.l.b16 %v225
      %v357 = vunpack.c.l.b16 %v226
      %v358 = vunpack.c.l.b16 %v227
      %v359 = vunpack.c.l.b16 %v228
      %v360 = vunpack.c.l.b16 %v229
      %v361 = vunpack.c.l.b16 %v230
      %v362 = vunpack.c.l.b16 %v231
      %v363 = vunpack.c.l.b16 %v232
      %v364 = vunpack.c.l.b16 %v233
      %v365 = vunpack.c.l.b16 %v234
      %v366 = vunpack.c.l.b16 %v235
      %v367 = vunpack.c.l.b16 %v236
      %v368 = vunpack.c.l.b16 %v237
      %v369 = vunpack.c.l.b16 %v238
      %v370 = vunpack.c.l.b16 %v239
      %v371 = vunpack.c.l.b16 %v240
      %v372 = vunpack.c.l.b16 %v241
      %v373 = vunpack.c.l.b16 %v242
      %v374 = vunpack.c.l.b16 %v243
      %v375 = vunpack.c.l.b16 %v244
      %v376 = vunpack.c.l.b16 %v245
      %v377 = vunpack.c.l.b16 %v246
      %v378 = vunpack.c.l.b16 %v247
      %v379 = vunpack.c.l.b16 %v248
      %v380 = vpack.c.b16 %v349, %v348
      %v381 = vpack.c.b16 %v351, %v350
      %v382 = vpack.c.b16 %v353, %v352
      %v383 = vpack.c.b16 %v355, %v354
      %v384 = vpack.c.b16 %v357, %v356
      %v385 = vpack.c.b16 %v359, %v358
      %v386 = vpack.c.b16 %v361, %v360
      %v387 = vpack.c.b16 %v363, %v362
      %v388 = vpack.c.b16 %v365, %v364
      %v389 = vpack.c.b16 %v367, %v366
      %v390 = vpack.c.b16 %v369, %v368
      %v391 = vpack.c.b16 %v371, %v370
      %v392 = vpack.c.b16 %v373, %v372
      %v393 = vpack.c.b16 %v375, %v374
      %v394 = vpack.c.b16 %v377, %v376
      %v395 = vpack.c.b16 %v379, %v378
      %412 = vmatprep.subr.bf16.mxu0 0
      %413 = vmatpush1.bf16.msra.mxu0 %v380
      %414 = vmatprep.subr.bf16.mxu0 0
      %415 = vmatpush1.bf16.msra.mxu0 %v381
      %416 = vmatprep.subr.bf16.mxu0 0
      %417 = vmatpush1.bf16.msra.mxu0 %v382
      %418 = vmatprep.subr.bf16.mxu0 0
      %419 = vmatpush1.bf16.msra.mxu0 %v383
      %420 = vmatprep.subr.bf16.mxu0 0
      %421 = vmatpush1.bf16.msra.mxu0 %v384
      %422 = vmatprep.subr.bf16.mxu0 0
      %423 = vmatpush1.bf16.msra.mxu0 %v385
      %424 = vmatprep.subr.bf16.mxu0 0
      %425 = vmatpush1.bf16.msra.mxu0 %v386
      %426 = vmatprep.subr.bf16.mxu0 0
      %427 = vmatpush1.bf16.msra.mxu0 %v387
      %428 = vmatprep.subr.bf16.mxu0 0
      %429 = vmatpush1.bf16.msra.mxu0 %v388
      %430 = vmatprep.subr.bf16.mxu0 0
      %431 = vmatpush1.bf16.msra.mxu0 %v389
      %432 = vmatprep.subr.bf16.mxu0 0
      %433 = vmatpush1.bf16.msra.mxu0 %v390
      %434 = vmatprep.subr.bf16.mxu0 0
      %435 = vmatpush1.bf16.msra.mxu0 %v391
      %436 = vmatprep.subr.bf16.mxu0 0
      %437 = vmatpush1.bf16.msra.mxu0 %v392
      %438 = vmatprep.subr.bf16.mxu0 0
      %439 = vmatpush1.bf16.msra.mxu0 %v393
      %440 = vmatprep.subr.bf16.mxu0 0
      %441 = vmatpush1.bf16.msra.mxu0 %v394
      %442 = vmatprep.subr.bf16.mxu0 0
      %443 = vmatpush1.bf16.msra.mxu0 %v395
      %444 = vmatprep.mubr.bf16.mxu0 %v289
      %445 = vmatmul.mubr.bf16.gmra.mrb[0].mxu0 %v288
      %v446 = vpop.f32.mrb[0].mxu0
      %v447 = vadd.f32 0.0, %v446
      %v448 = vpop.f32.mrb[0].mxu0
      %v449 = vpop.f32.mrb[0].mxu0
      %v450 = vadd.f32 0.0, %v449
      %v451 = vpop.f32.mrb[0].mxu0
      %452 = vmatprep.mubr.bf16.mxu0 %v291
      %453 = vmatmul.mubr.bf16.gmra.mrb[0].mxu0 %v290
      %v454 = vpop.f32.mrb[0].mxu0
      %v455 = vadd.f32 0.0, %v454
      %v456 = vpop.f32.mrb[0].mxu0
      %v457 = vpop.f32.mrb[0].mxu0
      %v458 = vadd.f32 0.0, %v457
      %v459 = vpop.f32.mrb[0].mxu0
      %460 = vmatprep.mubr.bf16.mxu0 %v293
      %461 = vmatmul.mubr.bf16.gmra.mrb[0].mxu0 %v292
      %v462 = vpop.f32.mrb[0].mxu0
      %v463 = vadd.f32 0.0, %v462
      %v464 = vpop.f32.mrb[0].mxu0
      %v465 = vpop.f32.mrb[0].mxu0
      %v466 = vadd.f32 0.0, %v465
      %v467 = vpop.f32.mrb[0].mxu0
      %468 = vmatprep.mubr.bf16.mxu0 %v295
      %469 = vmatmul.mubr.bf16.gmra.mrb[0].mxu0 %v294
      %v470 = vpop.f32.mrb[0].mxu0
      %v471 = vadd.f32 0.0, %v470
      %v472 = vpop.f32.mrb[0].mxu0
      %v473 = vpop.f32.mrb[0].mxu0
      %v474 = vadd.f32 0.0, %v473
      %v475 = vpop.f32.mrb[0].mxu0
      %476 = vmatprep.mubr.bf16.mxu0 %v297
      %477 = vmatmul.mubr.bf16.gmra.mrb[0].mxu0 %v296
      %v478 = vpop.f32.mrb[0].mxu0
      %v479 = vadd.f32 0.0, %v478
      %v480 = vpop.f32.mrb[0].mxu0
      %v481 = vpop.f32.mrb[0].mxu0
      %v482 = vadd.f32 0.0, %v481
      %v483 = vpop.f32.mrb[0].mxu0
      %484 = vmatprep.mubr.bf16.mxu0 %v299
      %485 = vmatmul.mubr.bf16.gmra.mrb[0].mxu0 %v298
      %v486 = vpop.f32.mrb[0].mxu0
      %v487 = vadd.f32 0.0, %v486
      %v488 = vpop.f32.mrb[0].mxu0
      %v489 = vpop.f32.mrb[0].mxu0
      %v490 = vadd.f32 0.0, %v489
      %v491 = vpop.f32.mrb[0].mxu0
      %492 = vmatprep.mubr.bf16.mxu0 %v301
      %493 = vmatmul.mubr.bf16.gmra.mrb[0].mxu0 %v300
      %v494 = vpop.f32.mrb[0].mxu0
      %v495 = vadd.f32 0.0, %v494
      %v496 = vpop.f32.mrb[0].mxu0
      %v497 = vpop.f32.mrb[0].mxu0
      %v498 = vpop.f32.mrb[0].mxu0
      %499 = vdwg.mxu0
      %p500 = scmp.eq.s32.totalorder %s19, 0
      // Predicated region
      $region33: #{net_forward.4} parent=31 // pred_check
        %p501 = pneg %p500
      $region34: #{net_forward.4} parent=31 // pred_check_branch
        %503 = sbr.rel (%p501) target = $region36
      $region35: #{net_forward.4} parent=31 // pred_region
        %504 = vst [vmem:[#allocation2] sm:$0xff] %v447
        %505 = vst [vmem:[#allocation2 + $0x8] sm:$0xff] %v450
        %506 = vst [vmem:[#allocation2 + $0x10] sm:$0xff] %v455
        %507 = vst [vmem:[#allocation2 + $0x18] sm:$0xff] %v458
        %508 = vst [vmem:[#allocation2 + $0x20] sm:$0xff] %v463
        %509 = vst [vmem:[#allocation2 + $0x28] sm:$0xff] %v466
        %510 = vst [vmem:[#allocation2 + $0x30] sm:$0xff] %v471
        %511 = vst [vmem:[#allocation2 + $0x38] sm:$0xff] %v474
        %512 = vst [vmem:[#allocation2 + $0x40] sm:$0xff] %v479
        %513 = vst [vmem:[#allocation2 + $0x48] sm:$0xff] %v482
        %514 = vst [vmem:[#allocation2 + $0x50] sm:$0xff] %v487
        %515 = vst [vmem:[#allocation2 + $0x58] sm:$0xff] %v490
        %516 = vst [vmem:[#allocation2 + $0x60] sm:$0xff] %v495
      $region36: #{net_forward.4} parent=31 // pred_fallthru
        _
      %p517 = scmp.gt.s32.totalorder %s19, 0
      // Predicated region
      $region37: #{net_forward.4} parent=31 // pred_check
        %p518 = pneg %p517
      $region38: #{net_forward.4} parent=31 // pred_check_branch
        %520 = sbr.rel (%p518) target = $region40
      $region39: #{net_forward.4} parent=31 // pred_region
        %v521 = vld [vmem:[#allocation2] sm:$0xff]
        %v522 = vld [vmem:[#allocation2 + $0x8] sm:$0xff]
        %v523 = vld [vmem:[#allocation2 + $0x10] sm:$0xff]
        %v524 = vld [vmem:[#allocation2 + $0x18] sm:$0xff]
        %v525 = vld [vmem:[#allocation2 + $0x20] sm:$0xff]
        %v526 = vld [vmem:[#allocation2 + $0x28] sm:$0xff]
        %v527 = vld [vmem:[#allocation2 + $0x30] sm:$0xff]
        %v528 = vld [vmem:[#allocation2 + $0x38] sm:$0xff]
        %v529 = vld [vmem:[#allocation2 + $0x40] sm:$0xff]
        %v530 = vld [vmem:[#allocation2 + $0x48] sm:$0xff]
        %v531 = vld [vmem:[#allocation2 + $0x50] sm:$0xff]
        %v532 = vld [vmem:[#allocation2 + $0x58] sm:$0xff]
        %v533 = vld [vmem:[#allocation2 + $0x60] sm:$0xff]
        %v534 = vmax.f32 %v521, %v447
        %v535 = vmax.f32 %v522, %v450
        %v536 = vmax.f32 %v523, %v455
        %v537 = vmax.f32 %v524, %v458
        %v538 = vmax.f32 %v525, %v463
        %v539 = vmax.f32 %v526, %v466
        %v540 = vmax.f32 %v527, %v471
        %v541 = vmax.f32 %v528, %v474
        %v542 = vmax.f32 %v529, %v479
        %v543 = vmax.f32 %v530, %v482
        %v544 = vmax.f32 %v531, %v487
        %v545 = vmax.f32 %v532, %v490
        %v546 = vmax.f32 %v533, %v495
        %547 = vst [vmem:[#allocation2] sm:$0xff] %v534
        %548 = vst [vmem:[#allocation2 + $0x8] sm:$0xff] %v535
        %549 = vst [vmem:[#allocation2 + $0x10] sm:$0xff] %v536
        %550 = vst [vmem:[#allocation2 + $0x18] sm:$0xff] %v537
        %551 = vst [vmem:[#allocation2 + $0x20] sm:$0xff] %v538
        %552 = vst [vmem:[#allocation2 + $0x28] sm:$0xff] %v539
        %553 = vst [vmem:[#allocation2 + $0x30] sm:$0xff] %v540
        %554 = vst [vmem:[#allocation2 + $0x38] sm:$0xff] %v541
        %555 = vst [vmem:[#allocation2 + $0x40] sm:$0xff] %v542
        %556 = vst [vmem:[#allocation2 + $0x48] sm:$0xff] %v543
        %557 = vst [vmem:[#allocation2 + $0x50] sm:$0xff] %v544
        %558 = vst [vmem:[#allocation2 + $0x58] sm:$0xff] %v545
        %559 = vst [vmem:[#allocation2 + $0x60] sm:$0xff] %v546
      $region40: #{net_forward.4} parent=31 // pred_fallthru
        _
      %p560 = scmp.eq.s32.totalorder %s19, 3
      // Predicated region
      $region41: #{net_forward.4} parent=31 // pred_check
        %p561 = pneg %p560
      $region42: #{net_forward.4} parent=31 // pred_check_branch
        %563 = sbr.rel (%p561) target = $region44
      $region43: #{net_forward.4} parent=31 // pred_region
        %v564 = vld [vmem:[#allocation2] sm:$0xff]
        %v565 = vld [vmem:[#allocation2 + $0x8] sm:$0xff]
        %v566 = vld [vmem:[#allocation2 + $0x10] sm:$0xff]
        %v567 = vld [vmem:[#allocation2 + $0x18] sm:$0xff]
        %v568 = vld [vmem:[#allocation2 + $0x20] sm:$0xff]
        %v569 = vld [vmem:[#allocation2 + $0x28] sm:$0xff]
        %v570 = vld [vmem:[#allocation2 + $0x30] sm:$0xff]
        %v571 = vld [vmem:[#allocation2 + $0x38] sm:$0xff]
        %v572 = vld [vmem:[#allocation2 + $0x40] sm:$0xff]
        %v573 = vld [vmem:[#allocation2 + $0x48] sm:$0xff]
        %v574 = vld [vmem:[#allocation2 + $0x50] sm:$0xff]
        %v575 = vld [vmem:[#allocation2 + $0x58] sm:$0xff]
        %v576 = vld [vmem:[#allocation2 + $0x60] sm:$0xff]
        %v577 = vld [vmem:[%s2] sm:$0x1]
        %v579 = vlaneseq
        %v580 = vshrl.u32 %v579, 7
        %v581 = vsub.s32 0, %v580
        %v582 = vrot.slane %v577, %v581
        %v584 = vadd.f32 %v564, %v582
        %v585 = vadd.f32 %v565, %v582
        %v586 = vadd.f32 %v566, %v582
        %v587 = vadd.f32 %v567, %v582
        %v588 = vadd.f32 %v568, %v582
        %v589 = vadd.f32 %v569, %v582
        %v590 = vadd.f32 %v570, %v582
        %v591 = vadd.f32 %v571, %v582
        %v592 = vadd.f32 %v572, %v582
        %v593 = vadd.f32 %v573, %v582
        %v594 = vadd.f32 %v574, %v582
        %v595 = vadd.f32 %v575, %v582
        %v596 = vadd.f32 %v576, %v582
        %v597 = vmax.f32 %v584, 0.0
        %v598 = vmax.f32 %v585, 0.0
        %v599 = vmax.f32 %v586, 0.0
        %v600 = vmax.f32 %v587, 0.0
        %v601 = vmax.f32 %v588, 0.0
        %v602 = vmax.f32 %v589, 0.0
        %v603 = vmax.f32 %v590, 0.0
        %v604 = vmax.f32 %v591, 0.0
        %v605 = vmax.f32 %v592, 0.0
        %v606 = vmax.f32 %v593, 0.0
        %v607 = vmax.f32 %v594, 0.0
        %v608 = vmax.f32 %v595, 0.0
        %v609 = vmax.f32 %v596, 0.0
        %v610 = vpack.c.bf16 %v598, %v597
        %v611 = vpack.c.bf16 %v600, %v599
        %v612 = vpack.c.bf16 %v602, %v601
        %v613 = vpack.c.bf16 %v604, %v603
        %v614 = vpack.c.bf16 %v606, %v605
        %v615 = vpack.c.bf16 %v608, %v607
        %v616 = vpack.c.bf16 %v609, %v609
        %v624 = vunpack.c.l.b16 %v610
        %v625 = vunpack.c.h.b16 %v610
        %v626 = vunpack.c.l.b16 %v611
        %v627 = vunpack.c.h.b16 %v611
        %v628 = vunpack.c.l.b16 %v612
        %v629 = vunpack.c.h.b16 %v612
        %v630 = vunpack.c.l.b16 %v613
        %v631 = vunpack.c.h.b16 %v613
        %v632 = vunpack.c.l.b16 %v614
        %v633 = vunpack.c.h.b16 %v614
        %v634 = vunpack.c.l.b16 %v615
        %v635 = vunpack.c.h.b16 %v615
        %v636 = vunpack.c.l.b16 %v616
        %v637 = vpack.c.b16 %v624, %v624
        %v638 = vpack.c.b16 %v625, %v625
        %v639 = vpack.c.b16 %v626, %v626
        %v640 = vpack.c.b16 %v627, %v627
        %v641 = vpack.c.b16 %v628, %v628
        %v642 = vpack.c.b16 %v629, %v629
        %v643 = vpack.c.b16 %v630, %v630
        %v644 = vpack.c.b16 %v631, %v631
        %v645 = vpack.c.b16 %v632, %v632
        %v646 = vpack.c.b16 %v633, %v633
        %v647 = vpack.c.b16 %v634, %v634
        %v648 = vpack.c.b16 %v635, %v635
        %v649 = vpack.c.b16 %v636, %v636
        %663 = vst [vmem:[%s201] sm:$0xf] %v637
        %664 = vst [vmem:[%s201 + $0x4] sm:$0xf] %v638
        %665 = vst [vmem:[%s201 + $0x8] sm:$0xf] %v639
        %666 = vst [vmem:[%s201 + $0xc] sm:$0xf] %v640
        %667 = vst [vmem:[%s201 + $0x10] sm:$0xf] %v641
        %668 = vst [vmem:[%s201 + $0x14] sm:$0xf] %v642
        %669 = vst [vmem:[%s201 + $0x18] sm:$0xf] %v643
        %670 = vst [vmem:[%s201 + $0x1c] sm:$0xf] %v644
        %671 = vst [vmem:[%s201 + $0x20] sm:$0xf] %v645
        %672 = vst [vmem:[%s201 + $0x24] sm:$0xf] %v646
        %673 = vst [vmem:[%s201 + $0x28] sm:$0xf] %v647
        %674 = vst [vmem:[%s201 + $0x2c] sm:$0xf] %v648
        %675 = vst [vmem:[%s201 + $0x30] sm:$0xf] %v649
      $region44: #{net_forward.4} parent=31 // pred_fallthru
        _
      %s676 = smul.u32 13, %s18
      %p677 = scmp.lt.s32.totalorder %s676, 12
      %s678 = scalar_select %p677, %s676, 12
      %s679 = smul.addr %s678, 4
      %s680 = scalar_lea.vmem %s3, %s679
      // Predicated region
      $region45: #{net_forward.4} parent=31 // pred_check
        %p681 = pneg %p114
      $region46: #{net_forward.4} parent=31 // pred_check_branch
        %683 = sbr.rel (%p681) target = $region48
      $region47: #{net_forward.4} parent=31 // pred_region
        %s684 = smul.u32 13, %s18
      $region48: #{net_forward.4} parent=31 // pred_fallthru
        _
      // Predicated region
      $region49: #{net_forward.4} parent=31 // pred_check
        %p685 = pneg %p114
      $region50: #{net_forward.4} parent=31 // pred_check_branch
        %687 = sbr.rel (%p685) target = $region52
      $region51: #{net_forward.4} parent=31 // pred_region
        %s688 = smul.u32 13, %s18
        %p689 = scmp.lt.s32.totalorder %s688, 12
        %s690 = scalar_select %p689, %s688, 12
        %s691 = smul.addr %s690, 4
        %s692 = scalar_lea.vmem %s3, %s691
      $region52: #{net_forward.4} parent=31 // pred_fallthru
        _
    $region32: #{net_forward.4} parent=5 // pred_fallthru
      _
    %p693 = scmp.le.s32.totalorder 2, %s9
    // Predicated region
    $region53: #{net_forward.4} parent=5 // pred_check
      %p694 = pneg %p693
    $region54: #{net_forward.4} parent=5 // pred_check_branch
      %696 = sbr.rel (%p694) target = $region56
    $region55: #{net_forward.4} parent=5 // pred_region
      %s697 = ssub.s32 %s9, 2
    $region56: #{net_forward.4} parent=5 // pred_fallthru
      _
  $region6: #{net_forward.4} parent=0 // loop_footer
    %s13 = sadd.s32 1, %s9
  $region7: #{net_forward.4} parent=0 // loop_footer_branch
    %8 = sbr.rel target = $region3
  $region8: #{net_forward.4} parent=0 // loop_exit
    _

// kernel: net_forward.5
$region0: #{net_forward.5}
  #allocation0 [shape = 'u32[]', space=smem, size = 0x4, offset = 0x4, fixed_abs, tag = 'smem constant byte address 0x4 - core index']
  #allocation1 [shape = 'u32[144,128]{1,0:T(1,128)}', space=vmem, size = 0x12000, scoped, tag = 'internal scratch']
  %s0 = inlined_call_operand.vmem [shape: bf16[8,3200], index: 0, kind: input, shape index: {}]
  %s1 = inlined_call_operand.vmem [shape: bf16[3200,128], index: 1, kind: input, shape index: {}]
  %s2 = inlined_call_operand.vmem [shape: f32[1,128], index: 2, kind: input, shape index: {}]
  %s3 = inlined_call_operand.vmem [shape: bf16[128,128], index: 3, kind: input, shape index: {}]
  %s4 = inlined_call_operand.vmem [shape: f32[1,128], index: 4, kind: input, shape index: {}]
  %s5 = inlined_call_operand.vmem [shape: bf16[128,128], index: 5, kind: input, shape index: {}]
  %s6 = inlined_call_operand.vmem [shape: f32[1,128], index: 6, kind: input, shape index: {}]
  %s7 = inlined_call_operand.vmem [shape: f32[8,128], index: 7, kind: output, shape index: {}]
  %s8 = sld [smem:[#allocation0]]
  $region38: #{net_forward.5} parent=0
    _
  %s10 = ssub.s32 1, %s8
  %s11 = scalar_select 0, %s10, %s8
  // Predicated region
  $region2: #{net_forward.5} parent=0 // pred_check
    _
  $region3: #{net_forward.5} parent=0 // pred_check_branch
    %13 = sbr.rel (0) target = $region5
  $region4: #{net_forward.5} parent=0 // pred_region
    _
  $region5: #{net_forward.5} parent=0 // pred_fallthru
    _
  // Predicated region
  $region6: #{net_forward.5} parent=0 // pred_check
    _
  $region7: #{net_forward.5} parent=0 // pred_check_branch
    %15 = sbr.rel (0) target = $region9
  $region8: #{net_forward.5} parent=0 // pred_region
    _
  $region9: #{net_forward.5} parent=0 // pred_fallthru
    _
  // Predicated region
  $region10: #{net_forward.5} parent=0 // pred_check
    _
  $region11: #{net_forward.5} parent=0 // pred_check_branch
    %17 = sbr.rel (0) target = $region13
  $region12: #{net_forward.5} parent=0 // pred_region
    _
  $region13: #{net_forward.5} parent=0 // pred_fallthru
    _
  // Predicated region
  $region14: #{net_forward.5} parent=0 // pred_check
    _
  $region15: #{net_forward.5} parent=0 // pred_check_branch
    %19 = sbr.rel (0) target = $region17
  $region16: #{net_forward.5} parent=0 // pred_region
    _
  $region17: #{net_forward.5} parent=0 // pred_fallthru
    _
  // Predicated region
  $region18: #{net_forward.5} parent=0 // pred_check
    _
  $region19: #{net_forward.5} parent=0 // pred_check_branch
    %21 = sbr.rel (0) target = $region21
  $region20: #{net_forward.5} parent=0 // pred_region
    _
  $region21: #{net_forward.5} parent=0 // pred_fallthru
    _
  // Predicated region
  $region22: #{net_forward.5} parent=0 // pred_check
    _
  $region23: #{net_forward.5} parent=0 // pred_check_branch
    %23 = sbr.rel (0) target = $region25
  $region24: #{net_forward.5} parent=0 // pred_region
    _
  $region25: #{net_forward.5} parent=0 // pred_fallthru
    _
  // Predicated region
  $region26: #{net_forward.5} parent=0 // pred_check
    _
  $region27: #{net_forward.5} parent=0 // pred_check_branch
    %25 = sbr.rel (0) target = $region29
  $region28: #{net_forward.5} parent=0 // pred_region
    _
  $region29: #{net_forward.5} parent=0 // pred_fallthru
    _
  %v27 = vld [vmem:[%s0] sm:$0xff]
  %v28 = vld [vmem:[%s0 + $0x8] sm:$0xff]
  %v29 = vld [vmem:[%s0 + $0x10] sm:$0xff]
  %v30 = vld [vmem:[%s0 + $0x18] sm:$0xff]
  %v31 = vld [vmem:[%s0 + $0x20] sm:$0xff]
  %v32 = vld [vmem:[%s0 + $0x28] sm:$0xff]
  %v33 = vld [vmem:[%s0 + $0x30] sm:$0xff]
  %v34 = vld [vmem:[%s0 + $0x38] sm:$0xff]
  %v35 = vld [vmem:[%s0 + $0x40] sm:$0xff]
  %v36 = vld [vmem:[%s0 + $0x48] sm:$0xff]
  %v37 = vld [vmem:[%s0 + $0x50] sm:$0xff]
  %v38 = vld [vmem:[%s0 + $0x58] sm:$0xff]
  %v39 = vld [vmem:[%s0 + $0x60] sm:$0xf]
  %v40 = vld [vmem:[%s1] sm:$0xf]
  %v41 = vld [vmem:[%s1 + $0x4] sm:$0xf]
  %v42 = vld [vmem:[%s1 + $0x8] sm:$0xf]
  %v43 = vld [vmem:[%s1 + $0xc] sm:$0xf]
  %v44 = vld [vmem:[%s1 + $0x10] sm:$0xf]
  %v45 = vld [vmem:[%s1 + $0x14] sm:$0xf]
  %v46 = vld [vmem:[%s1 + $0x18] sm:$0xf]
  %v47 = vld [vmem:[%s1 + $0x1c] sm:$0xf]
  %v48 = vld [vmem:[%s1 + $0x20] sm:$0xf]
  %v49 = vld [vmem:[%s1 + $0x24] sm:$0xf]
  %v50 = vld [vmem:[%s1 + $0x28] sm:$0xf]
  %v51 = vld [vmem:[%s1 + $0x2c] sm:$0xf]
  %v52 = vld [vmem:[%s1 + $0x30] sm:$0xf]
  %v53 = vld [vmem:[%s1 + $0x34] sm:$0xf]
  %v54 = vld [vmem:[%s1 + $0x38] sm:$0xf]
  %v55 = vld [vmem:[%s1 + $0x3c] sm:$0xf]
  %v56 = vld [vmem:[%s1 + $0x40] sm:$0xf]
  %v57 = vld [vmem:[%s1 + $0x44] sm:$0xf]
  %v58 = vld [vmem:[%s1 + $0x48] sm:$0xf]
  %v59 = vld [vmem:[%s1 + $0x4c] sm:$0xf]
  %v60 = vld [vmem:[%s1 + $0x50] sm:$0xf]
  %v61 = vld [vmem:[%s1 + $0x54] sm:$0xf]
  %v62 = vld [vmem:[%s1 + $0x58] sm:$0xf]
  %v63 = vld [vmem:[%s1 + $0x5c] sm:$0xf]
  %v64 = vld [vmem:[%s1 + $0x60] sm:$0xf]
  %v65 = vld [vmem:[%s1 + $0x64] sm:$0xf]
  %v66 = vld [vmem:[%s1 + $0x68] sm:$0xf]
  %v67 = vld [vmem:[%s1 + $0x6c] sm:$0xf]
  %v68 = vld [vmem:[%s1 + $0x70] sm:$0xf]
  %v69 = vld [vmem:[%s1 + $0x74] sm:$0xf]
  %v70 = vld [vmem:[%s1 + $0x78] sm:$0xf]
  %v71 = vld [vmem:[%s1 + $0x7c] sm:$0xf]
  %v72 = vld [vmem:[%s1 + $0x80] sm:$0xf]
  %v73 = vld [vmem:[%s1 + $0x84] sm:$0xf]
  %v74 = vld [vmem:[%s1 + $0x88] sm:$0xf]
  %v75 = vld [vmem:[%s1 + $0x8c] sm:$0xf]
  %v76 = vld [vmem:[%s1 + $0x90] sm:$0xf]
  %v77 = vld [vmem:[%s1 + $0x94] sm:$0xf]
  %v78 = vld [vmem:[%s1 + $0x98] sm:$0xf]
  %v79 = vld [vmem:[%s1 + $0x9c] sm:$0xf]
  %v80 = vld [vmem:[%s1 + $0xa0] sm:$0xf]
  %v81 = vld [vmem:[%s1 + $0xa4] sm:$0xf]
  %v82 = vld [vmem:[%s1 + $0xa8] sm:$0xf]
  %v83 = vld [vmem:[%s1 + $0xac] sm:$0xf]
  %v84 = vld [vmem:[%s1 + $0xb0] sm:$0xf]
  %v85 = vld [vmem:[%s1 + $0xb4] sm:$0xf]
  %v86 = vld [vmem:[%s1 + $0xb8] sm:$0xf]
  %v87 = vld [vmem:[%s1 + $0xbc] sm:$0xf]
  %v88 = vld [vmem:[%s1 + $0xc0] sm:$0xf]
  %v89 = vld [vmem:[%s1 + $0xc4] sm:$0xf]
  %v90 = vld [vmem:[%s1 + $0xc8] sm:$0xf]
  %v91 = vld [vmem:[%s1 + $0xcc] sm:$0xf]
  %v92 = vld [vmem:[%s1 + $0xd0] sm:$0xf]
  %v93 = vld [vmem:[%s1 + $0xd4] sm:$0xf]
  %v94 = vld [vmem:[%s1 + $0xd8] sm:$0xf]
  %v95 = vld [vmem:[%s1 + $0xdc] sm:$0xf]
  %v96 = vld [vmem:[%s1 + $0xe0] sm:$0xf]
  %v97 = vld [vmem:[%s1 + $0xe4] sm:$0xf]
  %v98 = vld [vmem:[%s1 + $0xe8] sm:$0xf]
  %v99 = vld [vmem:[%s1 + $0xec] sm:$0xf]
  %v100 = vld [vmem:[%s1 + $0xf0] sm:$0xf]
  %v101 = vld [vmem:[%s1 + $0xf4] sm:$0xf]
  %v102 = vld [vmem:[%s1 + $0xf8] sm:$0xf]
  %v103 = vld [vmem:[%s1 + $0xfc] sm:$0xf]
  %v104 = vld [vmem:[%s1 + $0x100] sm:$0xf]
  %v105 = vld [vmem:[%s1 + $0x104] sm:$0xf]
  %v106 = vld [vmem:[%s1 + $0x108] sm:$0xf]
  %v107 = vld [vmem:[%s1 + $0x10c] sm:$0xf]
  %v108 = vld [vmem:[%s1 + $0x110] sm:$0xf]
  %v109 = vld [vmem:[%s1 + $0x114] sm:$0xf]
  %v110 = vld [vmem:[%s1 + $0x118] sm:$0xf]
  %v111 = vld [vmem:[%s1 + $0x11c] sm:$0xf]
  %v112 = vld [vmem:[%s1 + $0x120] sm:$0xf]
  %v113 = vld [vmem:[%s1 + $0x124] sm:$0xf]
  %v114 = vld [vmem:[%s1 + $0x128] sm:$0xf]
  %v115 = vld [vmem:[%s1 + $0x12c] sm:$0xf]
  %v116 = vld [vmem:[%s1 + $0x130] sm:$0xf]
  %v117 = vld [vmem:[%s1 + $0x134] sm:$0xf]
  %v118 = vld [vmem:[%s1 + $0x138] sm:$0xf]
  %v119 = vld [vmem:[%s1 + $0x13c] sm:$0xf]
  %v120 = vld [vmem:[%s1 + $0x140] sm:$0xf]
  %v121 = vld [vmem:[%s1 + $0x144] sm:$0xf]
  %v122 = vld [vmem:[%s1 + $0x148] sm:$0xf]
  %v123 = vld [vmem:[%s1 + $0x14c] sm:$0xf]
  %v124 = vld [vmem:[%s1 + $0x150] sm:$0xf]
  %v125 = vld [vmem:[%s1 + $0x154] sm:$0xf]
  %v126 = vld [vmem:[%s1 + $0x158] sm:$0xf]
  %v127 = vld [vmem:[%s1 + $0x15c] sm:$0xf]
  %v128 = vld [vmem:[%s1 + $0x160] sm:$0xf]
  %v129 = vld [vmem:[%s1 + $0x164] sm:$0xf]
  %v130 = vld [vmem:[%s1 + $0x168] sm:$0xf]
  %v131 = vld [vmem:[%s1 + $0x16c] sm:$0xf]
  %v132 = vld [vmem:[%s1 + $0x170] sm:$0xf]
  %v133 = vld [vmem:[%s1 + $0x174] sm:$0xf]
  %v134 = vld [vmem:[%s1 + $0x178] sm:$0xf]
  %v135 = vld [vmem:[%s1 + $0x17c] sm:$0xf]
  %v136 = vld [vmem:[%s1 + $0x180] sm:$0xf]
  %v137 = vld [vmem:[%s1 + $0x184] sm:$0xf]
  %v138 = vld [vmem:[%s1 + $0x188] sm:$0xf]
  %v139 = vld [vmem:[%s1 + $0x18c] sm:$0xf]
  %v140 = vld [vmem:[%s1 + $0x190] sm:$0xf]
  %v141 = vld [vmem:[%s1 + $0x194] sm:$0xf]
  %v142 = vld [vmem:[%s1 + $0x198] sm:$0xf]
  %v143 = vld [vmem:[%s1 + $0x19c] sm:$0xf]
  %v144 = vld [vmem:[%s1 + $0x1a0] sm:$0xf]
  %v145 = vld [vmem:[%s1 + $0x1a4] sm:$0xf]
  %v146 = vld [vmem:[%s1 + $0x1a8] sm:$0xf]
  %v147 = vld [vmem:[%s1 + $0x1ac] sm:$0xf]
  %v148 = vld [vmem:[%s1 + $0x1b0] sm:$0xf]
  %v149 = vld [vmem:[%s1 + $0x1b4] sm:$0xf]
  %v150 = vld [vmem:[%s1 + $0x1b8] sm:$0xf]
  %v151 = vld [vmem:[%s1 + $0x1bc] sm:$0xf]
  %v152 = vld [vmem:[%s1 + $0x1c0] sm:$0xf]
  %v153 = vld [vmem:[%s1 + $0x1c4] sm:$0xf]
  %v154 = vld [vmem:[%s1 + $0x1c8] sm:$0xf]
  %v155 = vld [vmem:[%s1 + $0x1cc] sm:$0xf]
  %v156 = vld [vmem:[%s1 + $0x1d0] sm:$0xf]
  %v157 = vld [vmem:[%s1 + $0x1d4] sm:$0xf]
  %v158 = vld [vmem:[%s1 + $0x1d8] sm:$0xf]
  %v159 = vld [vmem:[%s1 + $0x1dc] sm:$0xf]
  %v160 = vld [vmem:[%s1 + $0x1e0] sm:$0xf]
  %v161 = vld [vmem:[%s1 + $0x1e4] sm:$0xf]
  %v162 = vld [vmem:[%s1 + $0x1e8] sm:$0xf]
  %v163 = vld [vmem:[%s1 + $0x1ec] sm:$0xf]
  %v164 = vld [vmem:[%s1 + $0x1f0] sm:$0xf]
  %v165 = vld [vmem:[%s1 + $0x1f4] sm:$0xf]
  %v166 = vld [vmem:[%s1 + $0x1f8] sm:$0xf]
  %v167 = vld [vmem:[%s1 + $0x1fc] sm:$0xf]
  %v168 = vld [vmem:[%s1 + $0x200] sm:$0xf]
  %v169 = vld [vmem:[%s1 + $0x204] sm:$0xf]
  %v170 = vld [vmem:[%s1 + $0x208] sm:$0xf]
  %v171 = vld [vmem:[%s1 + $0x20c] sm:$0xf]
  %v172 = vld [vmem:[%s1 + $0x210] sm:$0xf]
  %v173 = vld [vmem:[%s1 + $0x214] sm:$0xf]
  %v174 = vld [vmem:[%s1 + $0x218] sm:$0xf]
  %v175 = vld [vmem:[%s1 + $0x21c] sm:$0xf]
  %v176 = vld [vmem:[%s1 + $0x220] sm:$0xf]
  %v177 = vld [vmem:[%s1 + $0x224] sm:$0xf]
  %v178 = vld [vmem:[%s1 + $0x228] sm:$0xf]
  %v179 = vld [vmem:[%s1 + $0x22c] sm:$0xf]
  %v180 = vld [vmem:[%s1 + $0x230] sm:$0xf]
  %v181 = vld [vmem:[%s1 + $0x234] sm:$0xf]
  %v182 = vld [vmem:[%s1 + $0x238] sm:$0xf]
  %v183 = vld [vmem:[%s1 + $0x23c] sm:$0xf]
  %v184 = vld [vmem:[%s1 + $0x240] sm:$0xf]
  %v185 = vld [vmem:[%s1 + $0x244] sm:$0xf]
  %v186 = vld [vmem:[%s1 + $0x248] sm:$0xf]
  %v187 = vld [vmem:[%s1 + $0x24c] sm:$0xf]
  %v188 = vld [vmem:[%s1 + $0x250] sm:$0xf]
  %v189 = vld [vmem:[%s1 + $0x254] sm:$0xf]
  %v190 = vld [vmem:[%s1 + $0x258] sm:$0xf]
  %v191 = vld [vmem:[%s1 + $0x25c] sm:$0xf]
  %v192 = vld [vmem:[%s1 + $0x260] sm:$0xf]
  %v193 = vld [vmem:[%s1 + $0x264] sm:$0xf]
  %v194 = vld [vmem:[%s1 + $0x268] sm:$0xf]
  %v195 = vld [vmem:[%s1 + $0x26c] sm:$0xf]
  %v196 = vld [vmem:[%s1 + $0x270] sm:$0xf]
  %v197 = vld [vmem:[%s1 + $0x274] sm:$0xf]
  %v198 = vld [vmem:[%s1 + $0x278] sm:$0xf]
  %v199 = vld [vmem:[%s1 + $0x27c] sm:$0xf]
  %v200 = vld [vmem:[%s1 + $0x280] sm:$0xf]
  %v201 = vld [vmem:[%s1 + $0x284] sm:$0xf]
  %v202 = vld [vmem:[%s1 + $0x288] sm:$0xf]
  %v203 = vld [vmem:[%s1 + $0x28c] sm:$0xf]
  %v204 = vld [vmem:[%s1 + $0x290] sm:$0xf]
  %v205 = vld [vmem:[%s1 + $0x294] sm:$0xf]
  %v206 = vld [vmem:[%s1 + $0x298] sm:$0xf]
  %v207 = vld [vmem:[%s1 + $0x29c] sm:$0xf]
  %v208 = vld [vmem:[%s1 + $0x2a0] sm:$0xf]
  %v209 = vld [vmem:[%s1 + $0x2a4] sm:$0xf]
  %v210 = vld [vmem:[%s1 + $0x2a8] sm:$0xf]
  %v211 = vld [vmem:[%s1 + $0x2ac] sm:$0xf]
  %v212 = vld [vmem:[%s1 + $0x2b0] sm:$0xf]
  %v213 = vld [vmem:[%s1 + $0x2b4] sm:$0xf]
  %v214 = vld [vmem:[%s1 + $0x2b8] sm:$0xf]
  %v215 = vld [vmem:[%s1 + $0x2bc] sm:$0xf]
  %v216 = vld [vmem:[%s1 + $0x2c0] sm:$0xf]
  %v217 = vld [vmem:[%s1 + $0x2c4] sm:$0xf]
  %v218 = vld [vmem:[%s1 + $0x2c8] sm:$0xf]
  %v219 = vld [vmem:[%s1 + $0x2cc] sm:$0xf]
  %v220 = vld [vmem:[%s1 + $0x2d0] sm:$0xf]
  %v221 = vld [vmem:[%s1 + $0x2d4] sm:$0xf]
  %v222 = vld [vmem:[%s1 + $0x2d8] sm:$0xf]
  %v223 = vld [vmem:[%s1 + $0x2dc] sm:$0xf]
  %v224 = vld [vmem:[%s1 + $0x2e0] sm:$0xf]
  %v225 = vld [vmem:[%s1 + $0x2e4] sm:$0xf]
  %v226 = vld [vmem:[%s1 + $0x2e8] sm:$0xf]
  %v227 = vld [vmem:[%s1 + $0x2ec] sm:$0xf]
  %v228 = vld [vmem:[%s1 + $0x2f0] sm:$0xf]
  %v229 = vld [vmem:[%s1 + $0x2f4] sm:$0xf]
  %v230 = vld [vmem:[%s1 + $0x2f8] sm:$0xf]
  %v231 = vld [vmem:[%s1 + $0x2fc] sm:$0xf]
  %v232 = vld [vmem:[%s1 + $0x300] sm:$0xf]
  %v233 = vld [vmem:[%s1 + $0x304] sm:$0xf]
  %v234 = vld [vmem:[%s1 + $0x308] sm:$0xf]
  %v235 = vld [vmem:[%s1 + $0x30c] sm:$0xf]
  %v236 = vld [vmem:[%s1 + $0x310] sm:$0xf]
  %v237 = vld [vmem:[%s1 + $0x314] sm:$0xf]
  %v238 = vld [vmem:[%s1 + $0x318] sm:$0xf]
  %v239 = vld [vmem:[%s1 + $0x31c] sm:$0xf]
  %v240 = vld [vmem:[%s1 + $0x320] sm:$0xf]
  %v241 = vld [vmem:[%s1 + $0x324] sm:$0xf]
  %v242 = vld [vmem:[%s1 + $0x328] sm:$0xf]
  %v243 = vld [vmem:[%s1 + $0x32c] sm:$0xf]
  %v244 = vld [vmem:[%s1 + $0x330] sm:$0xf]
  %v245 = vld [vmem:[%s1 + $0x334] sm:$0xf]
  %v246 = vld [vmem:[%s1 + $0x338] sm:$0xf]
  %v247 = vld [vmem:[%s1 + $0x33c] sm:$0xf]
  %v248 = vld [vmem:[%s1 + $0x340] sm:$0xf]
  %v249 = vld [vmem:[%s1 + $0x344] sm:$0xf]
  %v250 = vld [vmem:[%s1 + $0x348] sm:$0xf]
  %v251 = vld [vmem:[%s1 + $0x34c] sm:$0xf]
  %v252 = vld [vmem:[%s1 + $0x350] sm:$0xf]
  %v253 = vld [vmem:[%s1 + $0x354] sm:$0xf]
  %v254 = vld [vmem:[%s1 + $0x358] sm:$0xf]
  %v255 = vld [vmem:[%s1 + $0x35c] sm:$0xf]
  %v256 = vld [vmem:[%s1 + $0x360] sm:$0xf]
  %v257 = vld [vmem:[%s1 + $0x364] sm:$0xf]
  %v258 = vld [vmem:[%s1 + $0x368] sm:$0xf]
  %v259 = vld [vmem:[%s1 + $0x36c] sm:$0xf]
  %v260 = vld [vmem:[%s1 + $0x370] sm:$0xf]
  %v261 = vld [vmem:[%s1 + $0x374] sm:$0xf]
  %v262 = vld [vmem:[%s1 + $0x378] sm:$0xf]
  %v263 = vld [vmem:[%s1 + $0x37c] sm:$0xf]
  %v264 = vld [vmem:[%s1 + $0x380] sm:$0xf]
  %v265 = vld [vmem:[%s1 + $0x384] sm:$0xf]
  %v266 = vld [vmem:[%s1 + $0x388] sm:$0xf]
  %v267 = vld [vmem:[%s1 + $0x38c] sm:$0xf]
  %v268 = vld [vmem:[%s1 + $0x390] sm:$0xf]
  %v269 = vld [vmem:[%s1 + $0x394] sm:$0xf]
  %v270 = vld [vmem:[%s1 + $0x398] sm:$0xf]
  %v271 = vld [vmem:[%s1 + $0x39c] sm:$0xf]
  %v272 = vld [vmem:[%s1 + $0x3a0] sm:$0xf]
  %v273 = vld [vmem:[%s1 + $0x3a4] sm:$0xf]
  %v274 = vld [vmem:[%s1 + $0x3a8] sm:$0xf]
  %v275 = vld [vmem:[%s1 + $0x3ac] sm:$0xf]
  %v276 = vld [vmem:[%s1 + $0x3b0] sm:$0xf]
  %v277 = vld [vmem:[%s1 + $0x3b4] sm:$0xf]
  %v278 = vld [vmem:[%s1 + $0x3b8] sm:$0xf]
  %v279 = vld [vmem:[%s1 + $0x3bc] sm:$0xf]
  %v280 = vld [vmem:[%s1 + $0x3c0] sm:$0xf]
  %v281 = vld [vmem:[%s1 + $0x3c4] sm:$0xf]
  %v282 = vld [vmem:[%s1 + $0x3c8] sm:$0xf]
  %v283 = vld [vmem:[%s1 + $0x3cc] sm:$0xf]
  %v284 = vld [vmem:[%s1 + $0x3d0] sm:$0xf]
  %v285 = vld [vmem:[%s1 + $0x3d4] sm:$0xf]
  %v286 = vld [vmem:[%s1 + $0x3d8] sm:$0xf]
  %v287 = vld [vmem:[%s1 + $0x3dc] sm:$0xf]
  %v288 = vld [vmem:[%s1 + $0x3e0] sm:$0xf]
  %v289 = vld [vmem:[%s1 + $0x3e4] sm:$0xf]
  %v290 = vld [vmem:[%s1 + $0x3e8] sm:$0xf]
  %v291 = vld [vmem:[%s1 + $0x3ec] sm:$0xf]
  %v292 = vld [vmem:[%s1 + $0x3f0] sm:$0xf]
  %v293 = vld [vmem:[%s1 + $0x3f4] sm:$0xf]
  %v294 = vld [vmem:[%s1 + $0x3f8] sm:$0xf]
  %v295 = vld [vmem:[%s1 + $0x3fc] sm:$0xf]
  %v296 = vld [vmem:[%s1 + $0x400] sm:$0xf]
  %v297 = vld [vmem:[%s1 + $0x404] sm:$0xf]
  %v298 = vld [vmem:[%s1 + $0x408] sm:$0xf]
  %v299 = vld [vmem:[%s1 + $0x40c] sm:$0xf]
  %v300 = vld [vmem:[%s1 + $0x410] sm:$0xf]
  %v301 = vld [vmem:[%s1 + $0x414] sm:$0xf]
  %v302 = vld [vmem:[%s1 + $0x418] sm:$0xf]
  %v303 = vld [vmem:[%s1 + $0x41c] sm:$0xf]
  %v304 = vld [vmem:[%s1 + $0x420] sm:$0xf]
  %v305 = vld [vmem:[%s1 + $0x424] sm:$0xf]
  %v306 = vld [vmem:[%s1 + $0x428] sm:$0xf]
  %v307 = vld [vmem:[%s1 + $0x42c] sm:$0xf]
  %v308 = vld [vmem:[%s1 + $0x430] sm:$0xf]
  %v309 = vld [vmem:[%s1 + $0x434] sm:$0xf]
  %v310 = vld [vmem:[%s1 + $0x438] sm:$0xf]
  %v311 = vld [vmem:[%s1 + $0x43c] sm:$0xf]
  %v312 = vld [vmem:[%s1 + $0x440] sm:$0xf]
  %v313 = vld [vmem:[%s1 + $0x444] sm:$0xf]
  %v314 = vld [vmem:[%s1 + $0x448] sm:$0xf]
  %v315 = vld [vmem:[%s1 + $0x44c] sm:$0xf]
  %v316 = vld [vmem:[%s1 + $0x450] sm:$0xf]
  %v317 = vld [vmem:[%s1 + $0x454] sm:$0xf]
  %v318 = vld [vmem:[%s1 + $0x458] sm:$0xf]
  %v319 = vld [vmem:[%s1 + $0x45c] sm:$0xf]
  %v320 = vld [vmem:[%s1 + $0x460] sm:$0xf]
  %v321 = vld [vmem:[%s1 + $0x464] sm:$0xf]
  %v322 = vld [vmem:[%s1 + $0x468] sm:$0xf]
  %v323 = vld [vmem:[%s1 + $0x46c] sm:$0xf]
  %v324 = vld [vmem:[%s1 + $0x470] sm:$0xf]
  %v325 = vld [vmem:[%s1 + $0x474] sm:$0xf]
  %v326 = vld [vmem:[%s1 + $0x478] sm:$0xf]
  %v327 = vld [vmem:[%s1 + $0x47c] sm:$0xf]
  %v328 = vld [vmem:[%s1 + $0x480] sm:$0xf]
  %v329 = vld [vmem:[%s1 + $0x484] sm:$0xf]
  %v330 = vld [vmem:[%s1 + $0x488] sm:$0xf]
  %v331 = vld [vmem:[%s1 + $0x48c] sm:$0xf]
  %v332 = vld [vmem:[%s1 + $0x490] sm:$0xf]
  %v333 = vld [vmem:[%s1 + $0x494] sm:$0xf]
  %v334 = vld [vmem:[%s1 + $0x498] sm:$0xf]
  %v335 = vld [vmem:[%s1 + $0x49c] sm:$0xf]
  %v336 = vld [vmem:[%s1 + $0x4a0] sm:$0xf]
  %v337 = vld [vmem:[%s1 + $0x4a4] sm:$0xf]
  %v338 = vld [vmem:[%s1 + $0x4a8] sm:$0xf]
  %v339 = vld [vmem:[%s1 + $0x4ac] sm:$0xf]
  %v340 = vld [vmem:[%s1 + $0x4b0] sm:$0xf]
  %v341 = vld [vmem:[%s1 + $0x4b4] sm:$0xf]
  %v342 = vld [vmem:[%s1 + $0x4b8] sm:$0xf]
  %v343 = vld [vmem:[%s1 + $0x4bc] sm:$0xf]
  %v344 = vld [vmem:[%s1 + $0x4c0] sm:$0xf]
  %v345 = vld [vmem:[%s1 + $0x4c4] sm:$0xf]
  %v346 = vld [vmem:[%s1 + $0x4c8] sm:$0xf]
  %v347 = vld [vmem:[%s1 + $0x4cc] sm:$0xf]
  %v348 = vld [vmem:[%s1 + $0x4d0] sm:$0xf]
  %v349 = vld [vmem:[%s1 + $0x4d4] sm:$0xf]
  %v350 = vld [vmem:[%s1 + $0x4d8] sm:$0xf]
  %v351 = vld [vmem:[%s1 + $0x4dc] sm:$0xf]
  %v352 = vld [vmem:[%s1 + $0x4e0] sm:$0xf]
  %v353 = vld [vmem:[%s1 + $0x4e4] sm:$0xf]
  %v354 = vld [vmem:[%s1 + $0x4e8] sm:$0xf]
  %v355 = vld [vmem:[%s1 + $0x4ec] sm:$0xf]
  %v356 = vld [vmem:[%s1 + $0x4f0] sm:$0xf]
  %v357 = vld [vmem:[%s1 + $0x4f4] sm:$0xf]
  %v358 = vld [vmem:[%s1 + $0x4f8] sm:$0xf]
  %v359 = vld [vmem:[%s1 + $0x4fc] sm:$0xf]
  %v360 = vld [vmem:[%s1 + $0x500] sm:$0xf]
  %v361 = vld [vmem:[%s1 + $0x504] sm:$0xf]
  %v362 = vld [vmem:[%s1 + $0x508] sm:$0xf]
  %v363 = vld [vmem:[%s1 + $0x50c] sm:$0xf]
  %v364 = vld [vmem:[%s1 + $0x510] sm:$0xf]
  %v365 = vld [vmem:[%s1 + $0x514] sm:$0xf]
  %v366 = vld [vmem:[%s1 + $0x518] sm:$0xf]
  %v367 = vld [vmem:[%s1 + $0x51c] sm:$0xf]
  %v368 = vld [vmem:[%s1 + $0x520] sm:$0xf]
  %v369 = vld [vmem:[%s1 + $0x524] sm:$0xf]
  %v370 = vld [vmem:[%s1 + $0x528] sm:$0xf]
  %v371 = vld [vmem:[%s1 + $0x52c] sm:$0xf]
  %v372 = vld [vmem:[%s1 + $0x530] sm:$0xf]
  %v373 = vld [vmem:[%s1 + $0x534] sm:$0xf]
  %v374 = vld [vmem:[%s1 + $0x538] sm:$0xf]
  %v375 = vld [vmem:[%s1 + $0x53c] sm:$0xf]
  %v376 = vld [vmem:[%s1 + $0x540] sm:$0xf]
  %v377 = vld [vmem:[%s1 + $0x544] sm:$0xf]
  %v378 = vld [vmem:[%s1 + $0x548] sm:$0xf]
  %v379 = vld [vmem:[%s1 + $0x54c] sm:$0xf]
  %v380 = vld [vmem:[%s1 + $0x550] sm:$0xf]
  %v381 = vld [vmem:[%s1 + $0x554] sm:$0xf]
  %v382 = vld [vmem:[%s1 + $0x558] sm:$0xf]
  %v383 = vld [vmem:[%s1 + $0x55c] sm:$0xf]
  %v384 = vld [vmem:[%s1 + $0x560] sm:$0xf]
  %v385 = vld [vmem:[%s1 + $0x564] sm:$0xf]
  %v386 = vld [vmem:[%s1 + $0x568] sm:$0xf]
  %v387 = vld [vmem:[%s1 + $0x56c] sm:$0xf]
  %v388 = vld [vmem:[%s1 + $0x570] sm:$0xf]
  %v389 = vld [vmem:[%s1 + $0x574] sm:$0xf]
  %v390 = vld [vmem:[%s1 + $0x578] sm:$0xf]
  %v391 = vld [vmem:[%s1 + $0x57c] sm:$0xf]
  %v392 = vld [vmem:[%s1 + $0x580] sm:$0xf]
  %v393 = vld [vmem:[%s1 + $0x584] sm:$0xf]
  %v394 = vld [vmem:[%s1 + $0x588] sm:$0xf]
  %v395 = vld [vmem:[%s1 + $0x58c] sm:$0xf]
  %v396 = vld [vmem:[%s1 + $0x590] sm:$0xf]
  %v397 = vld [vmem:[%s1 + $0x594] sm:$0xf]
  %v398 = vld [vmem:[%s1 + $0x598] sm:$0xf]
  %v399 = vld [vmem:[%s1 + $0x59c] sm:$0xf]
  %v400 = vld [vmem:[%s1 + $0x5a0] sm:$0xf]
  %v401 = vld [vmem:[%s1 + $0x5a4] sm:$0xf]
  %v402 = vld [vmem:[%s1 + $0x5a8] sm:$0xf]
  %v403 = vld [vmem:[%s1 + $0x5ac] sm:$0xf]
  %v404 = vld [vmem:[%s1 + $0x5b0] sm:$0xf]
  %v405 = vld [vmem:[%s1 + $0x5b4] sm:$0xf]
  %v406 = vld [vmem:[%s1 + $0x5b8] sm:$0xf]
  %v407 = vld [vmem:[%s1 + $0x5bc] sm:$0xf]
  %v408 = vld [vmem:[%s1 + $0x5c0] sm:$0xf]
  %v409 = vld [vmem:[%s1 + $0x5c4] sm:$0xf]
  %v410 = vld [vmem:[%s1 + $0x5c8] sm:$0xf]
  %v411 = vld [vmem:[%s1 + $0x5cc] sm:$0xf]
  %v412 = vld [vmem:[%s1 + $0x5d0] sm:$0xf]
  %v413 = vld [vmem:[%s1 + $0x5d4] sm:$0xf]
  %v414 = vld [vmem:[%s1 + $0x5d8] sm:$0xf]
  %v415 = vld [vmem:[%s1 + $0x5dc] sm:$0xf]
  %v416 = vld [vmem:[%s1 + $0x5e0] sm:$0xf]
  %v417 = vld [vmem:[%s1 + $0x5e4] sm:$0xf]
  %v418 = vld [vmem:[%s1 + $0x5e8] sm:$0xf]
  %v419 = vld [vmem:[%s1 + $0x5ec] sm:$0xf]
  %v420 = vld [vmem:[%s1 + $0x5f0] sm:$0xf]
  %v421 = vld [vmem:[%s1 + $0x5f4] sm:$0xf]
  %v422 = vld [vmem:[%s1 + $0x5f8] sm:$0xf]
  %v423 = vld [vmem:[%s1 + $0x5fc] sm:$0xf]
  %v424 = vld [vmem:[%s1 + $0x600] sm:$0xf]
  %v425 = vld [vmem:[%s1 + $0x604] sm:$0xf]
  %v426 = vld [vmem:[%s1 + $0x608] sm:$0xf]
  %v427 = vld [vmem:[%s1 + $0x60c] sm:$0xf]
  %v428 = vld [vmem:[%s1 + $0x610] sm:$0xf]
  %v429 = vld [vmem:[%s1 + $0x614] sm:$0xf]
  %v430 = vld [vmem:[%s1 + $0x618] sm:$0xf]
  %v431 = vld [vmem:[%s1 + $0x61c] sm:$0xf]
  %v432 = vld [vmem:[%s1 + $0x620] sm:$0xf]
  %v433 = vld [vmem:[%s1 + $0x624] sm:$0xf]
  %v434 = vld [vmem:[%s1 + $0x628] sm:$0xf]
  %v435 = vld [vmem:[%s1 + $0x62c] sm:$0xf]
  %v436 = vld [vmem:[%s1 + $0x630] sm:$0xf]
  %v437 = vld [vmem:[%s1 + $0x634] sm:$0xf]
  %v438 = vld [vmem:[%s1 + $0x638] sm:$0xf]
  %v439 = vld [vmem:[%s1 + $0x63c] sm:$0xf]
  %v440 = vld [vmem:[%s2] sm:$0x1]
  %v442 = vlaneseq
  %v443 = vshrl.u32 %v442, 7
  %v444 = vsub.s32 0, %v443
  %v445 = vrot.slane %v440, %v444
  %v460 = vunpack.c.l.b16 %v27
  %v461 = vunpack.c.h.b16 %v27
  %v462 = vunpack.c.l.b16 %v28
  %v463 = vunpack.c.h.b16 %v28
  %v464 = vunpack.c.l.b16 %v29
  %v465 = vunpack.c.h.b16 %v29
  %v466 = vunpack.c.l.b16 %v30
  %v467 = vunpack.c.h.b16 %v30
  %v468 = vunpack.c.l.b16 %v31
  %v469 = vunpack.c.h.b16 %v31
  %v470 = vunpack.c.l.b16 %v32
  %v471 = vunpack.c.h.b16 %v32
  %v472 = vunpack.c.l.b16 %v33
  %v473 = vunpack.c.h.b16 %v33
  %v474 = vunpack.c.l.b16 %v34
  %v475 = vunpack.c.h.b16 %v34
  %v476 = vunpack.c.l.b16 %v35
  %v477 = vunpack.c.h.b16 %v35
  %v478 = vunpack.c.l.b16 %v36
  %v479 = vunpack.c.h.b16 %v36
  %v480 = vunpack.c.l.b16 %v37
  %v481 = vunpack.c.h.b16 %v37
  %v482 = vunpack.c.l.b16 %v38
  %v483 = vunpack.c.h.b16 %v38
  %v484 = vunpack.c.l.b16 %v39
  %v485 = vpack.c.b16 %v460, %v460
  %v486 = vpack.c.b16 %v461, %v461
  %v487 = vpack.c.b16 %v462, %v462
  %v488 = vpack.c.b16 %v463, %v463
  %v489 = vpack.c.b16 %v464, %v464
  %v490 = vpack.c.b16 %v465, %v465
  %v491 = vpack.c.b16 %v466, %v466
  %v492 = vpack.c.b16 %v467, %v467
  %v493 = vpack.c.b16 %v468, %v468
  %v494 = vpack.c.b16 %v469, %v469
  %v495 = vpack.c.b16 %v470, %v470
  %v496 = vpack.c.b16 %v471, %v471
  %v497 = vpack.c.b16 %v472, %v472
  %v498 = vpack.c.b16 %v473, %v473
  %v499 = vpack.c.b16 %v474, %v474
  %v500 = vpack.c.b16 %v475, %v475
  %v501 = vpack.c.b16 %v476, %v476
  %v502 = vpack.c.b16 %v477, %v477
  %v503 = vpack.c.b16 %v478, %v478
  %v504 = vpack.c.b16 %v479, %v479
  %v505 = vpack.c.b16 %v480, %v480
  %v506 = vpack.c.b16 %v481, %v481
  %v507 = vpack.c.b16 %v482, %v482
  %v508 = vpack.c.b16 %v483, %v483
  %v509 = vpack.c.b16 %v484, %v484
  %v935 = vunpack.c.l.b16 %v40
  %v936 = vunpack.c.l.b16 %v41
  %v937 = vunpack.c.l.b16 %v42
  %v938 = vunpack.c.l.b16 %v43
  %v939 = vunpack.c.l.b16 %v44
  %v940 = vunpack.c.l.b16 %v45
  %v941 = vunpack.c.l.b16 %v46
  %v942 = vunpack.c.l.b16 %v47
  %v943 = vunpack.c.l.b16 %v48
  %v944 = vunpack.c.l.b16 %v49
  %v945 = vunpack.c.l.b16 %v50
  %v946 = vunpack.c.l.b16 %v51
  %v947 = vunpack.c.l.b16 %v52
  %v948 = vunpack.c.l.b16 %v53
  %v949 = vunpack.c.l.b16 %v54
  %v950 = vunpack.c.l.b16 %v55
  %v951 = vunpack.c.l.b16 %v56
  %v952 = vunpack.c.l.b16 %v57
  %v953 = vunpack.c.l.b16 %v58
  %v954 = vunpack.c.l.b16 %v59
  %v955 = vunpack.c.l.b16 %v60
  %v956 = vunpack.c.l.b16 %v61
  %v957 = vunpack.c.l.b16 %v62
  %v958 = vunpack.c.l.b16 %v63
  %v959 = vunpack.c.l.b16 %v64
  %v960 = vunpack.c.l.b16 %v65
  %v961 = vunpack.c.l.b16 %v66
  %v962 = vunpack.c.l.b16 %v67
  %v963 = vunpack.c.l.b16 %v68
  %v964 = vunpack.c.l.b16 %v69
  %v965 = vunpack.c.l.b16 %v70
  %v966 = vunpack.c.l.b16 %v71
  %v967 = vunpack.c.l.b16 %v72
  %v968 = vunpack.c.l.b16 %v73
  %v969 = vunpack.c.l.b16 %v74
  %v970 = vunpack.c.l.b16 %v75
  %v971 = vunpack.c.l.b16 %v76
  %v972 = vunpack.c.l.b16 %v77
  %v973 = vunpack.c.l.b16 %v78
  %v974 = vunpack.c.l.b16 %v79
  %v975 = vunpack.c.l.b16 %v80
  %v976 = vunpack.c.l.b16 %v81
  %v977 = vunpack.c.l.b16 %v82
  %v978 = vunpack.c.l.b16 %v83
  %v979 = vunpack.c.l.b16 %v84
  %v980 = vunpack.c.l.b16 %v85
  %v981 = vunpack.c.l.b16 %v86
  %v982 = vunpack.c.l.b16 %v87
  %v983 = vunpack.c.l.b16 %v88
  %v984 = vunpack.c.l.b16 %v89
  %v985 = vunpack.c.l.b16 %v90
  %v986 = vunpack.c.l.b16 %v91
  %v987 = vunpack.c.l.b16 %v92
  %v988 = vunpack.c.l.b16 %v93
  %v989 = vunpack.c.l.b16 %v94
  %v990 = vunpack.c.l.b16 %v95
  %v991 = vunpack.c.l.b16 %v96
  %v992 = vunpack.c.l.b16 %v97
  %v993 = vunpack.c.l.b16 %v98
  %v994 = vunpack.c.l.b16 %v99
  %v995 = vunpack.c.l.b16 %v100
  %v996 = vunpack.c.l.b16 %v101
  %v997 = vunpack.c.l.b16 %v102
  %v998 = vunpack.c.l.b16 %v103
  %v999 = vunpack.c.l.b16 %v104
  %v1000 = vunpack.c.l.b16 %v105
  %v1001 = vunpack.c.l.b16 %v106
  %v1002 = vunpack.c.l.b16 %v107
  %v1003 = vunpack.c.l.b16 %v108
  %v1004 = vunpack.c.l.b16 %v109
  %v1005 = vunpack.c.l.b16 %v110
  %v1006 = vunpack.c.l.b16 %v111
  %v1007 = vunpack.c.l.b16 %v112
  %v1008 = vunpack.c.l.b16 %v113
  %v1009 = vunpack.c.l.b16 %v114
  %v1010 = vunpack.c.l.b16 %v115
  %v1011 = vunpack.c.l.b16 %v116
  %v1012 = vunpack.c.l.b16 %v117
  %v1013 = vunpack.c.l.b16 %v118
  %v1014 = vunpack.c.l.b16 %v119
  %v1015 = vunpack.c.l.b16 %v120
  %v1016 = vunpack.c.l.b16 %v121
  %v1017 = vunpack.c.l.b16 %v122
  %v1018 = vunpack.c.l.b16 %v123
  %v1019 = vunpack.c.l.b16 %v124
  %v1020 = vunpack.c.l.b16 %v125
  %v1021 = vunpack.c.l.b16 %v126
  %v1022 = vunpack.c.l.b16 %v127
  %v1023 = vunpack.c.l.b16 %v128
  %v1024 = vunpack.c.l.b16 %v129
  %v1025 = vunpack.c.l.b16 %v130
  %v1026 = vunpack.c.l.b16 %v131
  %v1027 = vunpack.c.l.b16 %v132
  %v1028 = vunpack.c.l.b16 %v133
  %v1029 = vunpack.c.l.b16 %v134
  %v1030 = vunpack.c.l.b16 %v135
  %v1031 = vunpack.c.l.b16 %v136
  %v1032 = vunpack.c.l.b16 %v137
  %v1033 = vunpack.c.l.b16 %v138
  %v1034 = vunpack.c.l.b16 %v139
  %v1035 = vunpack.c.l.b16 %v140
  %v1036 = vunpack.c.l.b16 %v141
  %v1037 = vunpack.c.l.b16 %v142
  %v1038 = vunpack.c.l.b16 %v143
  %v1039 = vunpack.c.l.b16 %v144
  %v1040 = vunpack.c.l.b16 %v145
  %v1041 = vunpack.c.l.b16 %v146
  %v1042 = vunpack.c.l.b16 %v147
  %v1043 = vunpack.c.l.b16 %v148
  %v1044 = vunpack.c.l.b16 %v149
  %v1045 = vunpack.c.l.b16 %v150
  %v1046 = vunpack.c.l.b16 %v151
  %v1047 = vunpack.c.l.b16 %v152
  %v1048 = vunpack.c.l.b16 %v153
  %v1049 = vunpack.c.l.b16 %v154
  %v1050 = vunpack.c.l.b16 %v155
  %v1051 = vunpack.c.l.b16 %v156
  %v1052 = vunpack.c.l.b16 %v157
  %v1053 = vunpack.c.l.b16 %v158
  %v1054 = vunpack.c.l.b16 %v159
  %v1055 = vunpack.c.l.b16 %v160
  %v1056 = vunpack.c.l.b16 %v161
  %v1057 = vunpack.c.l.b16 %v162
  %v1058 = vunpack.c.l.b16 %v163
  %v1059 = vunpack.c.l.b16 %v164
  %v1060 = vunpack.c.l.b16 %v165
  %v1061 = vunpack.c.l.b16 %v166
  %v1062 = vunpack.c.l.b16 %v167
  %v1063 = vunpack.c.l.b16 %v168
  %v1064 = vunpack.c.l.b16 %v169
  %v1065 = vunpack.c.l.b16 %v170
  %v1066 = vunpack.c.l.b16 %v171
  %v1067 = vunpack.c.l.b16 %v172
  %v1068 = vunpack.c.l.b16 %v173
  %v1069 = vunpack.c.l.b16 %v174
  %v1070 = vunpack.c.l.b16 %v175
  %v1071 = vunpack.c.l.b16 %v176
  %v1072 = vunpack.c.l.b16 %v177
  %v1073 = vunpack.c.l.b16 %v178
  %v1074 = vunpack.c.l.b16 %v179
  %v1075 = vunpack.c.l.b16 %v180
  %v1076 = vunpack.c.l.b16 %v181
  %v1077 = vunpack.c.l.b16 %v182
  %v1078 = vunpack.c.l.b16 %v183
  %v1079 = vunpack.c.l.b16 %v184
  %v1080 = vunpack.c.l.b16 %v185
  %v1081 = vunpack.c.l.b16 %v186
  %v1082 = vunpack.c.l.b16 %v187
  %v1083 = vunpack.c.l.b16 %v188
  %v1084 = vunpack.c.l.b16 %v189
  %v1085 = vunpack.c.l.b16 %v190
  %v1086 = vunpack.c.l.b16 %v191
  %v1087 = vunpack.c.l.b16 %v192
  %v1088 = vunpack.c.l.b16 %v193
  %v1089 = vunpack.c.l.b16 %v194
  %v1090 = vunpack.c.l.b16 %v195
  %v1091 = vunpack.c.l.b16 %v196
  %v1092 = vunpack.c.l.b16 %v197
  %v1093 = vunpack.c.l.b16 %v198
  %v1094 = vunpack.c.l.b16 %v199
  %v1095 = vunpack.c.l.b16 %v200
  %v1096 = vunpack.c.l.b16 %v201
  %v1097 = vunpack.c.l.b16 %v202
  %v1098 = vunpack.c.l.b16 %v203
  %v1099 = vunpack.c.l.b16 %v204
  %v1100 = vunpack.c.l.b16 %v205
  %v1101 = vunpack.c.l.b16 %v206
  %v1102 = vunpack.c.l.b16 %v207
  %v1103 = vunpack.c.l.b16 %v208
  %v1104 = vunpack.c.l.b16 %v209
  %v1105 = vunpack.c.l.b16 %v210
  %v1106 = vunpack.c.l.b16 %v211
  %v1107 = vunpack.c.l.b16 %v212
  %v1108 = vunpack.c.l.b16 %v213
  %v1109 = vunpack.c.l.b16 %v214
  %v1110 = vunpack.c.l.b16 %v215
  %v1111 = vunpack.c.l.b16 %v216
  %v1112 = vunpack.c.l.b16 %v217
  %v1113 = vunpack.c.l.b16 %v218
  %v1114 = vunpack.c.l.b16 %v219
  %v1115 = vunpack.c.l.b16 %v220
  %v1116 = vunpack.c.l.b16 %v221
  %v1117 = vunpack.c.l.b16 %v222
  %v1118 = vunpack.c.l.b16 %v223
  %v1119 = vunpack.c.l.b16 %v224
  %v1120 = vunpack.c.l.b16 %v225
  %v1121 = vunpack.c.l.b16 %v226
  %v1122 = vunpack.c.l.b16 %v227
  %v1123 = vunpack.c.l.b16 %v228
  %v1124 = vunpack.c.l.b16 %v229
  %v1125 = vunpack.c.l.b16 %v230
  %v1126 = vunpack.c.l.b16 %v231
  %v1127 = vunpack.c.l.b16 %v232
  %v1128 = vunpack.c.l.b16 %v233
  %v1129 = vunpack.c.l.b16 %v234
  %v1130 = vunpack.c.l.b16 %v235
  %v1131 = vunpack.c.l.b16 %v236
  %v1132 = vunpack.c.l.b16 %v237
  %v1133 = vunpack.c.l.b16 %v238
  %v1134 = vunpack.c.l.b16 %v239
  %v1135 = vunpack.c.l.b16 %v240
  %v1136 = vunpack.c.l.b16 %v241
  %v1137 = vunpack.c.l.b16 %v242
  %v1138 = vunpack.c.l.b16 %v243
  %v1139 = vunpack.c.l.b16 %v244
  %v1140 = vunpack.c.l.b16 %v245
  %v1141 = vunpack.c.l.b16 %v246
  %v1142 = vunpack.c.l.b16 %v247
  %v1143 = vunpack.c.l.b16 %v248
  %v1144 = vunpack.c.l.b16 %v249
  %v1145 = vunpack.c.l.b16 %v250
  %v1146 = vunpack.c.l.b16 %v251
  %v1147 = vunpack.c.l.b16 %v252
  %v1148 = vunpack.c.l.b16 %v253
  %v1149 = vunpack.c.l.b16 %v254
  %v1150 = vunpack.c.l.b16 %v255
  %v1151 = vunpack.c.l.b16 %v256
  %v1152 = vunpack.c.l.b16 %v257
  %v1153 = vunpack.c.l.b16 %v258
  %v1154 = vunpack.c.l.b16 %v259
  %v1155 = vunpack.c.l.b16 %v260
  %v1156 = vunpack.c.l.b16 %v261
  %v1157 = vunpack.c.l.b16 %v262
  %v1158 = vunpack.c.l.b16 %v263
  %v1159 = vunpack.c.l.b16 %v264
  %v1160 = vunpack.c.l.b16 %v265
  %v1161 = vunpack.c.l.b16 %v266
  %v1162 = vunpack.c.l.b16 %v267
  %v1163 = vunpack.c.l.b16 %v268
  %v1164 = vunpack.c.l.b16 %v269
  %v1165 = vunpack.c.l.b16 %v270
  %v1166 = vunpack.c.l.b16 %v271
  %v1167 = vunpack.c.l.b16 %v272
  %v1168 = vunpack.c.l.b16 %v273
  %v1169 = vunpack.c.l.b16 %v274
  %v1170 = vunpack.c.l.b16 %v275
  %v1171 = vunpack.c.l.b16 %v276
  %v1172 = vunpack.c.l.b16 %v277
  %v1173 = vunpack.c.l.b16 %v278
  %v1174 = vunpack.c.l.b16 %v279
  %v1175 = vunpack.c.l.b16 %v280
  %v1176 = vunpack.c.l.b16 %v281
  %v1177 = vunpack.c.l.b16 %v282
  %v1178 = vunpack.c.l.b16 %v283
  %v1179 = vunpack.c.l.b16 %v284
  %v1180 = vunpack.c.l.b16 %v285
  %v1181 = vunpack.c.l.b16 %v286
  %v1182 = vunpack.c.l.b16 %v287
  %v1183 = vunpack.c.l.b16 %v288
  %v1184 = vunpack.c.l.b16 %v289
  %v1185 = vunpack.c.l.b16 %v290
  %v1186 = vunpack.c.l.b16 %v291
  %v1187 = vunpack.c.l.b16 %v292
  %v1188 = vunpack.c.l.b16 %v293
  %v1189 = vunpack.c.l.b16 %v294
  %v1190 = vunpack.c.l.b16 %v295
  %v1191 = vunpack.c.l.b16 %v296
  %v1192 = vunpack.c.l.b16 %v297
  %v1193 = vunpack.c.l.b16 %v298
  %v1194 = vunpack.c.l.b16 %v299
  %v1195 = vunpack.c.l.b16 %v300
  %v1196 = vunpack.c.l.b16 %v301
  %v1197 = vunpack.c.l.b16 %v302
  %v1198 = vunpack.c.l.b16 %v303
  %v1199 = vunpack.c.l.b16 %v304
  %v1200 = vunpack.c.l.b16 %v305
  %v1201 = vunpack.c.l.b16 %v306
  %v1202 = vunpack.c.l.b16 %v307
  %v1203 = vunpack.c.l.b16 %v308
  %v1204 = vunpack.c.l.b16 %v309
  %v1205 = vunpack.c.l.b16 %v310
  %v1206 = vunpack.c.l.b16 %v311
  %v1207 = vunpack.c.l.b16 %v312
  %v1208 = vunpack.c.l.b16 %v313
  %v1209 = vunpack.c.l.b16 %v314
  %v1210 = vunpack.c.l.b16 %v315
  %v1211 = vunpack.c.l.b16 %v316
  %v1212 = vunpack.c.l.b16 %v317
  %v1213 = vunpack.c.l.b16 %v318
  %v1214 = vunpack.c.l.b16 %v319
  %v1215 = vunpack.c.l.b16 %v320
  %v1216 = vunpack.c.l.b16 %v321
  %v1217 = vunpack.c.l.b16 %v322
  %v1218 = vunpack.c.l.b16 %v323
  %v1219 = vunpack.c.l.b16 %v324
  %v1220 = vunpack.c.l.b16 %v325
  %v1221 = vunpack.c.l.b16 %v326
  %v1222 = vunpack.c.l.b16 %v327
  %v1223 = vunpack.c.l.b16 %v328
  %v1224 = vunpack.c.l.b16 %v329
  %v1225 = vunpack.c.l.b16 %v330
  %v1226 = vunpack.c.l.b16 %v331
  %v1227 = vunpack.c.l.b16 %v332
  %v1228 = vunpack.c.l.b16 %v333
  %v1229 = vunpack.c.l.b16 %v334
  %v1230 = vunpack.c.l.b16 %v335
  %v1231 = vunpack.c.l.b16 %v336
  %v1232 = vunpack.c.l.b16 %v337
  %v1233 = vunpack.c.l.b16 %v338
  %v1234 = vunpack.c.l.b16 %v339
  %v1235 = vunpack.c.l.b16 %v340
  %v1236 = vunpack.c.l.b16 %v341
  %v1237 = vunpack.c.l.b16 %v342
  %v1238 = vunpack.c.l.b16 %v343
  %v1239 = vunpack.c.l.b16 %v344
  %v1240 = vunpack.c.l.b16 %v345
  %v1241 = vunpack.c.l.b16 %v346
  %v1242 = vunpack.c.l.b16 %v347
  %v1243 = vunpack.c.l.b16 %v348
  %v1244 = vunpack.c.l.b16 %v349
  %v1245 = vunpack.c.l.b16 %v350
  %v1246 = vunpack.c.l.b16 %v351
  %v1247 = vunpack.c.l.b16 %v352
  %v1248 = vunpack.c.l.b16 %v353
  %v1249 = vunpack.c.l.b16 %v354
  %v1250 = vunpack.c.l.b16 %v355
  %v1251 = vunpack.c.l.b16 %v356
  %v1252 = vunpack.c.l.b16 %v357
  %v1253 = vunpack.c.l.b16 %v358
  %v1254 = vunpack.c.l.b16 %v359
  %v1255 = vunpack.c.l.b16 %v360
  %v1256 = vunpack.c.l.b16 %v361
  %v1257 = vunpack.c.l.b16 %v362
  %v1258 = vunpack.c.l.b16 %v363
  %v1259 = vunpack.c.l.b16 %v364
  %v1260 = vunpack.c.l.b16 %v365
  %v1261 = vunpack.c.l.b16 %v366
  %v1262 = vunpack.c.l.b16 %v367
  %v1263 = vunpack.c.l.b16 %v368
  %v1264 = vunpack.c.l.b16 %v369
  %v1265 = vunpack.c.l.b16 %v370
  %v1266 = vunpack.c.l.b16 %v371
  %v1267 = vunpack.c.l.b16 %v372
  %v1268 = vunpack.c.l.b16 %v373
  %v1269 = vunpack.c.l.b16 %v374
  %v1270 = vunpack.c.l.b16 %v375
  %v1271 = vunpack.c.l.b16 %v376
  %v1272 = vunpack.c.l.b16 %v377
  %v1273 = vunpack.c.l.b16 %v378
  %v1274 = vunpack.c.l.b16 %v379
  %v1275 = vunpack.c.l.b16 %v380
  %v1276 = vunpack.c.l.b16 %v381
  %v1277 = vunpack.c.l.b16 %v382
  %v1278 = vunpack.c.l.b16 %v383
  %v1279 = vunpack.c.l.b16 %v384
  %v1280 = vunpack.c.l.b16 %v385
  %v1281 = vunpack.c.l.b16 %v386
  %v1282 = vunpack.c.l.b16 %v387
  %v1283 = vunpack.c.l.b16 %v388
  %v1284 = vunpack.c.l.b16 %v389
  %v1285 = vunpack.c.l.b16 %v390
  %v1286 = vunpack.c.l.b16 %v391
  %v1287 = vunpack.c.l.b16 %v392
  %v1288 = vunpack.c.l.b16 %v393
  %v1289 = vunpack.c.l.b16 %v394
  %v1290 = vunpack.c.l.b16 %v395
  %v1291 = vunpack.c.l.b16 %v396
  %v1292 = vunpack.c.l.b16 %v397
  %v1293 = vunpack.c.l.b16 %v398
  %v1294 = vunpack.c.l.b16 %v399
  %v1295 = vunpack.c.l.b16 %v400
  %v1296 = vunpack.c.l.b16 %v401
  %v1297 = vunpack.c.l.b16 %v402
  %v1298 = vunpack.c.l.b16 %v403
  %v1299 = vunpack.c.l.b16 %v404
  %v1300 = vunpack.c.l.b16 %v405
  %v1301 = vunpack.c.l.b16 %v406
  %v1302 = vunpack.c.l.b16 %v407
  %v1303 = vunpack.c.l.b16 %v408
  %v1304 = vunpack.c.l.b16 %v409
  %v1305 = vunpack.c.l.b16 %v410
  %v1306 = vunpack.c.l.b16 %v411
  %v1307 = vunpack.c.l.b16 %v412
  %v1308 = vunpack.c.l.b16 %v413
  %v1309 = vunpack.c.l.b16 %v414
  %v1310 = vunpack.c.l.b16 %v415
  %v1311 = vunpack.c.l.b16 %v416
  %v1312 = vunpack.c.l.b16 %v417
  %v1313 = vunpack.c.l.b16 %v418
  %v1314 = vunpack.c.l.b16 %v419
  %v1315 = vunpack.c.l.b16 %v420
  %v1316 = vunpack.c.l.b16 %v421
  %v1317 = vunpack.c.l.b16 %v422
  %v1318 = vunpack.c.l.b16 %v423
  %v1319 = vunpack.c.l.b16 %v424
  %v1320 = vunpack.c.l.b16 %v425
  %v1321 = vunpack.c.l.b16 %v426
  %v1322 = vunpack.c.l.b16 %v427
  %v1323 = vunpack.c.l.b16 %v428
  %v1324 = vunpack.c.l.b16 %v429
  %v1325 = vunpack.c.l.b16 %v430
  %v1326 = vunpack.c.l.b16 %v431
  %v1327 = vunpack.c.l.b16 %v432
  %v1328 = vunpack.c.l.b16 %v433
  %v1329 = vunpack.c.l.b16 %v434
  %v1330 = vunpack.c.l.b16 %v435
  %v1331 = vunpack.c.l.b16 %v436
  %v1332 = vunpack.c.l.b16 %v437
  %v1333 = vunpack.c.l.b16 %v438
  %v1334 = vunpack.c.l.b16 %v439
  %v1335 = vpack.c.b16 %v936, %v935
  %v1336 = vpack.c.b16 %v938, %v937
  %v1337 = vpack.c.b16 %v940, %v939
  %v1338 = vpack.c.b16 %v942, %v941
  %v1339 = vpack.c.b16 %v944, %v943
  %v1340 = vpack.c.b16 %v946, %v945
  %v1341 = vpack.c.b16 %v948, %v947
  %v1342 = vpack.c.b16 %v950, %v949
  %v1343 = vpack.c.b16 %v952, %v951
  %v1344 = vpack.c.b16 %v954, %v953
  %v1345 = vpack.c.b16 %v956, %v955
  %v1346 = vpack.c.b16 %v958, %v957
  %v1347 = vpack.c.b16 %v960, %v959
  %v1348 = vpack.c.b16 %v962, %v961
  %v1349 = vpack.c.b16 %v964, %v963
  %v1350 = vpack.c.b16 %v966, %v965
  %v1351 = vpack.c.b16 %v968, %v967
  %v1352 = vpack.c.b16 %v970, %v969
  %v1353 = vpack.c.b16 %v972, %v971
  %v1354 = vpack.c.b16 %v974, %v973
  %v1355 = vpack.c.b16 %v976, %v975
  %v1356 = vpack.c.b16 %v978, %v977
  %v1357 = vpack.c.b16 %v980, %v979
  %v1358 = vpack.c.b16 %v982, %v981
  %v1359 = vpack.c.b16 %v984, %v983
  %v1360 = vpack.c.b16 %v986, %v985
  %v1361 = vpack.c.b16 %v988, %v987
  %v1362 = vpack.c.b16 %v990, %v989
  %v1363 = vpack.c.b16 %v992, %v991
  %v1364 = vpack.c.b16 %v994, %v993
  %v1365 = vpack.c.b16 %v996, %v995
  %v1366 = vpack.c.b16 %v998, %v997
  %v1367 = vpack.c.b16 %v1000, %v999
  %v1368 = vpack.c.b16 %v1002, %v1001
  %v1369 = vpack.c.b16 %v1004, %v1003
  %v1370 = vpack.c.b16 %v1006, %v1005
  %v1371 = vpack.c.b16 %v1008, %v1007
  %v1372 = vpack.c.b16 %v1010, %v1009
  %v1373 = vpack.c.b16 %v1012, %v1011
  %v1374 = vpack.c.b16 %v1014, %v1013
  %v1375 = vpack.c.b16 %v1016, %v1015
  %v1376 = vpack.c.b16 %v1018, %v1017
  %v1377 = vpack.c.b16 %v1020, %v1019
  %v1378 = vpack.c.b16 %v1022, %v1021
  %v1379 = vpack.c.b16 %v1024, %v1023
  %v1380 = vpack.c.b16 %v1026, %v1025
  %v1381 = vpack.c.b16 %v1028, %v1027
  %v1382 = vpack.c.b16 %v1030, %v1029
  %v1383 = vpack.c.b16 %v1032, %v1031
  %v1384 = vpack.c.b16 %v1034, %v1033
  %v1385 = vpack.c.b16 %v1036, %v1035
  %v1386 = vpack.c.b16 %v1038, %v1037
  %v1387 = vpack.c.b16 %v1040, %v1039
  %v1388 = vpack.c.b16 %v1042, %v1041
  %v1389 = vpack.c.b16 %v1044, %v1043
  %v1390 = vpack.c.b16 %v1046, %v1045
  %v1391 = vpack.c.b16 %v1048, %v1047
  %v1392 = vpack.c.b16 %v1050, %v1049
  %v1393 = vpack.c.b16 %v1052, %v1051
  %v1394 = vpack.c.b16 %v1054, %v1053
  %v1395 = vpack.c.b16 %v1056, %v1055
  %v1396 = vpack.c.b16 %v1058, %v1057
  %v1397 = vpack.c.b16 %v1060, %v1059
  %v1398 = vpack.c.b16 %v1062, %v1061
  %v1399 = vpack.c.b16 %v1064, %v1063
  %v1400 = vpack.c.b16 %v1066, %v1065
  %v1401 = vpack.c.b16 %v1068, %v1067
  %v1402 = vpack.c.b16 %v1070, %v1069
  %v1403 = vpack.c.b16 %v1072, %v1071
  %v1404 = vpack.c.b16 %v1074, %v1073
  %v1405 = vpack.c.b16 %v1076, %v1075
  %v1406 = vpack.c.b16 %v1078, %v1077
  %v1407 = vpack.c.b16 %v1080, %v1079
  %v1408 = vpack.c.b16 %v1082, %v1081
  %v1409 = vpack.c.b16 %v1084, %v1083
  %v1410 = vpack.c.b16 %v1086, %v1085
  %v1411 = vpack.c.b16 %v1088, %v1087
  %v1412 = vpack.c.b16 %v1090, %v1089
  %v1413 = vpack.c.b16 %v1092, %v1091
  %v1414 = vpack.c.b16 %v1094, %v1093
  %v1415 = vpack.c.b16 %v1096, %v1095
  %v1416 = vpack.c.b16 %v1098, %v1097
  %v1417 = vpack.c.b16 %v1100, %v1099
  %v1418 = vpack.c.b16 %v1102, %v1101
  %v1419 = vpack.c.b16 %v1104, %v1103
  %v1420 = vpack.c.b16 %v1106, %v1105
  %v1421 = vpack.c.b16 %v1108, %v1107
  %v1422 = vpack.c.b16 %v1110, %v1109
  %v1423 = vpack.c.b16 %v1112, %v1111
  %v1424 = vpack.c.b16 %v1114, %v1113
  %v1425 = vpack.c.b16 %v1116, %v1115
  %v1426 = vpack.c.b16 %v1118, %v1117
  %v1427 = vpack.c.b16 %v1120, %v1119
  %v1428 = vpack.c.b16 %v1122, %v1121
  %v1429 = vpack.c.b16 %v1124, %v1123
  %v1430 = vpack.c.b16 %v1126, %v1125
  %v1431 = vpack.c.b16 %v1128, %v1127
  %v1432 = vpack.c.b16 %v1130, %v1129
  %v1433 = vpack.c.b16 %v1132, %v1131
  %v1434 = vpack.c.b16 %v1134, %v1133
  %v1435 = vpack.c.b16 %v1136, %v1135
  %v1436 = vpack.c.b16 %v1138, %v1137
  %v1437 = vpack.c.b16 %v1140, %v1139
  %v1438 = vpack.c.b16 %v1142, %v1141
  %v1439 = vpack.c.b16 %v1144, %v1143
  %v1440 = vpack.c.b16 %v1146, %v1145
  %v1441 = vpack.c.b16 %v1148, %v1147
  %v1442 = vpack.c.b16 %v1150, %v1149
  %v1443 = vpack.c.b16 %v1152, %v1151
  %v1444 = vpack.c.b16 %v1154, %v1153
  %v1445 = vpack.c.b16 %v1156, %v1155
  %v1446 = vpack.c.b16 %v1158, %v1157
  %v1447 = vpack.c.b16 %v1160, %v1159
  %v1448 = vpack.c.b16 %v1162, %v1161
  %v1449 = vpack.c.b16 %v1164, %v1163
  %v1450 = vpack.c.b16 %v1166, %v1165
  %v1451 = vpack.c.b16 %v1168, %v1167
  %v1452 = vpack.c.b16 %v1170, %v1169
  %v1453 = vpack.c.b16 %v1172, %v1171
  %v1454 = vpack.c.b16 %v1174, %v1173
  %v1455 = vpack.c.b16 %v1176, %v1175
  %v1456 = vpack.c.b16 %v1178, %v1177
  %v1457 = vpack.c.b16 %v1180, %v1179
  %v1458 = vpack.c.b16 %v1182, %v1181
  %v1459 = vpack.c.b16 %v1184, %v1183
  %v1460 = vpack.c.b16 %v1186, %v1185
  %v1461 = vpack.c.b16 %v1188, %v1187
  %v1462 = vpack.c.b16 %v1190, %v1189
  %v1463 = vpack.c.b16 %v1192, %v1191
  %v1464 = vpack.c.b16 %v1194, %v1193
  %v1465 = vpack.c.b16 %v1196, %v1195
  %v1466 = vpack.c.b16 %v1198, %v1197
  %v1467 = vpack.c.b16 %v1200, %v1199
  %v1468 = vpack.c.b16 %v1202, %v1201
  %v1469 = vpack.c.b16 %v1204, %v1203
  %v1470 = vpack.c.b16 %v1206, %v1205
  %v1471 = vpack.c.b16 %v1208, %v1207
  %v1472 = vpack.c.b16 %v1210, %v1209
  %v1473 = vpack.c.b16 %v1212, %v1211
  %v1474 = vpack.c.b16 %v1214, %v1213
  %v1475 = vpack.c.b16 %v1216, %v1215
  %v1476 = vpack.c.b16 %v1218, %v1217
  %v1477 = vpack.c.b16 %v1220, %v1219
  %v1478 = vpack.c.b16 %v1222, %v1221
  %v1479 = vpack.c.b16 %v1224, %v1223
  %v1480 = vpack.c.b16 %v1226, %v1225
  %v1481 = vpack.c.b16 %v1228, %v1227
  %v1482 = vpack.c.b16 %v1230, %v1229
  %v1483 = vpack.c.b16 %v1232, %v1231
  %v1484 = vpack.c.b16 %v1234, %v1233
  %v1485 = vpack.c.b16 %v1236, %v1235
  %v1486 = vpack.c.b16 %v1238, %v1237
  %v1487 = vpack.c.b16 %v1240, %v1239
  %v1488 = vpack.c.b16 %v1242, %v1241
  %v1489 = vpack.c.b16 %v1244, %v1243
  %v1490 = vpack.c.b16 %v1246, %v1245
  %v1491 = vpack.c.b16 %v1248, %v1247
  %v1492 = vpack.c.b16 %v1250, %v1249
  %v1493 = vpack.c.b16 %v1252, %v1251
  %v1494 = vpack.c.b16 %v1254, %v1253
  %v1495 = vpack.c.b16 %v1256, %v1255
  %v1496 = vpack.c.b16 %v1258, %v1257
  %v1497 = vpack.c.b16 %v1260, %v1259
  %v1498 = vpack.c.b16 %v1262, %v1261
  %v1499 = vpack.c.b16 %v1264, %v1263
  %v1500 = vpack.c.b16 %v1266, %v1265
  %v1501 = vpack.c.b16 %v1268, %v1267
  %v1502 = vpack.c.b16 %v1270, %v1269
  %v1503 = vpack.c.b16 %v1272, %v1271
  %v1504 = vpack.c.b16 %v1274, %v1273
  %v1505 = vpack.c.b16 %v1276, %v1275
  %v1506 = vpack.c.b16 %v1278, %v1277
  %v1507 = vpack.c.b16 %v1280, %v1279
  %v1508 = vpack.c.b16 %v1282, %v1281
  %v1509 = vpack.c.b16 %v1284, %v1283
  %v1510 = vpack.c.b16 %v1286, %v1285
  %v1511 = vpack.c.b16 %v1288, %v1287
  %v1512 = vpack.c.b16 %v1290, %v1289
  %v1513 = vpack.c.b16 %v1292, %v1291
  %v1514 = vpack.c.b16 %v1294, %v1293
  %v1515 = vpack.c.b16 %v1296, %v1295
  %v1516 = vpack.c.b16 %v1298, %v1297
  %v1517 = vpack.c.b16 %v1300, %v1299
  %v1518 = vpack.c.b16 %v1302, %v1301
  %v1519 = vpack.c.b16 %v1304, %v1303
  %v1520 = vpack.c.b16 %v1306, %v1305
  %v1521 = vpack.c.b16 %v1308, %v1307
  %v1522 = vpack.c.b16 %v1310, %v1309
  %v1523 = vpack.c.b16 %v1312, %v1311
  %v1524 = vpack.c.b16 %v1314, %v1313
  %v1525 = vpack.c.b16 %v1316, %v1315
  %v1526 = vpack.c.b16 %v1318, %v1317
  %v1527 = vpack.c.b16 %v1320, %v1319
  %v1528 = vpack.c.b16 %v1322, %v1321
  %v1529 = vpack.c.b16 %v1324, %v1323
  %v1530 = vpack.c.b16 %v1326, %v1325
  %v1531 = vpack.c.b16 %v1328, %v1327
  %v1532 = vpack.c.b16 %v1330, %v1329
  %v1533 = vpack.c.b16 %v1332, %v1331
  %v1534 = vpack.c.b16 %v1334, %v1333
  %1735 = vmatprep.subr.bf16.mxu0 0
  %1736 = vmatpush1.bf16.msra.mxu0 %v1335
  %1737 = vmatprep.subr.bf16.mxu0 0
  %1738 = vmatpush1.bf16.msra.mxu0 %v1336
  %1739 = vmatprep.subr.bf16.mxu0 0
  %1740 = vmatpush1.bf16.msra.mxu0 %v1337
  %1741 = vmatprep.subr.bf16.mxu0 0
  %1742 = vmatpush1.bf16.msra.mxu0 %v1338
  %1743 = vmatprep.subr.bf16.mxu0 0
  %1744 = vmatpush1.bf16.msra.mxu0 %v1339
  %1745 = vmatprep.subr.bf16.mxu0 0
  %1746 = vmatpush1.bf16.msra.mxu0 %v1340
  %1747 = vmatprep.subr.bf16.mxu0 0
  %1748 = vmatpush1.bf16.msra.mxu0 %v1341
  %1749 = vmatprep.subr.bf16.mxu0 0
  %1750 = vmatpush1.bf16.msra.mxu0 %v1342
  %1751 = vmatprep.subr.bf16.mxu0 0
  %1752 = vmatpush1.bf16.msra.mxu0 %v1343
  %1753 = vmatprep.subr.bf16.mxu0 0
  %1754 = vmatpush1.bf16.msra.mxu0 %v1344
  %1755 = vmatprep.subr.bf16.mxu0 0
  %1756 = vmatpush1.bf16.msra.mxu0 %v1345
  %1757 = vmatprep.subr.bf16.mxu0 0
  %1758 = vmatpush1.bf16.msra.mxu0 %v1346
  %1759 = vmatprep.subr.bf16.mxu0 0
  %1760 = vmatpush1.bf16.msra.mxu0 %v1347
  %1761 = vmatprep.subr.bf16.mxu0 0
  %1762 = vmatpush1.bf16.msra.mxu0 %v1348
  %1763 = vmatprep.subr.bf16.mxu0 0
  %1764 = vmatpush1.bf16.msra.mxu0 %v1349
  %1765 = vmatprep.subr.bf16.mxu0 0
  %1766 = vmatpush1.bf16.msra.mxu0 %v1350
  %1767 = vmatprep.mubr.bf16.mxu0 %v486
  %1768 = vmatmul.mubr.bf16.gmra.mrb[0].mxu0 %v485
  %v1769 = vpop.f32.mrb[0].mxu0
  %v1770 = vadd.f32 %v445, %v1769
  %v1771 = vpop.f32.mrb[0].mxu0
  %v1772 = vpop.f32.mrb[0].mxu0
  %v1773 = vpop.f32.mrb[0].mxu0
  %1774 = vdwg.mxu0
  %1775 = vmatprep.subr.bf16.mxu0 0
  %1776 = vmatpush1.bf16.msra.mxu0 %v1351
  %1777 = vmatprep.subr.bf16.mxu0 0
  %1778 = vmatpush1.bf16.msra.mxu0 %v1352
  %1779 = vmatprep.subr.bf16.mxu0 0
  %1780 = vmatpush1.bf16.msra.mxu0 %v1353
  %1781 = vmatprep.subr.bf16.mxu0 0
  %1782 = vmatpush1.bf16.msra.mxu0 %v1354
  %1783 = vmatprep.subr.bf16.mxu0 0
  %1784 = vmatpush1.bf16.msra.mxu0 %v1355
  %1785 = vmatprep.subr.bf16.mxu0 0
  %1786 = vmatpush1.bf16.msra.mxu0 %v1356
  %1787 = vmatprep.subr.bf16.mxu0 0
  %1788 = vmatpush1.bf16.msra.mxu0 %v1357
  %1789 = vmatprep.subr.bf16.mxu0 0
  %1790 = vmatpush1.bf16.msra.mxu0 %v1358
  %1791 = vmatprep.subr.bf16.mxu0 0
  %1792 = vmatpush1.bf16.msra.mxu0 %v1359
  %1793 = vmatprep.subr.bf16.mxu0 0
  %1794 = vmatpush1.bf16.msra.mxu0 %v1360
  %1795 = vmatprep.subr.bf16.mxu0 0
  %1796 = vmatpush1.bf16.msra.mxu0 %v1361
  %1797 = vmatprep.subr.bf16.mxu0 0
  %1798 = vmatpush1.bf16.msra.mxu0 %v1362
  %1799 = vmatprep.subr.bf16.mxu0 0
  %1800 = vmatpush1.bf16.msra.mxu0 %v1363
  %1801 = vmatprep.subr.bf16.mxu0 0
  %1802 = vmatpush1.bf16.msra.mxu0 %v1364
  %1803 = vmatprep.subr.bf16.mxu0 0
  %1804 = vmatpush1.bf16.msra.mxu0 %v1365
  %1805 = vmatprep.subr.bf16.mxu0 0
  %1806 = vmatpush1.bf16.msra.mxu0 %v1366
  %1807 = vmatprep.mubr.bf16.mxu0 %v488
  %1808 = vmatmul.mubr.bf16.gmra.mrb[0].mxu0 %v487
  %v1809 = vpop.f32.mrb[0].mxu0
  %v1810 = vadd.f32 %v1770, %v1809
  %v1811 = vpop.f32.mrb[0].mxu0
  %v1812 = vpop.f32.mrb[0].mxu0
  %v1813 = vpop.f32.mrb[0].mxu0
  %1814 = vdwg.mxu0
  %1815 = vmatprep.subr.bf16.mxu0 0
  %1816 = vmatpush1.bf16.msra.mxu0 %v1367
  %1817 = vmatprep.subr.bf16.mxu0 0
  %1818 = vmatpush1.bf16.msra.mxu0 %v1368
  %1819 = vmatprep.subr.bf16.mxu0 0
  %1820 = vmatpush1.bf16.msra.mxu0 %v1369
  %1821 = vmatprep.subr.bf16.mxu0 0
  %1822 = vmatpush1.bf16.msra.mxu0 %v1370
  %1823 = vmatprep.subr.bf16.mxu0 0
  %1824 = vmatpush1.bf16.msra.mxu0 %v1371
  %1825 = vmatprep.subr.bf16.mxu0 0
  %1826 = vmatpush1.bf16.msra.mxu0 %v1372
  %1827 = vmatprep.subr.bf16.mxu0 0
  %1828 = vmatpush1.bf16.msra.mxu0 %v1373
  %1829 = vmatprep.subr.bf16.mxu0 0
  %1830 = vmatpush1.bf16.msra.mxu0 %v1374
  %1831 = vmatprep.subr.bf16.mxu0 0
  %1832 = vmatpush1.bf16.msra.mxu0 %v1375
  %1833 = vmatprep.subr.bf16.mxu0 0
  %1834 = vmatpush1.bf16.msra.mxu0 %v1376
  %1835 = vmatprep.subr.bf16.mxu0 0
  %1836 = vmatpush1.bf16.msra.mxu0 %v1377
  %1837 = vmatprep.subr.bf16.mxu0 0
  %1838 = vmatpush1.bf16.msra.mxu0 %v1378
  %1839 = vmatprep.subr.bf16.mxu0 0
  %1840 = vmatpush1.bf16.msra.mxu0 %v1379
  %1841 = vmatprep.subr.bf16.mxu0 0
  %1842 = vmatpush1.bf16.msra.mxu0 %v1380
  %1843 = vmatprep.subr.bf16.mxu0 0
  %1844 = vmatpush1.bf16.msra.mxu0 %v1381
  %1845 = vmatprep.subr.bf16.mxu0 0
  %1846 = vmatpush1.bf16.msra.mxu0 %v1382
  %1847 = vmatprep.mubr.bf16.mxu0 %v490
  %1848 = vmatmul.mubr.bf16.gmra.mrb[0].mxu0 %v489
  %v1849 = vpop.f32.mrb[0].mxu0
  %v1850 = vadd.f32 %v1810, %v1849
  %v1851 = vpop.f32.mrb[0].mxu0
  %v1852 = vpop.f32.mrb[0].mxu0
  %v1853 = vpop.f32.mrb[0].mxu0
  %1854 = vdwg.mxu0
  %1855 = vmatprep.subr.bf16.mxu0 0
  %1856 = vmatpush1.bf16.msra.mxu0 %v1383
  %1857 = vmatprep.subr.bf16.mxu0 0
  %1858 = vmatpush1.bf16.msra.mxu0 %v1384
  %1859 = vmatprep.subr.bf16.mxu0 0
  %1860 = vmatpush1.bf16.msra.mxu0 %v1385
  %1861 = vmatprep.subr.bf16.mxu0 0
  %1862 = vmatpush1.bf16.msra.mxu0 %v1386
  %1863 = vmatprep.subr.bf16.mxu0 0
  %1864 = vmatpush1.bf16.msra.mxu0 %v1387
  %1865 = vmatprep.subr.bf16.mxu0 0
  %1866 = vmatpush1.bf16.msra.mxu0 %v1388
  %1867 = vmatprep.subr.bf16.mxu0 0
  %1868 = vmatpush1.bf16.msra.mxu0 %v1389
  %1869 = vmatprep.subr.bf16.mxu0 0
  %1870 = vmatpush1.bf16.msra.mxu0 %v1390
  %1871 = vmatprep.subr.bf16.mxu0 0
  %1872 = vmatpush1.bf16.msra.mxu0 %v1391
  %1873 = vmatprep.subr.bf16.mxu0 0
  %1874 = vmatpush1.bf16.msra.mxu0 %v1392
  %1875 = vmatprep.subr.bf16.mxu0 0
  %1876 = vmatpush1.bf16.msra.mxu0 %v1393
  %1877 = vmatprep.subr.bf16.mxu0 0
  %1878 = vmatpush1.bf16.msra.mxu0 %v1394
  %1879 = vmatprep.subr.bf16.mxu0 0
  %1880 = vmatpush1.bf16.msra.mxu0 %v1395
  %1881 = vmatprep.subr.bf16.mxu0 0
  %1882 = vmatpush1.bf16.msra.mxu0 %v1396
  %1883 = vmatprep.subr.bf16.mxu0 0
  %1884 = vmatpush1.bf16.msra.mxu0 %v1397
  %1885 = vmatprep.subr.bf16.mxu0 0
  %1886 = vmatpush1.bf16.msra.mxu0 %v1398
  %1887 = vmatprep.mubr.bf16.mxu0 %v492
  %1888 = vmatmul.mubr.bf16.gmra.mrb[0].mxu0 %v491
  %v1889 = vpop.f32.mrb[0].mxu0
  %v1890 = vadd.f32 %v1850, %v1889
  %v1891 = vpop.f32.mrb[0].mxu0
  %v1892 = vpop.f32.mrb[0].mxu0
  %v1893 = vpop.f32.mrb[0].mxu0
  %1894 = vdwg.mxu0
  %1895 = vmatprep.subr.bf16.mxu0 0
  %1896 = vmatpush1.bf16.msra.mxu0 %v1399
  %1897 = vmatprep.subr.bf16.mxu0 0
  %1898 = vmatpush1.bf16.msra.mxu0 %v1400
  %1899 = vmatprep.subr.bf16.mxu0 0
  %1900 = vmatpush1.bf16.msra.mxu0 %v1401
  %1901 = vmatprep.subr.bf16.mxu0 0
  %1902 = vmatpush1.bf16.msra.mxu0 %v1402
  %1903 = vmatprep.subr.bf16.mxu0 0
  %1904 = vmatpush1.bf16.msra.mxu0 %v1403
  %1905 = vmatprep.subr.bf16.mxu0 0
  %1906 = vmatpush1.bf16.msra.mxu0 %v1404
  %1907 = vmatprep.subr.bf16.mxu0 0
  %1908 = vmatpush1.bf16.msra.mxu0 %v1405
  %1909 = vmatprep.subr.bf16.mxu0 0
  %1910 = vmatpush1.bf16.msra.mxu0 %v1406
  %1911 = vmatprep.subr.bf16.mxu0 0
  %1912 = vmatpush1.bf16.msra.mxu0 %v1407
  %1913 = vmatprep.subr.bf16.mxu0 0
  %1914 = vmatpush1.bf16.msra.mxu0 %v1408
  %1915 = vmatprep.subr.bf16.mxu0 0
  %1916 = vmatpush1.bf16.msra.mxu0 %v1409
  %1917 = vmatprep.subr.bf16.mxu0 0
  %1918 = vmatpush1.bf16.msra.mxu0 %v1410
  %1919 = vmatprep.subr.bf16.mxu0 0
  %1920 = vmatpush1.bf16.msra.mxu0 %v1411
  %1921 = vmatprep.subr.bf16.mxu0 0
  %1922 = vmatpush1.bf16.msra.mxu0 %v1412
  %1923 = vmatprep.subr.bf16.mxu0 0
  %1924 = vmatpush1.bf16.msra.mxu0 %v1413
  %1925 = vmatprep.subr.bf16.mxu0 0
  %1926 = vmatpush1.bf16.msra.mxu0 %v1414
  %1927 = vmatprep.mubr.bf16.mxu0 %v494
  %1928 = vmatmul.mubr.bf16.gmra.mrb[0].mxu0 %v493
  %v1929 = vpop.f32.mrb[0].mxu0
  %v1930 = vadd.f32 %v1890, %v1929
  %v1931 = vpop.f32.mrb[0].mxu0
  %v1932 = vpop.f32.mrb[0].mxu0
  %v1933 = vpop.f32.mrb[0].mxu0
  %1934 = vdwg.mxu0
  %1935 = vmatprep.subr.bf16.mxu0 0
  %1936 = vmatpush1.bf16.msra.mxu0 %v1415
  %1937 = vmatprep.subr.bf16.mxu0 0
  %1938 = vmatpush1.bf16.msra.mxu0 %v1416
  %1939 = vmatprep.subr.bf16.mxu0 0
  %1940 = vmatpush1.bf16.msra.mxu0 %v1417
  %1941 = vmatprep.subr.bf16.mxu0 0
  %1942 = vmatpush1.bf16.msra.mxu0 %v1418
  %1943 = vmatprep.subr.bf16.mxu0 0
  %1944 = vmatpush1.bf16.msra.mxu0 %v1419
  %1945 = vmatprep.subr.bf16.mxu0 0
  %1946 = vmatpush1.bf16.msra.mxu0 %v1420
  %1947 = vmatprep.subr.bf16.mxu0 0
  %1948 = vmatpush1.bf16.msra.mxu0 %v1421
  %1949 = vmatprep.subr.bf16.mxu0 0
  %1950 = vmatpush1.bf16.msra.mxu0 %v1422
  %1951 = vmatprep.subr.bf16.mxu0 0
  %1952 = vmatpush1.bf16.msra.mxu0 %v1423
  %1953 = vmatprep.subr.bf16.mxu0 0
  %1954 = vmatpush1.bf16.msra.mxu0 %v1424
  %1955 = vmatprep.subr.bf16.mxu0 0
  %1956 = vmatpush1.bf16.msra.mxu0 %v1425
  %1957 = vmatprep.subr.bf16.mxu0 0
  %1958 = vmatpush1.bf16.msra.mxu0 %v1426
  %1959 = vmatprep.subr.bf16.mxu0 0
  %1960 = vmatpush1.bf16.msra.mxu0 %v1427
  %1961 = vmatprep.subr.bf16.mxu0 0
  %1962 = vmatpush1.bf16.msra.mxu0 %v1428
  %1963 = vmatprep.subr.bf16.mxu0 0
  %1964 = vmatpush1.bf16.msra.mxu0 %v1429
  %1965 = vmatprep.subr.bf16.mxu0 0
  %1966 = vmatpush1.bf16.msra.mxu0 %v1430
  %1967 = vmatprep.mubr.bf16.mxu0 %v496
  %1968 = vmatmul.mubr.bf16.gmra.mrb[0].mxu0 %v495
  %v1969 = vpop.f32.mrb[0].mxu0
  %v1970 = vadd.f32 %v1930, %v1969
  %v1971 = vpop.f32.mrb[0].mxu0
  %v1972 = vpop.f32.mrb[0].mxu0
  %v1973 = vpop.f32.mrb[0].mxu0
  %1974 = vdwg.mxu0
  %1975 = vmatprep.subr.bf16.mxu0 0
  %1976 = vmatpush1.bf16.msra.mxu0 %v1431
  %1977 = vmatprep.subr.bf16.mxu0 0
  %1978 = vmatpush1.bf16.msra.mxu0 %v1432
  %1979 = vmatprep.subr.bf16.mxu0 0
  %1980 = vmatpush1.bf16.msra.mxu0 %v1433
  %1981 = vmatprep.subr.bf16.mxu0 0
  %1982 = vmatpush1.bf16.msra.mxu0 %v1434
  %1983 = vmatprep.subr.bf16.mxu0 0
  %1984 = vmatpush1.bf16.msra.mxu0 %v1435
  %1985 = vmatprep.subr.bf16.mxu0 0
  %1986 = vmatpush1.bf16.msra.mxu0 %v1436
  %1987 = vmatprep.subr.bf16.mxu0 0
  %1988 = vmatpush1.bf16.msra.mxu0 %v1437
  %1989 = vmatprep.subr.bf16.mxu0 0
  %1990 = vmatpush1.bf16.msra.mxu0 %v1438
  %1991 = vmatprep.subr.bf16.mxu0 0
  %1992 = vmatpush1.bf16.msra.mxu0 %v1439
  %1993 = vmatprep.subr.bf16.mxu0 0
  %1994 = vmatpush1.bf16.msra.mxu0 %v1440
  %1995 = vmatprep.subr.bf16.mxu0 0
  %1996 = vmatpush1.bf16.msra.mxu0 %v1441
  %1997 = vmatprep.subr.bf16.mxu0 0
  %1998 = vmatpush1.bf16.msra.mxu0 %v1442
  %1999 = vmatprep.subr.bf16.mxu0 0
  %2000 = vmatpush1.bf16.msra.mxu0 %v1443
  %2001 = vmatprep.subr.bf16.mxu0 0
  %2002 = vmatpush1.bf16.msra.mxu0 %v1444
  %2003 = vmatprep.subr.bf16.mxu0 0
  %2004 = vmatpush1.bf16.msra.mxu0 %v1445
  %2005 = vmatprep.subr.bf16.mxu0 0
  %2006 = vmatpush1.bf16.msra.mxu0 %v1446
  %2007 = vmatprep.mubr.bf16.mxu0 %v498
  %2008 = vmatmul.mubr.bf16.gmra.mrb[0].mxu0 %v497
  %v2009 = vpop.f32.mrb[0].mxu0
  %v2010 = vadd.f32 %v1970, %v2009
  %v2011 = vpop.f32.mrb[0].mxu0
  %v2012 = vpop.f32.mrb[0].mxu0
  %v2013 = vpop.f32.mrb[0].mxu0
  %2014 = vdwg.mxu0
  %2015 = vmatprep.subr.bf16.mxu0 0
  %2016 = vmatpush1.bf16.msra.mxu0 %v1447
  %2017 = vmatprep.subr.bf16.mxu0 0
  %2018 = vmatpush1.bf16.msra.mxu0 %v1448
  %2019 = vmatprep.subr.bf16.mxu0 0
  %2020 = vmatpush1.bf16.msra.mxu0 %v1449
  %2021 = vmatprep.subr.bf16.mxu0 0
  %2022 = vmatpush1.bf16.msra.mxu0 %v1450
  %2023 = vmatprep.subr.bf16.mxu0 0
  %2024 = vmatpush1.bf16.msra.mxu0 %v1451
  %2025 = vmatprep.subr.bf16.mxu0 0
  %2026 = vmatpush1.bf16.msra.mxu0 %v1452
  %2027 = vmatprep.subr.bf16.mxu0 0
  %2028 = vmatpush1.bf16.msra.mxu0 %v1453
  %2029 = vmatprep.subr.bf16.mxu0 0
  %2030 = vmatpush1.bf16.msra.mxu0 %v1454
  %2031 = vmatprep.subr.bf16.mxu0 0
  %2032 = vmatpush1.bf16.msra.mxu0 %v1455
  %2033 = vmatprep.subr.bf16.mxu0 0
  %2034 = vmatpush1.bf16.msra.mxu0 %v1456
  %2035 = vmatprep.subr.bf16.mxu0 0
  %2036 = vmatpush1.bf16.msra.mxu0 %v1457
  %2037 = vmatprep.subr.bf16.mxu0 0
  %2038 = vmatpush1.bf16.msra.mxu0 %v1458
  %2039 = vmatprep.subr.bf16.mxu0 0
  %2040 = vmatpush1.bf16.msra.mxu0 %v1459
  %2041 = vmatprep.subr.bf16.mxu0 0
  %2042 = vmatpush1.bf16.msra.mxu0 %v1460
  %2043 = vmatprep.subr.bf16.mxu0 0
  %2044 = vmatpush1.bf16.msra.mxu0 %v1461
  %2045 = vmatprep.subr.bf16.mxu0 0
  %2046 = vmatpush1.bf16.msra.mxu0 %v1462
  %2047 = vmatprep.mubr.bf16.mxu0 %v500
  %2048 = vmatmul.mubr.bf16.gmra.mrb[0].mxu0 %v499
  %v2049 = vpop.f32.mrb[0].mxu0
  %v2050 = vadd.f32 %v2010, %v2049
  %v2051 = vpop.f32.mrb[0].mxu0
  %v2052 = vpop.f32.mrb[0].mxu0
  %v2053 = vpop.f32.mrb[0].mxu0
  %2054 = vdwg.mxu0
  %2055 = vmatprep.subr.bf16.mxu0 0
  %2056 = vmatpush1.bf16.msra.mxu0 %v1463
  %2057 = vmatprep.subr.bf16.mxu0 0
  %2058 = vmatpush1.bf16.msra.mxu0 %v1464
  %2059 = vmatprep.subr.bf16.mxu0 0
  %2060 = vmatpush1.bf16.msra.mxu0 %v1465
  %2061 = vmatprep.subr.bf16.mxu0 0
  %2062 = vmatpush1.bf16.msra.mxu0 %v1466
  %2063 = vmatprep.subr.bf16.mxu0 0
  %2064 = vmatpush1.bf16.msra.mxu0 %v1467
  %2065 = vmatprep.subr.bf16.mxu0 0
  %2066 = vmatpush1.bf16.msra.mxu0 %v1468
  %2067 = vmatprep.subr.bf16.mxu0 0
  %2068 = vmatpush1.bf16.msra.mxu0 %v1469
  %2069 = vmatprep.subr.bf16.mxu0 0
  %2070 = vmatpush1.bf16.msra.mxu0 %v1470
  %2071 = vmatprep.subr.bf16.mxu0 0
  %2072 = vmatpush1.bf16.msra.mxu0 %v1471
  %2073 = vmatprep.subr.bf16.mxu0 0
  %2074 = vmatpush1.bf16.msra.mxu0 %v1472
  %2075 = vmatprep.subr.bf16.mxu0 0
  %2076 = vmatpush1.bf16.msra.mxu0 %v1473
  %2077 = vmatprep.subr.bf16.mxu0 0
  %2078 = vmatpush1.bf16.msra.mxu0 %v1474
  %2079 = vmatprep.subr.bf16.mxu0 0
  %2080 = vmatpush1.bf16.msra.mxu0 %v1475
  %2081 = vmatprep.subr.bf16.mxu0 0
  %2082 = vmatpush1.bf16.msra.mxu0 %v1476
  %2083 = vmatprep.subr.bf16.mxu0 0
  %2084 = vmatpush1.bf16.msra.mxu0 %v1477
  %2085 = vmatprep.subr.bf16.mxu0 0
  %2086 = vmatpush1.bf16.msra.mxu0 %v1478
  %2087 = vmatprep.mubr.bf16.mxu0 %v502
  %2088 = vmatmul.mubr.bf16.gmra.mrb[0].mxu0 %v501
  %v2089 = vpop.f32.mrb[0].mxu0
  %v2090 = vadd.f32 %v2050, %v2089
  %v2091 = vpop.f32.mrb[0].mxu0
  %v2092 = vpop.f32.mrb[0].mxu0
  %v2093 = vpop.f32.mrb[0].mxu0
  %2094 = vdwg.mxu0
  %2095 = vmatprep.subr.bf16.mxu0 0
  %2096 = vmatpush1.bf16.msra.mxu0 %v1479
  %2097 = vmatprep.subr.bf16.mxu0 0
  %2098 = vmatpush1.bf16.msra.mxu0 %v1480
  %2099 = vmatprep.subr.bf16.mxu0 0
  %2100 = vmatpush1.bf16.msra.mxu0 %v1481
  %2101 = vmatprep.subr.bf16.mxu0 0
  %2102 = vmatpush1.bf16.msra.mxu0 %v1482
  %2103 = vmatprep.subr.bf16.mxu0 0
  %2104 = vmatpush1.bf16.msra.mxu0 %v1483
  %2105 = vmatprep.subr.bf16.mxu0 0
  %2106 = vmatpush1.bf16.msra.mxu0 %v1484
  %2107 = vmatprep.subr.bf16.mxu0 0
  %2108 = vmatpush1.bf16.msra.mxu0 %v1485
  %2109 = vmatprep.subr.bf16.mxu0 0
  %2110 = vmatpush1.bf16.msra.mxu0 %v1486
  %2111 = vmatprep.subr.bf16.mxu0 0
  %2112 = vmatpush1.bf16.msra.mxu0 %v1487
  %2113 = vmatprep.subr.bf16.mxu0 0
  %2114 = vmatpush1.bf16.msra.mxu0 %v1488
  %2115 = vmatprep.subr.bf16.mxu0 0
  %2116 = vmatpush1.bf16.msra.mxu0 %v1489
  %2117 = vmatprep.subr.bf16.mxu0 0
  %2118 = vmatpush1.bf16.msra.mxu0 %v1490
  %2119 = vmatprep.subr.bf16.mxu0 0
  %2120 = vmatpush1.bf16.msra.mxu0 %v1491
  %2121 = vmatprep.subr.bf16.mxu0 0
  %2122 = vmatpush1.bf16.msra.mxu0 %v1492
  %2123 = vmatprep.subr.bf16.mxu0 0
  %2124 = vmatpush1.bf16.msra.mxu0 %v1493
  %2125 = vmatprep.subr.bf16.mxu0 0
  %2126 = vmatpush1.bf16.msra.mxu0 %v1494
  %2127 = vmatprep.mubr.bf16.mxu0 %v504
  %2128 = vmatmul.mubr.bf16.gmra.mrb[0].mxu0 %v503
  %v2129 = vpop.f32.mrb[0].mxu0
  %v2130 = vadd.f32 %v2090, %v2129
  %v2131 = vpop.f32.mrb[0].mxu0
  %v2132 = vpop.f32.mrb[0].mxu0
  %v2133 = vpop.f32.mrb[0].mxu0
  %2134 = vdwg.mxu0
  %2135 = vmatprep.subr.bf16.mxu0 0
  %2136 = vmatpush1.bf16.msra.mxu0 %v1495
  %2137 = vmatprep.subr.bf16.mxu0 0
  %2138 = vmatpush1.bf16.msra.mxu0 %v1496
  %2139 = vmatprep.subr.bf16.mxu0 0
  %2140 = vmatpush1.bf16.msra.mxu0 %v1497
  %2141 = vmatprep.subr.bf16.mxu0 0
  %2142 = vmatpush1.bf16.msra.mxu0 %v1498
  %2143 = vmatprep.subr.bf16.mxu0 0
  %2144 = vmatpush1.bf16.msra.mxu0 %v1499
  %2145 = vmatprep.subr.bf16.mxu0 0
  %2146 = vmatpush1.bf16.msra.mxu0 %v1500
  %2147 = vmatprep.subr.bf16.mxu0 0
  %2148 = vmatpush1.bf16.msra.mxu0 %v1501
  %2149 = vmatprep.subr.bf16.mxu0 0
  %2150 = vmatpush1.bf16.msra.mxu0 %v1502
  %2151 = vmatprep.subr.bf16.mxu0 0
  %2152 = vmatpush1.bf16.msra.mxu0 %v1503
  %2153 = vmatprep.subr.bf16.mxu0 0
  %2154 = vmatpush1.bf16.msra.mxu0 %v1504
  %2155 = vmatprep.subr.bf16.mxu0 0
  %2156 = vmatpush1.bf16.msra.mxu0 %v1505
  %2157 = vmatprep.subr.bf16.mxu0 0
  %2158 = vmatpush1.bf16.msra.mxu0 %v1506
  %2159 = vmatprep.subr.bf16.mxu0 0
  %2160 = vmatpush1.bf16.msra.mxu0 %v1507
  %2161 = vmatprep.subr.bf16.mxu0 0
  %2162 = vmatpush1.bf16.msra.mxu0 %v1508
  %2163 = vmatprep.subr.bf16.mxu0 0
  %2164 = vmatpush1.bf16.msra.mxu0 %v1509
  %2165 = vmatprep.subr.bf16.mxu0 0
  %2166 = vmatpush1.bf16.msra.mxu0 %v1510
  %2167 = vmatprep.mubr.bf16.mxu0 %v506
  %2168 = vmatmul.mubr.bf16.gmra.mrb[0].mxu0 %v505
  %v2169 = vpop.f32.mrb[0].mxu0
  %v2170 = vadd.f32 %v2130, %v2169
  %v2171 = vpop.f32.mrb[0].mxu0
  %v2172 = vpop.f32.mrb[0].mxu0
  %v2173 = vpop.f32.mrb[0].mxu0
  %2174 = vdwg.mxu0
  %2175 = vmatprep.subr.bf16.mxu0 0
  %2176 = vmatpush1.bf16.msra.mxu0 %v1511
  %2177 = vmatprep.subr.bf16.mxu0 0
  %2178 = vmatpush1.bf16.msra.mxu0 %v1512
  %2179 = vmatprep.subr.bf16.mxu0 0
  %2180 = vmatpush1.bf16.msra.mxu0 %v1513
  %2181 = vmatprep.subr.bf16.mxu0 0
  %2182 = vmatpush1.bf16.msra.mxu0 %v1514
  %2183 = vmatprep.subr.bf16.mxu0 0
  %2184 = vmatpush1.bf16.msra.mxu0 %v1515
  %2185 = vmatprep.subr.bf16.mxu0 0
  %2186 = vmatpush1.bf16.msra.mxu0 %v1516
  %2187 = vmatprep.subr.bf16.mxu0 0
  %2188 = vmatpush1.bf16.msra.mxu0 %v1517
  %2189 = vmatprep.subr.bf16.mxu0 0
  %2190 = vmatpush1.bf16.msra.mxu0 %v1518
  %2191 = vmatprep.subr.bf16.mxu0 0
  %2192 = vmatpush1.bf16.msra.mxu0 %v1519
  %2193 = vmatprep.subr.bf16.mxu0 0
  %2194 = vmatpush1.bf16.msra.mxu0 %v1520
  %2195 = vmatprep.subr.bf16.mxu0 0
  %2196 = vmatpush1.bf16.msra.mxu0 %v1521
  %2197 = vmatprep.subr.bf16.mxu0 0
  %2198 = vmatpush1.bf16.msra.mxu0 %v1522
  %2199 = vmatprep.subr.bf16.mxu0 0
  %2200 = vmatpush1.bf16.msra.mxu0 %v1523
  %2201 = vmatprep.subr.bf16.mxu0 0
  %2202 = vmatpush1.bf16.msra.mxu0 %v1524
  %2203 = vmatprep.subr.bf16.mxu0 0
  %2204 = vmatpush1.bf16.msra.mxu0 %v1525
  %2205 = vmatprep.subr.bf16.mxu0 0
  %2206 = vmatpush1.bf16.msra.mxu0 %v1526
  %2207 = vmatprep.mubr.bf16.mxu0 %v508
  %2208 = vmatmul.mubr.bf16.gmra.mrb[0].mxu0 %v507
  %v2209 = vpop.f32.mrb[0].mxu0
  %v2210 = vadd.f32 %v2170, %v2209
  %v2211 = vpop.f32.mrb[0].mxu0
  %v2212 = vpop.f32.mrb[0].mxu0
  %v2213 = vpop.f32.mrb[0].mxu0
  %2214 = vdwg.mxu0
  %2215 = vmatprep.subr.bf16.mxu0 0
  %2216 = vmatpush1.bf16.msra.mxu0 %v1527
  %2217 = vmatprep.subr.bf16.mxu0 0
  %2218 = vmatpush1.bf16.msra.mxu0 %v1528
  %2219 = vmatprep.subr.bf16.mxu0 0
  %2220 = vmatpush1.bf16.msra.mxu0 %v1529
  %2221 = vmatprep.subr.bf16.mxu0 0
  %2222 = vmatpush1.bf16.msra.mxu0 %v1530
  %2223 = vmatprep.subr.bf16.mxu0 0
  %2224 = vmatpush1.bf16.msra.mxu0 %v1531
  %2225 = vmatprep.subr.bf16.mxu0 0
  %2226 = vmatpush1.bf16.msra.mxu0 %v1532
  %2227 = vmatprep.subr.bf16.mxu0 0
  %2228 = vmatpush1.bf16.msra.mxu0 %v1533
  %2229 = vmatprep.subr.bf16.mxu0 0
  %2230 = vmatpush1.bf16.msra.mxu0 %v1534
  %2231 = vmatprep.subr.bf16.mxu0 0
  %2232 = vmatpush1.bf16.msra.mxu0 0
  %2233 = vmatprep.subr.bf16.mxu0 0
  %2234 = vmatpush1.bf16.msra.mxu0 0
  %2235 = vmatprep.subr.bf16.mxu0 0
  %2236 = vmatpush1.bf16.msra.mxu0 0
  %2237 = vmatprep.subr.bf16.mxu0 0
  %2238 = vmatpush1.bf16.msra.mxu0 0
  %2239 = vmatprep.subr.bf16.mxu0 0
  %2240 = vmatpush1.bf16.msra.mxu0 0
  %2241 = vmatprep.subr.bf16.mxu0 0
  %2242 = vmatpush1.bf16.msra.mxu0 0
  %2243 = vmatprep.subr.bf16.mxu0 0
  %2244 = vmatpush1.bf16.msra.mxu0 0
  %2245 = vmatprep.subr.bf16.mxu0 0
  %2246 = vmatpush1.bf16.msra.mxu0 0
  %2247 = vmatprep.mubr.bf16.mxu0 0
  %2248 = vmatmul.mubr.bf16.gmra.mrb[0].mxu0 %v509
  %v2249 = vpop.f32.mrb[0].mxu0
  %v2250 = vadd.f32 %v2210, %v2249
  %v2251 = vpop.f32.mrb[0].mxu0
  %v2252 = vpop.f32.mrb[0].mxu0
  %v2253 = vpop.f32.mrb[0].mxu0
  %2254 = vdwg.mxu0
  %v2255 = vmax.f32 %v2250, 0.0
  %v2256 = vpack.c.bf16 %v2255, %v2255
  %v2257 = vld [vmem:[%s3] sm:$0xf]
  %v2258 = vld [vmem:[%s3 + $0x4] sm:$0xf]
  %v2259 = vld [vmem:[%s3 + $0x8] sm:$0xf]
  %v2260 = vld [vmem:[%s3 + $0xc] sm:$0xf]
  %v2261 = vld [vmem:[%s3 + $0x10] sm:$0xf]
  %v2262 = vld [vmem:[%s3 + $0x14] sm:$0xf]
  %v2263 = vld [vmem:[%s3 + $0x18] sm:$0xf]
  %v2264 = vld [vmem:[%s3 + $0x1c] sm:$0xf]
  %v2265 = vld [vmem:[%s3 + $0x20] sm:$0xf]
  %v2266 = vld [vmem:[%s3 + $0x24] sm:$0xf]
  %v2267 = vld [vmem:[%s3 + $0x28] sm:$0xf]
  %v2268 = vld [vmem:[%s3 + $0x2c] sm:$0xf]
  %v2269 = vld [vmem:[%s3 + $0x30] sm:$0xf]
  %v2270 = vld [vmem:[%s3 + $0x34] sm:$0xf]
  %v2271 = vld [vmem:[%s3 + $0x38] sm:$0xf]
  %v2272 = vld [vmem:[%s3 + $0x3c] sm:$0xf]
  %v2273 = vld [vmem:[%s4] sm:$0x1]
  %v2275 = vlaneseq
  %v2276 = vshrl.u32 %v2275, 7
  %v2277 = vsub.s32 0, %v2276
  %v2278 = vrot.slane %v2273, %v2277
  %v2296 = vunpack.c.l.b16 %v2257
  %v2297 = vunpack.c.l.b16 %v2258
  %v2298 = vunpack.c.l.b16 %v2259
  %v2299 = vunpack.c.l.b16 %v2260
  %v2300 = vunpack.c.l.b16 %v2261
  %v2301 = vunpack.c.l.b16 %v2262
  %v2302 = vunpack.c.l.b16 %v2263
  %v2303 = vunpack.c.l.b16 %v2264
  %v2304 = vunpack.c.l.b16 %v2265
  %v2305 = vunpack.c.l.b16 %v2266
  %v2306 = vunpack.c.l.b16 %v2267
  %v2307 = vunpack.c.l.b16 %v2268
  %v2308 = vunpack.c.l.b16 %v2269
  %v2309 = vunpack.c.l.b16 %v2270
  %v2310 = vunpack.c.l.b16 %v2271
  %v2311 = vunpack.c.l.b16 %v2272
  %v2312 = vpack.c.b16 %v2297, %v2296
  %v2313 = vpack.c.b16 %v2299, %v2298
  %v2314 = vpack.c.b16 %v2301, %v2300
  %v2315 = vpack.c.b16 %v2303, %v2302
  %v2316 = vpack.c.b16 %v2305, %v2304
  %v2317 = vpack.c.b16 %v2307, %v2306
  %v2318 = vpack.c.b16 %v2309, %v2308
  %v2319 = vpack.c.b16 %v2311, %v2310
  %2328 = vmatprep.subr.bf16.mxu0 0
  %2329 = vmatpush1.bf16.msra.mxu0 %v2312
  %2330 = vmatprep.subr.bf16.mxu0 0
  %2331 = vmatpush1.bf16.msra.mxu0 %v2313
  %2332 = vmatprep.subr.bf16.mxu0 0
  %2333 = vmatpush1.bf16.msra.mxu0 %v2314
  %2334 = vmatprep.subr.bf16.mxu0 0
  %2335 = vmatpush1.bf16.msra.mxu0 %v2315
  %2336 = vmatprep.subr.bf16.mxu0 0
  %2337 = vmatpush1.bf16.msra.mxu0 %v2316
  %2338 = vmatprep.subr.bf16.mxu0 0
  %2339 = vmatpush1.bf16.msra.mxu0 %v2317
  %2340 = vmatprep.subr.bf16.mxu0 0
  %2341 = vmatpush1.bf16.msra.mxu0 %v2318
  %2342 = vmatprep.subr.bf16.mxu0 0
  %2343 = vmatpush1.bf16.msra.mxu0 %v2319
  %2344 = vmatprep.subr.bf16.mxu0 0
  %2345 = vmatpush1.bf16.msra.mxu0 0
  %2346 = vmatprep.subr.bf16.mxu0 0
  %2347 = vmatpush1.bf16.msra.mxu0 0
  %2348 = vmatprep.subr.bf16.mxu0 0
  %2349 = vmatpush1.bf16.msra.mxu0 0
  %2350 = vmatprep.subr.bf16.mxu0 0
  %2351 = vmatpush1.bf16.msra.mxu0 0
  %2352 = vmatprep.subr.bf16.mxu0 0
  %2353 = vmatpush1.bf16.msra.mxu0 0
  %2354 = vmatprep.subr.bf16.mxu0 0
  %2355 = vmatpush1.bf16.msra.mxu0 0
  %2356 = vmatprep.subr.bf16.mxu0 0
  %2357 = vmatpush1.bf16.msra.mxu0 0
  %2358 = vmatprep.subr.bf16.mxu0 0
  %2359 = vmatpush1.bf16.msra.mxu0 0
  %2360 = vmatprep.mubr.bf16.mxu0 0
  %2361 = vmatmul.mubr.bf16.gmra.mrb[0].mxu0 %v2256
  %v2362 = vpop.f32.mrb[0].mxu0
  %v2363 = vadd.f32 %v2278, %v2362
  %v2364 = vpop.f32.mrb[0].mxu0
  %v2365 = vpop.f32.mrb[0].mxu0
  %v2366 = vpop.f32.mrb[0].mxu0
  %2367 = vdwg.mxu0
  %v2368 = vmax.f32 %v2363, 0.0
  %v2369 = vpack.c.bf16 %v2368, %v2368
  %v2370 = vld [vmem:[%s5] sm:$0xf]
  %v2371 = vld [vmem:[%s5 + $0x4] sm:$0xf]
  %v2372 = vld [vmem:[%s5 + $0x8] sm:$0xf]
  %v2373 = vld [vmem:[%s5 + $0xc] sm:$0xf]
  %v2374 = vld [vmem:[%s5 + $0x10] sm:$0xf]
  %v2375 = vld [vmem:[%s5 + $0x14] sm:$0xf]
  %v2376 = vld [vmem:[%s5 + $0x18] sm:$0xf]
  %v2377 = vld [vmem:[%s5 + $0x1c] sm:$0xf]
  %v2378 = vld [vmem:[%s5 + $0x20] sm:$0xf]
  %v2379 = vld [vmem:[%s5 + $0x24] sm:$0xf]
  %v2380 = vld [vmem:[%s5 + $0x28] sm:$0xf]
  %v2381 = vld [vmem:[%s5 + $0x2c] sm:$0xf]
  %v2382 = vld [vmem:[%s5 + $0x30] sm:$0xf]
  %v2383 = vld [vmem:[%s5 + $0x34] sm:$0xf]
  %v2384 = vld [vmem:[%s5 + $0x38] sm:$0xf]
  %v2385 = vld [vmem:[%s5 + $0x3c] sm:$0xf]
  %v2386 = vld [vmem:[%s6] sm:$0x1]
  %v2388 = vlaneseq
  %v2389 = vshrl.u32 %v2388, 7
  %v2390 = vsub.s32 0, %v2389
  %v2391 = vrot.slane %v2386, %v2390
  %v2409 = vunpack.c.l.b16 %v2370
  %v2410 = vunpack.c.l.b16 %v2371
  %v2411 = vunpack.c.l.b16 %v2372
  %v2412 = vunpack.c.l.b16 %v2373
  %v2413 = vunpack.c.l.b16 %v2374
  %v2414 = vunpack.c.l.b16 %v2375
  %v2415 = vunpack.c.l.b16 %v2376
  %v2416 = vunpack.c.l.b16 %v2377
  %v2417 = vunpack.c.l.b16 %v2378
  %v2418 = vunpack.c.l.b16 %v2379
  %v2419 = vunpack.c.l.b16 %v2380
  %v2420 = vunpack.c.l.b16 %v2381
  %v2421 = vunpack.c.l.b16 %v2382
  %v2422 = vunpack.c.l.b16 %v2383
  %v2423 = vunpack.c.l.b16 %v2384
  %v2424 = vunpack.c.l.b16 %v2385
  %v2425 = vpack.c.b16 %v2410, %v2409
  %v2426 = vpack.c.b16 %v2412, %v2411
  %v2427 = vpack.c.b16 %v2414, %v2413
  %v2428 = vpack.c.b16 %v2416, %v2415
  %v2429 = vpack.c.b16 %v2418, %v2417
  %v2430 = vpack.c.b16 %v2420, %v2419
  %v2431 = vpack.c.b16 %v2422, %v2421
  %v2432 = vpack.c.b16 %v2424, %v2423
  %2441 = vmatprep.subr.bf16.mxu0 0
  %2442 = vmatpush1.bf16.msra.mxu0 %v2425
  %2443 = vmatprep.subr.bf16.mxu0 0
  %2444 = vmatpush1.bf16.msra.mxu0 %v2426
  %2445 = vmatprep.subr.bf16.mxu0 0
  %2446 = vmatpush1.bf16.msra.mxu0 %v2427
  %2447 = vmatprep.subr.bf16.mxu0 0
  %2448 = vmatpush1.bf16.msra.mxu0 %v2428
  %2449 = vmatprep.subr.bf16.mxu0 0
  %2450 = vmatpush1.bf16.msra.mxu0 %v2429
  %2451 = vmatprep.subr.bf16.mxu0 0
  %2452 = vmatpush1.bf16.msra.mxu0 %v2430
  %2453 = vmatprep.subr.bf16.mxu0 0
  %2454 = vmatpush1.bf16.msra.mxu0 %v2431
  %2455 = vmatprep.subr.bf16.mxu0 0
  %2456 = vmatpush1.bf16.msra.mxu0 %v2432
  %2457 = vmatprep.subr.bf16.mxu0 0
  %2458 = vmatpush1.bf16.msra.mxu0 0
  %2459 = vmatprep.subr.bf16.mxu0 0
  %2460 = vmatpush1.bf16.msra.mxu0 0
  %2461 = vmatprep.subr.bf16.mxu0 0
  %2462 = vmatpush1.bf16.msra.mxu0 0
  %2463 = vmatprep.subr.bf16.mxu0 0
  %2464 = vmatpush1.bf16.msra.mxu0 0
  %2465 = vmatprep.subr.bf16.mxu0 0
  %2466 = vmatpush1.bf16.msra.mxu0 0
  %2467 = vmatprep.subr.bf16.mxu0 0
  %2468 = vmatpush1.bf16.msra.mxu0 0
  %2469 = vmatprep.subr.bf16.mxu0 0
  %2470 = vmatpush1.bf16.msra.mxu0 0
  %2471 = vmatprep.subr.bf16.mxu0 0
  %2472 = vmatpush1.bf16.msra.mxu0 0
  %2473 = vmatprep.mubr.bf16.mxu0 0
  %2474 = vmatmul.mubr.bf16.gmra.mrb[0].mxu0 %v2369
  %v2475 = vpop.f32.mrb[0].mxu0
  %v2476 = vadd.f32 %v2391, %v2475
  %v2477 = vpop.f32.mrb[0].mxu0
  %v2478 = vpop.f32.mrb[0].mxu0
  %v2479 = vpop.f32.mrb[0].mxu0
  %2480 = vdwg.mxu0
  %2481 = vst [vmem:[%s7] sm:$0xff] %v2476
  // Predicated region
  $region30: #{net_forward.5} parent=0 // pred_check
    _
  $region31: #{net_forward.5} parent=0 // pred_check_branch
    %2483 = sbr.rel (0) target = $region33
  $region32: #{net_forward.5} parent=0 // pred_region
    _
  $region33: #{net_forward.5} parent=0 // pred_fallthru
    _
  // Predicated region
  $region34: #{net_forward.5} parent=0 // pred_check
    _
  $region35: #{net_forward.5} parent=0 // pred_check_branch
    %2485 = sbr.rel (0) target = $region37
  $region36: #{net_forward.5} parent=0 // pred_region
    _
  $region37: #{net_forward.5} parent=0 // pred_fallthru
    _

</llo_original>
